<compile_context>
chip_gen: v7x
topology: tpu7x:2x2x1
jax: 0.10.0
libtpu: 0.0.40
codegen_flags: <defaults>
</compile_context>

<pallas_src>
import functools
import math

import jax
import jax.numpy as jnp
from jax.experimental import pallas as pl
from jax.experimental.pallas import tpu as pltpu


def _layernorm(z, gamma, beta, eps: float = 1e-5):
    """LayerNorm over the last dim (PyTorch nn.LayerNorm semantics, biased var)."""
    mean = jnp.mean(z, axis=-1, keepdims=True)
    zc = z - mean
    var = jnp.mean(zc * zc, axis=-1, keepdims=True)
    return zc * jax.lax.rsqrt(var + eps) * gamma + beta


def _pack_layout(widths, align=128):
    """128-lane-aligned slot offsets for packing small (1, w) params into one slab."""
    offs, off = [], 0
    for w in widths:
        offs.append(off)
        off += -(-w // align) * align
    return offs, off


def _encoder_block_kernel(
    # inputs
    x_ref,            # (B*S, D)   f32
    wqkv_ref,         # (D, 3D)    bf16
    wo_ref,           # (D, D)     bf16
    w1_ref,           # (D, FF)    bf16
    w2_ref,           # (FF, D)    bf16
    pvec_ref,         # (1, P)     f32  packed biases + LN params
    # output
    o_ref,            # (B*S, D)
    *, batch, seq_len, num_heads, d_k, param_offsets,
):
    f32, bf16 = jnp.float32, jnp.bfloat16
    d_model = num_heads * d_k
    rows = batch * seq_len
    dim_ff = w1_ref.shape[1]

    def mxu(a, w):
        # bf16 MXU operands, f32 accumulation.
        return jax.lax.dot_general(
            a.astype(bf16), w.astype(bf16),
            (((1,), (0,)), ((), ())),
            preferred_element_type=f32)

    # ---- unpack the small-parameter slab (all offsets 128-lane aligned) ------
    (o_bqkv, o_bo, o_ln1g, o_ln1b, o_b1, o_b2, o_ln2g, o_ln2b) = param_offsets
    b_qkv = pvec_ref[:, o_bqkv:o_bqkv + 3 * d_model]
    b_o   = pvec_ref[:, o_bo:o_bo + d_model]
    ln1_g = pvec_ref[:, o_ln1g:o_ln1g + d_model]
    ln1_b = pvec_ref[:, o_ln1b:o_ln1b + d_model]
    b_1   = pvec_ref[:, o_b1:o_b1 + dim_ff]
    b_2   = pvec_ref[:, o_b2:o_b2 + d_model]
    ln2_g = pvec_ref[:, o_ln2g:o_ln2g + d_model]
    ln2_b = pvec_ref[:, o_ln2b:o_ln2b + d_model]

    x = x_ref[...]                                           # (rows, D) f32

    # ---- fused QKV projection (one MXU pass, N = 3*D) ------------------------
    qkv = mxu(x, wqkv_ref[...]) + b_qkv                      # (rows, 3D) f32
    qkv_bf = qkv.astype(bf16)

    # ---- cross-batch (block-diagonal) mask over the flattened row axis -------
    r_ids = jax.lax.broadcasted_iota(jnp.int32, (rows, rows), 0)
    c_ids = jax.lax.broadcasted_iota(jnp.int32, (rows, rows), 1)
    same_batch = jnp.zeros((rows, rows), jnp.bool_)
    for bb in range(batch):
        lo, hi = bb * seq_len, (bb + 1) * seq_len
        in_r = (r_ids >= lo) & (r_ids < hi)
        in_c = (c_ids >= lo) & (c_ids < hi)
        same_batch = same_batch | (in_r & in_c)

    # ---- per-head scores, stacked for one batched softmax --------------------
    # TODO(synk): optional attention mask not implemented (reference uses mask=None).
    scale = 1.0 / math.sqrt(d_k)
    scores = []
    for h in range(num_heads):                               # static loop, tiny H
        qh = qkv_bf[:, h * d_k:(h + 1) * d_k]                # (rows, d_k)
        kh = qkv_bf[:, d_model + h * d_k:d_model + (h + 1) * d_k]
        s_h = jax.lax.dot_general(                           # (rows, rows)
            qh, kh, (((1,), (1,)), ((), ())),
            preferred_element_type=f32) * scale
        scores.append(jnp.where(same_batch, s_h, -1e30))
    s_all = jnp.concatenate(scores, axis=0)                  # (H*rows, rows)

    m = jnp.max(s_all, axis=-1, keepdims=True)               # one XLU/EUP pass
    p = jnp.exp(s_all - m)
    p = p / jnp.sum(p, axis=-1, keepdims=True)
    p_bf = p.astype(bf16)

    # ---- per-head context, concatenated in registers -------------------------
    ctxs = []
    for h in range(num_heads):
        p_h = p_bf[h * rows:(h + 1) * rows, :]               # (rows, rows)
        v_h = qkv_bf[:, 2 * d_model + h * d_k:2 * d_model + (h + 1) * d_k]
        ctxs.append(jax.lax.dot_general(
            p_h, v_h, (((1,), (0,)), ((), ())),
            preferred_element_type=f32))                     # (rows, d_k)
    ctx = jnp.concatenate(ctxs, axis=-1)                     # (rows, D) f32

    # ---- output projection + residual + LN ------------------------------------
    # TODO(synk): nn.Dropout treated as identity (eval / inference mode).
    attn_out = mxu(ctx, wo_ref[...]) + b_o
    y = _layernorm(x + attn_out, ln1_g, ln1_b)

    # ---- feed-forward + residual + LN ------------------------------------------
    h1 = jnp.maximum(mxu(y, w1_ref[...]) + b_1, 0.0)         # (rows, FF) lane-dense
    ff = mxu(h1, w2_ref[...]) + b_2                          # (rows, D)
    o_ref[...] = _layernorm(y + ff, ln2_g, ln2_b).astype(o_ref.dtype)


def transformer_encoder_block(x, params, *, num_heads):
    """x: (B, S, D) float32. Weights stored as (d_in, d_out); biases/LN params as (1, d)."""
    b, s, d = x.shape
    assert d % num_heads == 0, "d_model must be divisible by num_heads"
    d_k = d // num_heads
    rows = b * s
    x2 = x.reshape(rows, d).astype(jnp.float32)

    # Fused QKV weight / bias; bf16 MXU operands (halves weight DMA + VMEM).
    wqkv = jnp.concatenate([params["wq"], params["wk"], params["wv"]],
                           axis=1).astype(jnp.bfloat16)      # (D, 3D)
    wo = params["wo"].astype(jnp.bfloat16)
    w1 = params["w1"].astype(jnp.bfloat16)
    w2 = params["w2"].astype(jnp.bfloat16)

    # Pack all tiny bias / LayerNorm params into one slab (one DMA).
    small = [
        jnp.concatenate([params["bq"], params["bk"], params["bv"]], axis=1),
        params["bo"], params["ln1_g"], params["ln1_b"],
        params["b1"], params["b2"], params["ln2_g"], params["ln2_b"],
    ]
    widths = [int(p.shape[-1]) for p in small]
    offs, total = _pack_layout(widths)
    pvec = jnp.zeros((1, total), jnp.float32)
    for piece, off in zip(small, offs):
        pvec = jax.lax.dynamic_update_slice(
            pvec, piece.reshape(1, -1).astype(jnp.float32), (0, off))

    kernel = functools.partial(
        _encoder_block_kernel,
        batch=b, seq_len=s, num_heads=num_heads, d_k=d_k,
        param_offsets=tuple(offs))

    args = (x2, wqkv, wo, w1, w2, pvec)
    out2 = pl.pallas_call(
        kernel,
        out_shape=jax.ShapeDtypeStruct((rows, d), x.dtype),
        in_specs=[pl.BlockSpec(memory_space=pltpu.MemorySpace.VMEM)] * len(args),
        out_specs=pl.BlockSpec(memory_space=pltpu.MemorySpace.VMEM),
    )(*args)
    return out2.reshape(b, s, d)


# ----------------------------- pure-JAX references ----------------------------------
def _reference(x, params, *, num_heads, mxu_bf16=False):
    """mxu_bf16=False: full-f32 module semantics.
       mxu_bf16=True : same math but dot operands cast to bf16 (matches the kernel's
                       MXU precision) with f32 accumulation."""
    b, s, d = x.shape
    dk = d // num_heads
    cast = (lambda z: z.astype(jnp.bfloat16)) if mxu_bf16 else (lambda z: z)

    def mm(a, w):
        return jnp.matmul(cast(a), cast(w), preferred_element_type=jnp.float32)

    def split(z):
        return z.reshape(b, s, num_heads, dk).transpose(0, 2, 1, 3)

    q = split(mm(x, params["wq"]) + params["bq"])
    k = split(mm(x, params["wk"]) + params["bk"])
    v = split(mm(x, params["wv"]) + params["bv"])
    scores = jnp.einsum("bhqd,bhkd->bhqk", cast(q), cast(k),
                        preferred_element_type=jnp.float32) / math.sqrt(dk)
    attn = jax.nn.softmax(scores, axis=-1)
    ctx = jnp.einsum("bhqk,bhkd->bhqd", cast(attn), cast(v),
                     preferred_element_type=jnp.float32)
    ctx = ctx.transpose(0, 2, 1, 3).reshape(b, s, d)
    y = _layernorm(x + mm(ctx, params["wo"]) + params["bo"],
                   params["ln1_g"], params["ln1_b"])
    h1 = jnp.maximum(mm(y, params["w1"]) + params["b1"], 0.0)
    ff = mm(h1, params["w2"]) + params["b2"]
    return _layernorm(y + ff, params["ln2_g"], params["ln2_b"])


if __name__ == "__main__":
    batch_size, seq_len, d_model, num_heads, dim_ff = 2, 10, 32, 4, 2048

    key = jax.random.PRNGKey(0)
    ks = jax.random.split(key, 18)

    def rnd(k, shape, scale=1.0):
        return jax.random.normal(k, shape, dtype=jnp.float32) * scale

    x = rnd(ks[0], (batch_size, seq_len, d_model))
    params = {
        "wq": rnd(ks[1], (d_model, d_model), 1.0 / math.sqrt(d_model)),
        "bq": rnd(ks[2], (1, d_model), 0.02),
        "wk": rnd(ks[3], (d_model, d_model), 1.0 / math.sqrt(d_model)),
        "bk": rnd(ks[4], (1, d_model), 0.02),
        "wv": rnd(ks[5], (d_model, d_model), 1.0 / math.sqrt(d_model)),
        "bv": rnd(ks[6], (1, d_model), 0.02),
        "wo": rnd(ks[7], (d_model, d_model), 1.0 / math.sqrt(d_model)),
        "bo": rnd(ks[8], (1, d_model), 0.02),
        "ln1_g": 1.0 + rnd(ks[9], (1, d_model), 0.05),
        "ln1_b": rnd(ks[10], (1, d_model), 0.05),
        "w1": rnd(ks[11], (d_model, dim_ff), 1.0 / math.sqrt(d_model)),
        "b1": rnd(ks[12], (1, dim_ff), 0.02),
        "w2": rnd(ks[13], (dim_ff, d_model), 1.0 / math.sqrt(dim_ff)),
        "b2": rnd(ks[14], (1, d_model), 0.02),
        "ln2_g": 1.0 + rnd(ks[15], (1, d_model), 0.05),
        "ln2_b": rnd(ks[16], (1, d_model), 0.05),
    }

    out = transformer_encoder_block(x, params, num_heads=num_heads)
    out = jax.block_until_ready(out)
    assert out.shape == (batch_size, seq_len, d_model)

    # Primary correctness gate: reference with the SAME bf16 MXU-operand precision.
    ref_matched = _reference(x, params, num_heads=num_heads, mxu_bf16=True)
    err_m = float(jnp.max(jnp.abs(out - ref_matched)))
    assert jnp.allclose(out, ref_matched, atol=1e-2, rtol=1e-2), (
        f"mismatch vs matched-precision reference, max abs diff = {err_m}")

    # Sanity check vs the full-f32 module semantics; looser bound covers the
    # bf16-operand quantization applied for MXU throughput (review item).
    ref_f32 = _reference(x, params, num_heads=num_heads, mxu_bf16=False)
    err_f = float(jnp.max(jnp.abs(out - ref_f32)))
    assert jnp.allclose(out, ref_f32, atol=1e-1, rtol=1e-1), (
        f"mismatch vs f32 reference, max abs diff = {err_f}")

    print("KERNEL_OK")
</pallas_src>

<mosaic_0001>
module attributes {stable_mosaic.version = 11 : i64} {
  func.func @_encoder_block_kernel(%arg0: memref<20x32xf32, #tpu.memory_space<vmem>>, %arg1: memref<32x96xbf16, #tpu.memory_space<vmem>>, %arg2: memref<32x32xbf16, #tpu.memory_space<vmem>>, %arg3: memref<32x2048xbf16, #tpu.memory_space<vmem>>, %arg4: memref<2048x32xbf16, #tpu.memory_space<vmem>>, %arg5: memref<1x2944xf32, #tpu.memory_space<vmem>>, %arg6: memref<20x32xf32, #tpu.memory_space<vmem>>) attributes {dimension_semantics = [], scalar_prefetch = 0 : i64, scratch_operands = 0 : i64, tpu.core_type = #tpu.core_type<tc>} {
    %c0 = arith.constant 0 : index
    %c0_0 = arith.constant 0 : index
    %0 = vector.load %arg5[%c0, %c0_0] : memref<1x2944xf32, #tpu.memory_space<vmem>>, vector<1x96xf32>
    %c0_1 = arith.constant 0 : index
    %c128 = arith.constant 128 : index
    %1 = vector.load %arg5[%c0_1, %c128] : memref<1x2944xf32, #tpu.memory_space<vmem>>, vector<1x32xf32>
    %c0_2 = arith.constant 0 : index
    %c256 = arith.constant 256 : index
    %2 = vector.load %arg5[%c0_2, %c256] : memref<1x2944xf32, #tpu.memory_space<vmem>>, vector<1x32xf32>
    %c0_3 = arith.constant 0 : index
    %c384 = arith.constant 384 : index
    %3 = vector.load %arg5[%c0_3, %c384] : memref<1x2944xf32, #tpu.memory_space<vmem>>, vector<1x32xf32>
    %c0_4 = arith.constant 0 : index
    %c512 = arith.constant 512 : index
    %4 = vector.load %arg5[%c0_4, %c512] : memref<1x2944xf32, #tpu.memory_space<vmem>>, vector<1x2048xf32>
    %c0_5 = arith.constant 0 : index
    %c2560 = arith.constant 2560 : index
    %5 = vector.load %arg5[%c0_5, %c2560] : memref<1x2944xf32, #tpu.memory_space<vmem>>, vector<1x32xf32>
    %c0_6 = arith.constant 0 : index
    %c2688 = arith.constant 2688 : index
    %6 = vector.load %arg5[%c0_6, %c2688] : memref<1x2944xf32, #tpu.memory_space<vmem>>, vector<1x32xf32>
    %c0_7 = arith.constant 0 : index
    %c2816 = arith.constant 2816 : index
    %7 = vector.load %arg5[%c0_7, %c2816] : memref<1x2944xf32, #tpu.memory_space<vmem>>, vector<1x32xf32>
    %c0_8 = arith.constant 0 : index
    %c0_9 = arith.constant 0 : index
    %8 = vector.load %arg0[%c0_8, %c0_9] : memref<20x32xf32, #tpu.memory_space<vmem>>, vector<20x32xf32>
    %c0_10 = arith.constant 0 : index
    %c0_11 = arith.constant 0 : index
    %9 = vector.load %arg1[%c0_10, %c0_11] : memref<32x96xbf16, #tpu.memory_space<vmem>>, vector<32x96xbf16>
    %10 = arith.truncf %8 : vector<20x32xf32> to vector<20x32xbf16>
    %cst = arith.constant dense<0.000000e+00> : vector<20x96xf32>
    %11 = tpu.matmul %10, %9, %cst {dimension_numbers = #tpu.dot_dimension_numbers<[1], [0], [0], [1], [0, 0, 1, 1], [], []>} : vector<20x32xbf16>, vector<32x96xbf16>, vector<20x96xf32> -> vector<20x96xf32>
    %12 = vector.broadcast %0 : vector<1x96xf32> to vector<20x96xf32>
    %13 = arith.addf %11, %12 : vector<20x96xf32>
    %14 = arith.truncf %13 : vector<20x96xf32> to vector<20x96xbf16>
    %15 = tpu.iota {dimensions = array<i32: 0>} : vector<20x20xi32>
    %16 = tpu.iota {dimensions = array<i32: 1>} : vector<20x20xi32>
    %false = arith.constant false
    %17 = vector.broadcast %false : i1 to vector<20x20xi1>
    %c0_i32 = arith.constant 0 : i32
    %18 = vector.broadcast %c0_i32 : i32 to vector<20x20xi32>
    %19 = arith.cmpi sge, %15, %18 : vector<20x20xi32>
    %c10_i32 = arith.constant 10 : i32
    %20 = vector.broadcast %c10_i32 : i32 to vector<20x20xi32>
    %21 = arith.cmpi slt, %15, %20 : vector<20x20xi32>
    %22 = arith.andi %19, %21 : vector<20x20xi1>
    %c0_i32_12 = arith.constant 0 : i32
    %23 = vector.broadcast %c0_i32_12 : i32 to vector<20x20xi32>
    %24 = arith.cmpi sge, %16, %23 : vector<20x20xi32>
    %c10_i32_13 = arith.constant 10 : i32
    %25 = vector.broadcast %c10_i32_13 : i32 to vector<20x20xi32>
    %26 = arith.cmpi slt, %16, %25 : vector<20x20xi32>
    %27 = arith.andi %24, %26 : vector<20x20xi1>
    %28 = arith.andi %22, %27 : vector<20x20xi1>
    %29 = arith.ori %17, %28 : vector<20x20xi1>
    %c10_i32_14 = arith.constant 10 : i32
    %30 = vector.broadcast %c10_i32_14 : i32 to vector<20x20xi32>
    %31 = arith.cmpi sge, %15, %30 : vector<20x20xi32>
    %c20_i32 = arith.constant 20 : i32
    %32 = vector.broadcast %c20_i32 : i32 to vector<20x20xi32>
    %33 = arith.cmpi slt, %15, %32 : vector<20x20xi32>
    %34 = arith.andi %31, %33 : vector<20x20xi1>
    %c10_i32_15 = arith.constant 10 : i32
    %35 = vector.broadcast %c10_i32_15 : i32 to vector<20x20xi32>
    %36 = arith.cmpi sge, %16, %35 : vector<20x20xi32>
    %c20_i32_16 = arith.constant 20 : i32
    %37 = vector.broadcast %c20_i32_16 : i32 to vector<20x20xi32>
    %38 = arith.cmpi slt, %16, %37 : vector<20x20xi32>
    %39 = arith.andi %36, %38 : vector<20x20xi1>
    %40 = arith.andi %34, %39 : vector<20x20xi1>
    %41 = arith.ori %29, %40 : vector<20x20xi1>
    %42 = vector.extract_strided_slice %14 {offsets = [0, 0], sizes = [20, 8], strides = [1, 1]} : vector<20x96xbf16> to vector<20x8xbf16>
    %43 = vector.extract_strided_slice %14 {offsets = [0, 32], sizes = [20, 8], strides = [1, 1]} : vector<20x96xbf16> to vector<20x8xbf16>
    %cst_17 = arith.constant dense<0.000000e+00> : vector<20x20xf32>
    %44 = tpu.matmul %42, %43, %cst_17 {dimension_numbers = #tpu.dot_dimension_numbers<[1], [1], [0], [0], [0, 0, 1, 0], [], []>} : vector<20x8xbf16>, vector<20x8xbf16>, vector<20x20xf32> -> vector<20x20xf32>
    %cst_18 = arith.constant 0.353553385 : f32
    %45 = vector.broadcast %cst_18 : f32 to vector<20x20xf32>
    %46 = arith.mulf %44, %45 : vector<20x20xf32>
    %cst_19 = arith.constant -1.000000e+30 : f32
    %47 = vector.broadcast %cst_19 : f32 to vector<20x20xf32>
    %48 = arith.select %41, %46, %47 : vector<20x20xi1>, vector<20x20xf32>
    %49 = vector.extract_strided_slice %14 {offsets = [0, 8], sizes = [20, 8], strides = [1, 1]} : vector<20x96xbf16> to vector<20x8xbf16>
    %50 = vector.extract_strided_slice %14 {offsets = [0, 40], sizes = [20, 8], strides = [1, 1]} : vector<20x96xbf16> to vector<20x8xbf16>
    %cst_20 = arith.constant dense<0.000000e+00> : vector<20x20xf32>
    %51 = tpu.matmul %49, %50, %cst_20 {dimension_numbers = #tpu.dot_dimension_numbers<[1], [1], [0], [0], [0, 0, 1, 0], [], []>} : vector<20x8xbf16>, vector<20x8xbf16>, vector<20x20xf32> -> vector<20x20xf32>
    %cst_21 = arith.constant 0.353553385 : f32
    %52 = vector.broadcast %cst_21 : f32 to vector<20x20xf32>
    %53 = arith.mulf %51, %52 : vector<20x20xf32>
    %cst_22 = arith.constant -1.000000e+30 : f32
    %54 = vector.broadcast %cst_22 : f32 to vector<20x20xf32>
    %55 = arith.select %41, %53, %54 : vector<20x20xi1>, vector<20x20xf32>
    %56 = vector.extract_strided_slice %14 {offsets = [0, 16], sizes = [20, 8], strides = [1, 1]} : vector<20x96xbf16> to vector<20x8xbf16>
    %57 = vector.extract_strided_slice %14 {offsets = [0, 48], sizes = [20, 8], strides = [1, 1]} : vector<20x96xbf16> to vector<20x8xbf16>
    %cst_23 = arith.constant dense<0.000000e+00> : vector<20x20xf32>
    %58 = tpu.matmul %56, %57, %cst_23 {dimension_numbers = #tpu.dot_dimension_numbers<[1], [1], [0], [0], [0, 0, 1, 0], [], []>} : vector<20x8xbf16>, vector<20x8xbf16>, vector<20x20xf32> -> vector<20x20xf32>
    %cst_24 = arith.constant 0.353553385 : f32
    %59 = vector.broadcast %cst_24 : f32 to vector<20x20xf32>
    %60 = arith.mulf %58, %59 : vector<20x20xf32>
    %cst_25 = arith.constant -1.000000e+30 : f32
    %61 = vector.broadcast %cst_25 : f32 to vector<20x20xf32>
    %62 = arith.select %41, %60, %61 : vector<20x20xi1>, vector<20x20xf32>
    %63 = vector.extract_strided_slice %14 {offsets = [0, 24], sizes = [20, 8], strides = [1, 1]} : vector<20x96xbf16> to vector<20x8xbf16>
    %64 = vector.extract_strided_slice %14 {offsets = [0, 56], sizes = [20, 8], strides = [1, 1]} : vector<20x96xbf16> to vector<20x8xbf16>
    %cst_26 = arith.constant dense<0.000000e+00> : vector<20x20xf32>
    %65 = tpu.matmul %63, %64, %cst_26 {dimension_numbers = #tpu.dot_dimension_numbers<[1], [1], [0], [0], [0, 0, 1, 0], [], []>} : vector<20x8xbf16>, vector<20x8xbf16>, vector<20x20xf32> -> vector<20x20xf32>
    %cst_27 = arith.constant 0.353553385 : f32
    %66 = vector.broadcast %cst_27 : f32 to vector<20x20xf32>
    %67 = arith.mulf %65, %66 : vector<20x20xf32>
    %cst_28 = arith.constant -1.000000e+30 : f32
    %68 = vector.broadcast %cst_28 : f32 to vector<20x20xf32>
    %69 = arith.select %41, %67, %68 : vector<20x20xi1>, vector<20x20xf32>
    %70 = tpu.concatenate %48, %55, %62, %69 in 0 : vector<20x20xf32>, vector<20x20xf32>, vector<20x20xf32>, vector<20x20xf32> -> vector<80x20xf32>
    %cst_29 = arith.constant dense<0xFF800000> : vector<80xf32>
    %71 = vector.multi_reduction <maximumf>, %70, %cst_29 [1] : vector<80x20xf32> to vector<80xf32>
    %72 = vector.shape_cast %71 : vector<80xf32> to vector<80x1xf32>
    %73 = vector.broadcast %72 : vector<80x1xf32> to vector<80x20xf32>
    %74 = arith.subf %70, %73 : vector<80x20xf32>
    %75 = math.exp %74 : vector<80x20xf32>
    %cst_30 = arith.constant dense<0.000000e+00> : vector<80xf32>
    %76 = vector.multi_reduction <add>, %75, %cst_30 [1] : vector<80x20xf32> to vector<80xf32>
    %77 = vector.shape_cast %76 : vector<80xf32> to vector<80x1xf32>
    %78 = vector.broadcast %77 : vector<80x1xf32> to vector<80x20xf32>
    %79 = arith.divf %75, %78 : vector<80x20xf32>
    %80 = arith.truncf %79 : vector<80x20xf32> to vector<80x20xbf16>
    %81 = vector.extract_strided_slice %80 {offsets = [0, 0], sizes = [20, 20], strides = [1, 1]} : vector<80x20xbf16> to vector<20x20xbf16>
    %82 = vector.extract_strided_slice %14 {offsets = [0, 64], sizes = [20, 8], strides = [1, 1]} : vector<20x96xbf16> to vector<20x8xbf16>
    %cst_31 = arith.constant dense<0.000000e+00> : vector<20x8xf32>
    %83 = tpu.matmul %81, %82, %cst_31 {dimension_numbers = #tpu.dot_dimension_numbers<[1], [0], [0], [1], [0, 0, 1, 1], [], []>} : vector<20x20xbf16>, vector<20x8xbf16>, vector<20x8xf32> -> vector<20x8xf32>
    %84 = vector.extract_strided_slice %80 {offsets = [20, 0], sizes = [20, 20], strides = [1, 1]} : vector<80x20xbf16> to vector<20x20xbf16>
    %85 = vector.extract_strided_slice %14 {offsets = [0, 72], sizes = [20, 8], strides = [1, 1]} : vector<20x96xbf16> to vector<20x8xbf16>
    %cst_32 = arith.constant dense<0.000000e+00> : vector<20x8xf32>
    %86 = tpu.matmul %84, %85, %cst_32 {dimension_numbers = #tpu.dot_dimension_numbers<[1], [0], [0], [1], [0, 0, 1, 1], [], []>} : vector<20x20xbf16>, vector<20x8xbf16>, vector<20x8xf32> -> vector<20x8xf32>
    %87 = vector.extract_strided_slice %80 {offsets = [40, 0], sizes = [20, 20], strides = [1, 1]} : vector<80x20xbf16> to vector<20x20xbf16>
    %88 = vector.extract_strided_slice %14 {offsets = [0, 80], sizes = [20, 8], strides = [1, 1]} : vector<20x96xbf16> to vector<20x8xbf16>
    %cst_33 = arith.constant dense<0.000000e+00> : vector<20x8xf32>
    %89 = tpu.matmul %87, %88, %cst_33 {dimension_numbers = #tpu.dot_dimension_numbers<[1], [0], [0], [1], [0, 0, 1, 1], [], []>} : vector<20x20xbf16>, vector<20x8xbf16>, vector<20x8xf32> -> vector<20x8xf32>
    %90 = vector.extract_strided_slice %80 {offsets = [60, 0], sizes = [20, 20], strides = [1, 1]} : vector<80x20xbf16> to vector<20x20xbf16>
    %91 = vector.extract_strided_slice %14 {offsets = [0, 88], sizes = [20, 8], strides = [1, 1]} : vector<20x96xbf16> to vector<20x8xbf16>
    %cst_34 = arith.constant dense<0.000000e+00> : vector<20x8xf32>
    %92 = tpu.matmul %90, %91, %cst_34 {dimension_numbers = #tpu.dot_dimension_numbers<[1], [0], [0], [1], [0, 0, 1, 1], [], []>} : vector<20x20xbf16>, vector<20x8xbf16>, vector<20x8xf32> -> vector<20x8xf32>
    %93 = tpu.concatenate %83, %86, %89, %92 in 1 : vector<20x8xf32>, vector<20x8xf32>, vector<20x8xf32>, vector<20x8xf32> -> vector<20x32xf32>
    %c0_35 = arith.constant 0 : index
    %c0_36 = arith.constant 0 : index
    %94 = vector.load %arg2[%c0_35, %c0_36] : memref<32x32xbf16, #tpu.memory_space<vmem>>, vector<32x32xbf16>
    %95 = arith.truncf %93 : vector<20x32xf32> to vector<20x32xbf16>
    %cst_37 = arith.constant dense<0.000000e+00> : vector<20x32xf32>
    %96 = tpu.matmul %95, %94, %cst_37 {dimension_numbers = #tpu.dot_dimension_numbers<[1], [0], [0], [1], [0, 0, 1, 1], [], []>} : vector<20x32xbf16>, vector<32x32xbf16>, vector<20x32xf32> -> vector<20x32xf32>
    %97 = vector.broadcast %1 : vector<1x32xf32> to vector<20x32xf32>
    %98 = arith.addf %96, %97 : vector<20x32xf32>
    %99 = arith.addf %8, %98 : vector<20x32xf32>
    %cst_38 = arith.constant dense<0.000000e+00> : vector<20xf32>
    %100 = vector.multi_reduction <add>, %99, %cst_38 [1] : vector<20x32xf32> to vector<20xf32>
    %101 = vector.shape_cast %100 : vector<20xf32> to vector<20x1xf32>
    %cst_39 = arith.constant 3.200000e+01 : f32
    %102 = vector.broadcast %cst_39 : f32 to vector<20x1xf32>
    %103 = arith.divf %101, %102 : vector<20x1xf32>
    %104 = vector.broadcast %103 : vector<20x1xf32> to vector<20x32xf32>
    %105 = arith.subf %99, %104 : vector<20x32xf32>
    %106 = arith.mulf %105, %105 : vector<20x32xf32>
    %cst_40 = arith.constant dense<0.000000e+00> : vector<20xf32>
    %107 = vector.multi_reduction <add>, %106, %cst_40 [1] : vector<20x32xf32> to vector<20xf32>
    %108 = vector.shape_cast %107 : vector<20xf32> to vector<20x1xf32>
    %cst_41 = arith.constant 3.200000e+01 : f32
    %109 = vector.broadcast %cst_41 : f32 to vector<20x1xf32>
    %110 = arith.divf %108, %109 : vector<20x1xf32>
    %cst_42 = arith.constant 9.99999974E-6 : f32
    %111 = vector.broadcast %cst_42 : f32 to vector<20x1xf32>
    %112 = arith.addf %110, %111 : vector<20x1xf32>
    %113 = math.rsqrt %112 : vector<20x1xf32>
    %114 = vector.broadcast %113 : vector<20x1xf32> to vector<20x32xf32>
    %115 = arith.mulf %105, %114 : vector<20x32xf32>
    %116 = vector.broadcast %2 : vector<1x32xf32> to vector<20x32xf32>
    %117 = arith.mulf %115, %116 : vector<20x32xf32>
    %118 = vector.broadcast %3 : vector<1x32xf32> to vector<20x32xf32>
    %119 = arith.addf %117, %118 : vector<20x32xf32>
    %c0_43 = arith.constant 0 : index
    %c0_44 = arith.constant 0 : index
    %120 = vector.load %arg3[%c0_43, %c0_44] : memref<32x2048xbf16, #tpu.memory_space<vmem>>, vector<32x2048xbf16>
    %121 = arith.truncf %119 : vector<20x32xf32> to vector<20x32xbf16>
    %cst_45 = arith.constant dense<0.000000e+00> : vector<20x2048xf32>
    %122 = tpu.matmul %121, %120, %cst_45 {dimension_numbers = #tpu.dot_dimension_numbers<[1], [0], [0], [1], [0, 0, 1, 1], [], []>} : vector<20x32xbf16>, vector<32x2048xbf16>, vector<20x2048xf32> -> vector<20x2048xf32>
    %123 = vector.broadcast %4 : vector<1x2048xf32> to vector<20x2048xf32>
    %124 = arith.addf %122, %123 : vector<20x2048xf32>
    %cst_46 = arith.constant 0.000000e+00 : f32
    %125 = vector.broadcast %cst_46 : f32 to vector<20x2048xf32>
    %126 = arith.maximumf %124, %125 : vector<20x2048xf32>
    %c0_47 = arith.constant 0 : index
    %c0_48 = arith.constant 0 : index
    %127 = vector.load %arg4[%c0_47, %c0_48] : memref<2048x32xbf16, #tpu.memory_space<vmem>>, vector<2048x32xbf16>
    %128 = arith.truncf %126 : vector<20x2048xf32> to vector<20x2048xbf16>
    %cst_49 = arith.constant dense<0.000000e+00> : vector<20x32xf32>
    %129 = tpu.matmul %128, %127, %cst_49 {dimension_numbers = #tpu.dot_dimension_numbers<[1], [0], [0], [1], [0, 0, 1, 1], [], []>} : vector<20x2048xbf16>, vector<2048x32xbf16>, vector<20x32xf32> -> vector<20x32xf32>
    %130 = vector.broadcast %5 : vector<1x32xf32> to vector<20x32xf32>
    %131 = arith.addf %129, %130 : vector<20x32xf32>
    %132 = arith.addf %119, %131 : vector<20x32xf32>
    %cst_50 = arith.constant dense<0.000000e+00> : vector<20xf32>
    %133 = vector.multi_reduction <add>, %132, %cst_50 [1] : vector<20x32xf32> to vector<20xf32>
    %134 = vector.shape_cast %133 : vector<20xf32> to vector<20x1xf32>
    %cst_51 = arith.constant 3.200000e+01 : f32
    %135 = vector.broadcast %cst_51 : f32 to vector<20x1xf32>
    %136 = arith.divf %134, %135 : vector<20x1xf32>
    %137 = vector.broadcast %136 : vector<20x1xf32> to vector<20x32xf32>
    %138 = arith.subf %132, %137 : vector<20x32xf32>
    %139 = arith.mulf %138, %138 : vector<20x32xf32>
    %cst_52 = arith.constant dense<0.000000e+00> : vector<20xf32>
    %140 = vector.multi_reduction <add>, %139, %cst_52 [1] : vector<20x32xf32> to vector<20xf32>
    %141 = vector.shape_cast %140 : vector<20xf32> to vector<20x1xf32>
    %cst_53 = arith.constant 3.200000e+01 : f32
    %142 = vector.broadcast %cst_53 : f32 to vector<20x1xf32>
    %143 = arith.divf %141, %142 : vector<20x1xf32>
    %cst_54 = arith.constant 9.99999974E-6 : f32
    %144 = vector.broadcast %cst_54 : f32 to vector<20x1xf32>
    %145 = arith.addf %143, %144 : vector<20x1xf32>
    %146 = math.rsqrt %145 : vector<20x1xf32>
    %147 = vector.broadcast %146 : vector<20x1xf32> to vector<20x32xf32>
    %148 = arith.mulf %138, %147 : vector<20x32xf32>
    %149 = vector.broadcast %6 : vector<1x32xf32> to vector<20x32xf32>
    %150 = arith.mulf %148, %149 : vector<20x32xf32>
    %151 = vector.broadcast %7 : vector<1x32xf32> to vector<20x32xf32>
    %152 = arith.addf %150, %151 : vector<20x32xf32>
    %c0_55 = arith.constant 0 : index
    %c0_56 = arith.constant 0 : index
    %153 = vector.load %arg6[%c0_55, %c0_56] : memref<20x32xf32, #tpu.memory_space<vmem>>, vector<20x32xf32>
    tpu.vector_store %arg6[%c0_55, %c0_56], %152 {strides = array<i32>} : memref<20x32xf32, #tpu.memory_space<vmem>>, vector<20x32xf32>,
    return
  }
}

</mosaic_0001>

<llo_original>
// kernel: tpu_custom_call.1
$region0: #{tpu_custom_call.1}
  #allocation0 [shape = 'u32[]', space=smem, size = 0x4, offset = 0x4, fixed_abs, tag = 'smem constant byte address 0x4 - core index']
  #allocation1 [shape = 'u32[144,128]{1,0:T(1,128)}', space=vmem, size = 0x12000, scoped, tag = 'internal scratch']
  %s0 = inlined_call_operand.vmem [shape: f32[20,32], index: 0, kind: input, shape index: {}]
  %s1 = inlined_call_operand.vmem [shape: bf16[32,96], index: 1, kind: input, shape index: {}]
  %s2 = inlined_call_operand.vmem [shape: bf16[32,32], index: 2, kind: input, shape index: {}]
  %s3 = inlined_call_operand.vmem [shape: bf16[32,2048], index: 3, kind: input, shape index: {}]
  %s4 = inlined_call_operand.vmem [shape: bf16[2048,32], index: 4, kind: input, shape index: {}]
  %s5 = inlined_call_operand.vmem [shape: f32[1,2944], index: 5, kind: input, shape index: {}]
  %s6 = inlined_call_operand.hbm [shape: f32[20,32], index: 6, kind: output, shape index: {}]
  %s7 = sld [smem:[#allocation0]]
  $region34: #{tpu_custom_call.1} parent=0
    _
  %s9 = ssub.s32 1, %s7
  %s10 = scalar_select 0, %s9, %s7
  $region1: #{tpu_custom_call.1} parent=0
    #allocation2 [shape = 'u8[12288]{0}', space=vmem, size = 0x3000, scoped, tag = 'output window, operand 0, single buffered']
    #allocation3 [shape = 's32[1]{0}', space=sflag, size = 0x4, scoped, tag = 'scoped memory for tpu_custom_call.1']
    %11 = vsyncpa [#allocation3], 0
    // Predicated region
    $region2: #{tpu_custom_call.1} parent=1 // pred_check
      _
    $region3: #{tpu_custom_call.1} parent=1 // pred_check_branch
      %13 = sbr.rel (0) target = $region5
    $region4: #{tpu_custom_call.1} parent=1 // pred_region
      _
    $region5: #{tpu_custom_call.1} parent=1 // pred_fallthru
      _
    // Predicated region
    $region6: #{tpu_custom_call.1} parent=1 // pred_check
      _
    $region7: #{tpu_custom_call.1} parent=1 // pred_check_branch
      %15 = sbr.rel (0) target = $region9
    $region8: #{tpu_custom_call.1} parent=1 // pred_region
      _
    $region9: #{tpu_custom_call.1} parent=1 // pred_fallthru
      _
    // Predicated region
    $region10: #{tpu_custom_call.1} parent=1 // pred_check
      _
    $region11: #{tpu_custom_call.1} parent=1 // pred_check_branch
      %17 = sbr.rel (0) target = $region13
    $region12: #{tpu_custom_call.1} parent=1 // pred_region
      _
    $region13: #{tpu_custom_call.1} parent=1 // pred_fallthru
      _
    // Predicated region
    $region14: #{tpu_custom_call.1} parent=1 // pred_check
      _
    $region15: #{tpu_custom_call.1} parent=1 // pred_check_branch
      %19 = sbr.rel (0) target = $region17
    $region16: #{tpu_custom_call.1} parent=1 // pred_region
      _
    $region17: #{tpu_custom_call.1} parent=1 // pred_fallthru
      _
    // Predicated region
    $region18: #{tpu_custom_call.1} parent=1 // pred_check
      _
    $region19: #{tpu_custom_call.1} parent=1 // pred_check_branch
      %21 = sbr.rel (0) target = $region21
    $region20: #{tpu_custom_call.1} parent=1 // pred_region
      _
    $region21: #{tpu_custom_call.1} parent=1 // pred_fallthru
      _
    // Predicated region
    $region22: #{tpu_custom_call.1} parent=1 // pred_check
      _
    $region23: #{tpu_custom_call.1} parent=1 // pred_check_branch
      %23 = sbr.rel (0) target = $region25
    $region24: #{tpu_custom_call.1} parent=1 // pred_region
      _
    $region25: #{tpu_custom_call.1} parent=1 // pred_fallthru
      _
    %v25 = vld [vmem:[%s5] sm:$0x1]
    %v26 = vld [vmem:[%s5 + $0x1] sm:$0x1]
    %v27 = vld [vmem:[%s5 + $0x2] sm:$0x1]
    %v28 = vld [vmem:[%s5 + $0x3] sm:$0x1]
    %v29 = vld [vmem:[%s5 + $0x4] sm:$0xff]
    %v30 = vld [vmem:[%s5 + $0xc] sm:$0xff]
    %v31 = vld [vmem:[%s5 + $0x14] sm:$0x1]
    %v32 = vld [vmem:[%s5 + $0x15] sm:$0x1]
    %v33 = vld [vmem:[%s5 + $0x16] sm:$0x1]
    %v34 = vld [vmem:[%s0] sm:$0xff]
    %v35 = vld [vmem:[%s0 + $0x8] sm:$0xff]
    %v36 = vld [vmem:[%s0 + $0x10] sm:$0xf]
    %v37 = vld [vmem:[%s1] sm:$0xf]
    %v38 = vld [vmem:[%s1 + $0x4] sm:$0xf]
    %v39 = vld [vmem:[%s1 + $0x8] sm:$0xf]
    %v40 = vld [vmem:[%s1 + $0xc] sm:$0xf]
    %v41 = vpack.c.bf16 %v35, %v34
    %v42 = vpack.c.bf16 %v36, %v36
    %v44 = vlaneseq
    %v45 = vshrl.u32 %v44, 7
    %v46 = vsub.s32 0, %v45
    %v47 = vrot.slane %v25, %v46
    %v53 = vunpack.c.l.b16 %v37
    %v54 = vunpack.c.l.b16 %v38
    %v55 = vunpack.c.l.b16 %v39
    %v56 = vunpack.c.l.b16 %v40
    %v57 = vpack.c.b16 %v54, %v53
    %v58 = vpack.c.b16 %v56, %v55
    %vm61 = vcmask 261120
    %v63 = vsel %vm61, %v41, 0
    %v66 = vsel %vm61, %v42, 0
    %68 = vmatprep.subr.bf16.mxu0 0
    %69 = vmatpush1.bf16.msra.mxu0 %v57
    %70 = vmatprep.subr.bf16.mxu0 0
    %71 = vmatpush1.bf16.msra.mxu0 %v58
    %72 = vmatprep.subr.bf16.mxu0 0
    %73 = vmatpush1.bf16.msra.mxu0 0
    %74 = vmatprep.subr.bf16.mxu0 0
    %75 = vmatpush1.bf16.msra.mxu0 0
    %76 = vmatprep.subr.bf16.mxu0 0
    %77 = vmatpush1.bf16.msra.mxu0 0
    %78 = vmatprep.subr.bf16.mxu0 0
    %79 = vmatpush1.bf16.msra.mxu0 0
    %80 = vmatprep.subr.bf16.mxu0 0
    %81 = vmatpush1.bf16.msra.mxu0 0
    %82 = vmatprep.subr.bf16.mxu0 0
    %83 = vmatpush1.bf16.msra.mxu0 0
    %84 = vmatprep.subr.bf16.mxu0 0
    %85 = vmatpush1.bf16.msra.mxu0 0
    %86 = vmatprep.subr.bf16.mxu0 0
    %87 = vmatpush1.bf16.msra.mxu0 0
    %88 = vmatprep.subr.bf16.mxu0 0
    %89 = vmatpush1.bf16.msra.mxu0 0
    %90 = vmatprep.subr.bf16.mxu0 0
    %91 = vmatpush1.bf16.msra.mxu0 0
    %92 = vmatprep.subr.bf16.mxu0 0
    %93 = vmatpush1.bf16.msra.mxu0 0
    %94 = vmatprep.subr.bf16.mxu0 0
    %95 = vmatpush1.bf16.msra.mxu0 0
    %96 = vmatprep.subr.bf16.mxu0 0
    %97 = vmatpush1.bf16.msra.mxu0 0
    %98 = vmatprep.subr.bf16.mxu0 0
    %99 = vmatpush1.bf16.msra.mxu0 0
    %100 = vmatprep.mubr.bf16.mxu0 0
    %101 = vmatmul.mubr.bf16.gmra.mrb[0].mxu0 %v63
    %v102 = vpop.f32.mrb[0].mxu0
    %v103 = vadd.f32 %v47, %v102
    %v104 = vpop.f32.mrb[0].mxu0
    %v105 = vpop.f32.mrb[0].mxu0
    %v106 = vadd.f32 %v47, %v105
    %v107 = vpop.f32.mrb[0].mxu0
    %108 = vmatprep.mubr.bf16.mxu0 0
    %109 = vmatmul.mubr.bf16.gmra.mrb[0].mxu0 %v66
    %v110 = vpop.f32.mrb[0].mxu0
    %v111 = vadd.f32 %v47, %v110
    %v112 = vpop.f32.mrb[0].mxu0
    %v113 = vpop.f32.mrb[0].mxu0
    %v114 = vpop.f32.mrb[0].mxu0
    %115 = vdwg.mxu0
    %v116 = vpack.c.bf16 %v106, %v103
    %v117 = vpack.c.bf16 %v111, %v111
    %v118 = vlaneseq
    %v119 = vshrl.u32 %v118, 7
    %v120 = vadd.s32 %v119, 8
    %v121 = vadd.s32 %v119, 16
    %v122 = vlaneseq
    %v123 = vand.u32 %v122, 127
    %vm124 = vcmp.ge.s32.totalorder %v119, 0
    %vm125 = vcmp.ge.s32.totalorder %v120, 0
    %vm126 = vcmp.ge.s32.totalorder %v121, 0
    %vm127 = vcmp.lt.s32.totalorder %v119, 10
    %vm128 = vcmp.lt.s32.totalorder %v120, 10
    %vm129 = vcmp.lt.s32.totalorder %v121, 10
    %vm130 = vmand %vm124, %vm127
    %vm131 = vmand %vm125, %vm128
    %vm132 = vmand %vm126, %vm129
    %vm133 = vcmp.ge.s32.totalorder %v123, 0
    %vm134 = vcmp.lt.s32.totalorder %v123, 10
    %vm135 = vmand %vm133, %vm134
    %vm136 = vmand %vm130, %vm135
    %vm137 = vmand %vm131, %vm135
    %vm138 = vmand %vm132, %vm135
    %vm139 = vcmp.ge.s32.totalorder %v119, 10
    %vm140 = vcmp.ge.s32.totalorder %v120, 10
    %vm141 = vcmp.ge.s32.totalorder %v121, 10
    %vm142 = vcmp.lt.s32.totalorder %v119, 20
    %vm143 = vcmp.lt.s32.totalorder %v120, 20
    %vm144 = vcmp.lt.s32.totalorder %v121, 20
    %vm145 = vmand %vm139, %vm142
    %vm146 = vmand %vm140, %vm143
    %vm147 = vmand %vm141, %vm144
    %vm148 = vcmp.ge.s32.totalorder %v123, 10
    %vm149 = vcmp.lt.s32.totalorder %v123, 20
    %vm150 = vmand %vm148, %vm149
    %vm151 = vmand %vm145, %vm150
    %vm152 = vmand %vm146, %vm150
    %vm153 = vmand %vm147, %vm150
    %vm154 = vmor %vm136, %vm151
    %vm155 = vmor %vm137, %vm152
    %vm156 = vmor %vm138, %vm153
    %159 = vrot.lane.b32.xlu0 %v116, 96
    %v160 = vpop.permute.xlu0 %159
    %161 = vrot.lane.b32.xlu0 %v117, 96
    %v162 = vpop.permute.xlu0 %161
    %vm163 = vcmask 64512
    %v165 = vsel %vm163, %v116, 0
    %v168 = vsel %vm163, %v117, 0
    %v171 = vsel %vm163, %v160, 0
    %v174 = vsel %vm163, %v162, 0
    %176 = vmatprep.subr.bf16.mxu0 0
    %177 = vmatpush1.bf16.xpose.msra.mxu0 %v171
    %178 = vmatprep.subr.bf16.mxu0 0
    %179 = vmatpush1.bf16.xpose.msra.mxu0 %v174
    %180 = vmatprep.subr.bf16.mxu0 0
    %181 = vmatpush1.bf16.xpose.msra.mxu0 0
    %182 = vmatprep.subr.bf16.mxu0 0
    %183 = vmatpush1.bf16.xpose.msra.mxu0 0
    %184 = vmatprep.subr.bf16.mxu0 0
    %185 = vmatpush1.bf16.xpose.msra.mxu0 0
    %186 = vmatprep.subr.bf16.mxu0 0
    %187 = vmatpush1.bf16.xpose.msra.mxu0 0
    %188 = vmatprep.subr.bf16.mxu0 0
    %189 = vmatpush1.bf16.xpose.msra.mxu0 0
    %190 = vmatprep.subr.bf16.mxu0 0
    %191 = vmatpush1.bf16.xpose.msra.mxu0 0
    %192 = vmatprep.subr.bf16.mxu0 0
    %193 = vmatpush1.bf16.xpose.msra.mxu0 0
    %194 = vmatprep.subr.bf16.mxu0 0
    %195 = vmatpush1.bf16.xpose.msra.mxu0 0
    %196 = vmatprep.subr.bf16.mxu0 0
    %197 = vmatpush1.bf16.xpose.msra.mxu0 0
    %198 = vmatprep.subr.bf16.mxu0 0
    %199 = vmatpush1.bf16.xpose.msra.mxu0 0
    %200 = vmatprep.subr.bf16.mxu0 0
    %201 = vmatpush1.bf16.xpose.msra.mxu0 0
    %202 = vmatprep.subr.bf16.mxu0 0
    %203 = vmatpush1.bf16.xpose.msra.mxu0 0
    %204 = vmatprep.subr.bf16.mxu0 0
    %205 = vmatpush1.bf16.xpose.msra.mxu0 0
    %206 = vmatprep.subr.bf16.mxu0 0
    %207 = vmatpush1.bf16.xpose.msra.mxu0 0
    %208 = vmatprep.mubr.bf16.mxu0 0
    %209 = vmatmul.mubr.bf16.gmra.mrb[0].mxu0 %v165
    %v210 = vpop.f32.mrb[0].mxu0
    %v211 = vadd.f32 0.0, %v210
    %v212 = vpop.f32.mrb[0].mxu0
    %v213 = vpop.f32.mrb[0].mxu0
    %v214 = vadd.f32 0.0, %v213
    %v215 = vpop.f32.mrb[0].mxu0
    %216 = vmatprep.mubr.bf16.mxu0 0
    %217 = vmatmul.mubr.bf16.gmra.mrb[0].mxu0 %v168
    %v218 = vpop.f32.mrb[0].mxu0
    %v219 = vadd.f32 0.0, %v218
    %v220 = vpop.f32.mrb[0].mxu0
    %v221 = vpop.f32.mrb[0].mxu0
    %v222 = vpop.f32.mrb[0].mxu0
    %223 = vdwg.mxu0
    %v224 = vmul.f32 %v211, 0.35355338
    %v225 = vmul.f32 %v214, 0.35355338
    %v226 = vmul.f32 %v219, 0.35355338
    %v227 = vsel %vm154, %v224, -1e+30
    %v228 = vsel %vm155, %v225, -1e+30
    %v229 = vsel %vm156, %v226, -1e+30
    %230 = vrot.lane.b32.xlu0 %v116, 120
    %v231 = vpop.permute.xlu0 %230
    %232 = vrot.lane.b32.xlu0 %v117, 120
    %v233 = vpop.permute.xlu0 %232
    %234 = vrot.lane.b32.xlu0 %v116, 88
    %v235 = vpop.permute.xlu0 %234
    %236 = vrot.lane.b32.xlu0 %v117, 88
    %v237 = vpop.permute.xlu0 %236
    %v239 = vsel %vm163, %v231, 0
    %v242 = vsel %vm163, %v233, 0
    %v245 = vsel %vm163, %v235, 0
    %v248 = vsel %vm163, %v237, 0
    %250 = vmatprep.subr.bf16.mxu0 0
    %251 = vmatpush1.bf16.xpose.msra.mxu0 %v245
    %252 = vmatprep.subr.bf16.mxu0 0
    %253 = vmatpush1.bf16.xpose.msra.mxu0 %v248
    %254 = vmatprep.subr.bf16.mxu0 0
    %255 = vmatpush1.bf16.xpose.msra.mxu0 0
    %256 = vmatprep.subr.bf16.mxu0 0
    %257 = vmatpush1.bf16.xpose.msra.mxu0 0
    %258 = vmatprep.subr.bf16.mxu0 0
    %259 = vmatpush1.bf16.xpose.msra.mxu0 0
    %260 = vmatprep.subr.bf16.mxu0 0
    %261 = vmatpush1.bf16.xpose.msra.mxu0 0
    %262 = vmatprep.subr.bf16.mxu0 0
    %263 = vmatpush1.bf16.xpose.msra.mxu0 0
    %264 = vmatprep.subr.bf16.mxu0 0
    %265 = vmatpush1.bf16.xpose.msra.mxu0 0
    %266 = vmatprep.subr.bf16.mxu0 0
    %267 = vmatpush1.bf16.xpose.msra.mxu0 0
    %268 = vmatprep.subr.bf16.mxu0 0
    %269 = vmatpush1.bf16.xpose.msra.mxu0 0
    %270 = vmatprep.subr.bf16.mxu0 0
    %271 = vmatpush1.bf16.xpose.msra.mxu0 0
    %272 = vmatprep.subr.bf16.mxu0 0
    %273 = vmatpush1.bf16.xpose.msra.mxu0 0
    %274 = vmatprep.subr.bf16.mxu0 0
    %275 = vmatpush1.bf16.xpose.msra.mxu0 0
    %276 = vmatprep.subr.bf16.mxu0 0
    %277 = vmatpush1.bf16.xpose.msra.mxu0 0
    %278 = vmatprep.subr.bf16.mxu0 0
    %279 = vmatpush1.bf16.xpose.msra.mxu0 0
    %280 = vmatprep.subr.bf16.mxu0 0
    %281 = vmatpush1.bf16.xpose.msra.mxu0 0
    %282 = vmatprep.mubr.bf16.mxu0 0
    %283 = vmatmul.mubr.bf16.gmra.mrb[0].mxu0 %v239
    %v284 = vpop.f32.mrb[0].mxu0
    %v285 = vadd.f32 0.0, %v284
    %v286 = vpop.f32.mrb[0].mxu0
    %v287 = vpop.f32.mrb[0].mxu0
    %v288 = vadd.f32 0.0, %v287
    %v289 = vpop.f32.mrb[0].mxu0
    %290 = vmatprep.mubr.bf16.mxu0 0
    %291 = vmatmul.mubr.bf16.gmra.mrb[0].mxu0 %v242
    %v292 = vpop.f32.mrb[0].mxu0
    %v293 = vadd.f32 0.0, %v292
    %v294 = vpop.f32.mrb[0].mxu0
    %v295 = vpop.f32.mrb[0].mxu0
    %v296 = vpop.f32.mrb[0].mxu0
    %297 = vdwg.mxu0
    %v298 = vmul.f32 %v285, 0.35355338
    %v299 = vmul.f32 %v288, 0.35355338
    %v300 = vmul.f32 %v293, 0.35355338
    %v301 = vsel %vm154, %v298, -1e+30
    %v302 = vsel %vm155, %v299, -1e+30
    %v303 = vsel %vm156, %v300, -1e+30
    %304 = vrot.lane.b32.xlu0 %v116, 112
    %v305 = vpop.permute.xlu0 %304
    %306 = vrot.lane.b32.xlu0 %v117, 112
    %v307 = vpop.permute.xlu0 %306
    %308 = vrot.lane.b32.xlu0 %v116, 80
    %v309 = vpop.permute.xlu0 %308
    %310 = vrot.lane.b32.xlu0 %v117, 80
    %v311 = vpop.permute.xlu0 %310
    %v313 = vsel %vm163, %v305, 0
    %v316 = vsel %vm163, %v307, 0
    %v319 = vsel %vm163, %v309, 0
    %v322 = vsel %vm163, %v311, 0
    %324 = vmatprep.subr.bf16.mxu0 0
    %325 = vmatpush1.bf16.xpose.msra.mxu0 %v319
    %326 = vmatprep.subr.bf16.mxu0 0
    %327 = vmatpush1.bf16.xpose.msra.mxu0 %v322
    %328 = vmatprep.subr.bf16.mxu0 0
    %329 = vmatpush1.bf16.xpose.msra.mxu0 0
    %330 = vmatprep.subr.bf16.mxu0 0
    %331 = vmatpush1.bf16.xpose.msra.mxu0 0
    %332 = vmatprep.subr.bf16.mxu0 0
    %333 = vmatpush1.bf16.xpose.msra.mxu0 0
    %334 = vmatprep.subr.bf16.mxu0 0
    %335 = vmatpush1.bf16.xpose.msra.mxu0 0
    %336 = vmatprep.subr.bf16.mxu0 0
    %337 = vmatpush1.bf16.xpose.msra.mxu0 0
    %338 = vmatprep.subr.bf16.mxu0 0
    %339 = vmatpush1.bf16.xpose.msra.mxu0 0
    %340 = vmatprep.subr.bf16.mxu0 0
    %341 = vmatpush1.bf16.xpose.msra.mxu0 0
    %342 = vmatprep.subr.bf16.mxu0 0
    %343 = vmatpush1.bf16.xpose.msra.mxu0 0
    %344 = vmatprep.subr.bf16.mxu0 0
    %345 = vmatpush1.bf16.xpose.msra.mxu0 0
    %346 = vmatprep.subr.bf16.mxu0 0
    %347 = vmatpush1.bf16.xpose.msra.mxu0 0
    %348 = vmatprep.subr.bf16.mxu0 0
    %349 = vmatpush1.bf16.xpose.msra.mxu0 0
    %350 = vmatprep.subr.bf16.mxu0 0
    %351 = vmatpush1.bf16.xpose.msra.mxu0 0
    %352 = vmatprep.subr.bf16.mxu0 0
    %353 = vmatpush1.bf16.xpose.msra.mxu0 0
    %354 = vmatprep.subr.bf16.mxu0 0
    %355 = vmatpush1.bf16.xpose.msra.mxu0 0
    %356 = vmatprep.mubr.bf16.mxu0 0
    %357 = vmatmul.mubr.bf16.gmra.mrb[0].mxu0 %v313
    %v358 = vpop.f32.mrb[0].mxu0
    %v359 = vadd.f32 0.0, %v358
    %v360 = vpop.f32.mrb[0].mxu0
    %v361 = vpop.f32.mrb[0].mxu0
    %v362 = vadd.f32 0.0, %v361
    %v363 = vpop.f32.mrb[0].mxu0
    %364 = vmatprep.mubr.bf16.mxu0 0
    %365 = vmatmul.mubr.bf16.gmra.mrb[0].mxu0 %v316
    %v366 = vpop.f32.mrb[0].mxu0
    %v367 = vadd.f32 0.0, %v366
    %v368 = vpop.f32.mrb[0].mxu0
    %v369 = vpop.f32.mrb[0].mxu0
    %v370 = vpop.f32.mrb[0].mxu0
    %371 = vdwg.mxu0
    %v372 = vmul.f32 %v359, 0.35355338
    %v373 = vmul.f32 %v362, 0.35355338
    %v374 = vmul.f32 %v367, 0.35355338
    %v375 = vsel %vm154, %v372, -1e+30
    %v376 = vsel %vm155, %v373, -1e+30
    %v377 = vsel %vm156, %v374, -1e+30
    %378 = vrot.lane.b32.xlu0 %v116, 104
    %v379 = vpop.permute.xlu0 %378
    %380 = vrot.lane.b32.xlu0 %v117, 104
    %v381 = vpop.permute.xlu0 %380
    %382 = vrot.lane.b32.xlu0 %v116, 72
    %v383 = vpop.permute.xlu0 %382
    %384 = vrot.lane.b32.xlu0 %v117, 72
    %v385 = vpop.permute.xlu0 %384
    %v387 = vsel %vm163, %v379, 0
    %v390 = vsel %vm163, %v381, 0
    %v393 = vsel %vm163, %v383, 0
    %v396 = vsel %vm163, %v385, 0
    %398 = vmatprep.subr.bf16.mxu0 0
    %399 = vmatpush1.bf16.xpose.msra.mxu0 %v393
    %400 = vmatprep.subr.bf16.mxu0 0
    %401 = vmatpush1.bf16.xpose.msra.mxu0 %v396
    %402 = vmatprep.subr.bf16.mxu0 0
    %403 = vmatpush1.bf16.xpose.msra.mxu0 0
    %404 = vmatprep.subr.bf16.mxu0 0
    %405 = vmatpush1.bf16.xpose.msra.mxu0 0
    %406 = vmatprep.subr.bf16.mxu0 0
    %407 = vmatpush1.bf16.xpose.msra.mxu0 0
    %408 = vmatprep.subr.bf16.mxu0 0
    %409 = vmatpush1.bf16.xpose.msra.mxu0 0
    %410 = vmatprep.subr.bf16.mxu0 0
    %411 = vmatpush1.bf16.xpose.msra.mxu0 0
    %412 = vmatprep.subr.bf16.mxu0 0
    %413 = vmatpush1.bf16.xpose.msra.mxu0 0
    %414 = vmatprep.subr.bf16.mxu0 0
    %415 = vmatpush1.bf16.xpose.msra.mxu0 0
    %416 = vmatprep.subr.bf16.mxu0 0
    %417 = vmatpush1.bf16.xpose.msra.mxu0 0
    %418 = vmatprep.subr.bf16.mxu0 0
    %419 = vmatpush1.bf16.xpose.msra.mxu0 0
    %420 = vmatprep.subr.bf16.mxu0 0
    %421 = vmatpush1.bf16.xpose.msra.mxu0 0
    %422 = vmatprep.subr.bf16.mxu0 0
    %423 = vmatpush1.bf16.xpose.msra.mxu0 0
    %424 = vmatprep.subr.bf16.mxu0 0
    %425 = vmatpush1.bf16.xpose.msra.mxu0 0
    %426 = vmatprep.subr.bf16.mxu0 0
    %427 = vmatpush1.bf16.xpose.msra.mxu0 0
    %428 = vmatprep.subr.bf16.mxu0 0
    %429 = vmatpush1.bf16.xpose.msra.mxu0 0
    %430 = vmatprep.mubr.bf16.mxu0 0
    %431 = vmatmul.mubr.bf16.gmra.mrb[0].mxu0 %v387
    %v432 = vpop.f32.mrb[0].mxu0
    %v433 = vadd.f32 0.0, %v432
    %v434 = vpop.f32.mrb[0].mxu0
    %v435 = vpop.f32.mrb[0].mxu0
    %v436 = vadd.f32 0.0, %v435
    %v437 = vpop.f32.mrb[0].mxu0
    %438 = vmatprep.mubr.bf16.mxu0 0
    %439 = vmatmul.mubr.bf16.gmra.mrb[0].mxu0 %v390
    %v440 = vpop.f32.mrb[0].mxu0
    %v441 = vadd.f32 0.0, %v440
    %v442 = vpop.f32.mrb[0].mxu0
    %v443 = vpop.f32.mrb[0].mxu0
    %v444 = vpop.f32.mrb[0].mxu0
    %445 = vdwg.mxu0
    %v446 = vmul.f32 %v433, 0.35355338
    %v447 = vmul.f32 %v436, 0.35355338
    %v448 = vmul.f32 %v441, 0.35355338
    %v449 = vsel %vm154, %v446, -1e+30
    %v450 = vsel %vm155, %v447, -1e+30
    %v451 = vsel %vm156, %v448, -1e+30
    %vm455 = vcmask 1043456
    %v456 = vrot.slane %v301, 4
    %v457 = vrot.slane %v302, 4
    %v458 = vsel %vm455, %v456, %v457
    %v459 = vrot.slane %v303, 4
    %v460 = vsel %vm455, %v457, %v459
    %v467 = vrot.slane %v449, 4
    %v468 = vrot.slane %v450, 4
    %v469 = vsel %vm455, %v467, %v468
    %v470 = vrot.slane %v451, 4
    %v471 = vsel %vm455, %v468, %v470
    %v475 = vsel %vm455, %v229, %v456
    %v476 = vsel %vm455, %v377, %v467
    %vm477 = vcmask 162816
    %v478 = vsel %vm477, %v227, -inf
    %479 = vmax.xlane.f32.xlu0 %v478
    %v480 = vpop.xlane.xlu0 %479
    %v481 = vsel %vm477, %v228, -inf
    %482 = vmax.xlane.f32.xlu0 %v481
    %v483 = vpop.xlane.xlu0 %482
    %v484 = vsel %vm477, %v475, -inf
    %485 = vmax.xlane.f32.xlu0 %v484
    %v486 = vpop.xlane.xlu0 %485
    %v487 = vsel %vm477, %v458, -inf
    %488 = vmax.xlane.f32.xlu0 %v487
    %v489 = vpop.xlane.xlu0 %488
    %v490 = vsel %vm477, %v460, -inf
    %491 = vmax.xlane.f32.xlu0 %v490
    %v492 = vpop.xlane.xlu0 %491
    %v493 = vsel %vm477, %v375, -inf
    %494 = vmax.xlane.f32.xlu0 %v493
    %v495 = vpop.xlane.xlu0 %494
    %v496 = vsel %vm477, %v376, -inf
    %497 = vmax.xlane.f32.xlu0 %v496
    %v498 = vpop.xlane.xlu0 %497
    %v499 = vsel %vm477, %v476, -inf
    %500 = vmax.xlane.f32.xlu0 %v499
    %v501 = vpop.xlane.xlu0 %500
    %v502 = vsel %vm477, %v469, -inf
    %503 = vmax.xlane.f32.xlu0 %v502
    %v504 = vpop.xlane.xlu0 %503
    %v505 = vsel %vm477, %v471, -inf
    %506 = vmax.xlane.f32.xlu0 %v505
    %v507 = vpop.xlane.xlu0 %506
    %v508 = vsub.f32 %v227, %v480
    %v509 = vsub.f32 %v228, %v483
    %v510 = vsub.f32 %v475, %v486
    %v511 = vsub.f32 %v458, %v489
    %v512 = vsub.f32 %v460, %v492
    %v513 = vsub.f32 %v375, %v495
    %v514 = vsub.f32 %v376, %v498
    %v515 = vsub.f32 %v476, %v501
    %v516 = vsub.f32 %v469, %v504
    %v517 = vsub.f32 %v471, %v507
    %v518 = vmul.f32 %v508, 1.442695
    %v519 = vpow.pop %v518
    %v520 = vmul.f32 %v509, 1.442695
    %v521 = vpow.pop %v520
    %v522 = vmul.f32 %v510, 1.442695
    %v523 = vpow.pop %v522
    %v524 = vmul.f32 %v511, 1.442695
    %v525 = vpow.pop %v524
    %v526 = vmul.f32 %v512, 1.442695
    %v527 = vpow.pop %v526
    %v528 = vmul.f32 %v513, 1.442695
    %v529 = vpow.pop %v528
    %v530 = vmul.f32 %v514, 1.442695
    %v531 = vpow.pop %v530
    %v532 = vmul.f32 %v515, 1.442695
    %v533 = vpow.pop %v532
    %v534 = vmul.f32 %v516, 1.442695
    %v535 = vpow.pop %v534
    %v536 = vmul.f32 %v517, 1.442695
    %v537 = vpow.pop %v536
    %v538 = vsel %vm477, %v519, 0.0
    %539 = vadd.xlane.f32.xlu0 %v538
    %v540 = vpop.xlane.xlu0 %539
    %v541 = vsel %vm477, %v521, 0.0
    %542 = vadd.xlane.f32.xlu0 %v541
    %v543 = vpop.xlane.xlu0 %542
    %v544 = vsel %vm477, %v523, 0.0
    %545 = vadd.xlane.f32.xlu0 %v544
    %v546 = vpop.xlane.xlu0 %545
    %v547 = vsel %vm477, %v525, 0.0
    %548 = vadd.xlane.f32.xlu0 %v547
    %v549 = vpop.xlane.xlu0 %548
    %v550 = vsel %vm477, %v527, 0.0
    %551 = vadd.xlane.f32.xlu0 %v550
    %v552 = vpop.xlane.xlu0 %551
    %v553 = vsel %vm477, %v529, 0.0
    %554 = vadd.xlane.f32.xlu0 %v553
    %v555 = vpop.xlane.xlu0 %554
    %v556 = vsel %vm477, %v531, 0.0
    %557 = vadd.xlane.f32.xlu0 %v556
    %v558 = vpop.xlane.xlu0 %557
    %v559 = vsel %vm477, %v533, 0.0
    %560 = vadd.xlane.f32.xlu0 %v559
    %v561 = vpop.xlane.xlu0 %560
    %v562 = vsel %vm477, %v535, 0.0
    %563 = vadd.xlane.f32.xlu0 %v562
    %v564 = vpop.xlane.xlu0 %563
    %v565 = vsel %vm477, %v537, 0.0
    %566 = vadd.xlane.f32.xlu0 %v565
    %v567 = vpop.xlane.xlu0 %566
    %v568 = vrcp.pop %v540
    %v569 = vmul.f32 %v519, %v568
    %v570 = vrcp.pop %v543
    %v571 = vmul.f32 %v521, %v570
    %v572 = vrcp.pop %v546
    %v573 = vmul.f32 %v523, %v572
    %v574 = vrcp.pop %v549
    %v575 = vmul.f32 %v525, %v574
    %v576 = vrcp.pop %v552
    %v577 = vmul.f32 %v527, %v576
    %v578 = vrcp.pop %v555
    %v579 = vmul.f32 %v529, %v578
    %v580 = vrcp.pop %v558
    %v581 = vmul.f32 %v531, %v580
    %v582 = vrcp.pop %v561
    %v583 = vmul.f32 %v533, %v582
    %v584 = vrcp.pop %v564
    %v585 = vmul.f32 %v535, %v584
    %v586 = vrcp.pop %v567
    %v587 = vmul.f32 %v537, %v586
    %v588 = vpack.c.bf16 %v571, %v569
    %v589 = vpack.c.bf16 %v575, %v573
    %v590 = vpack.c.bf16 %v579, %v577
    %v591 = vpack.c.bf16 %v583, %v581
    %v592 = vpack.c.bf16 %v587, %v585
    %593 = vrot.lane.b32.xlu0 %v116, 64
    %v594 = vpop.permute.xlu0 %593
    %595 = vrot.lane.b32.xlu0 %v117, 64
    %v596 = vpop.permute.xlu0 %595
    %v599 = vsel %vm477, %v588, 0
    %v602 = vsel %vm477, %v589, 0
    %vm604 = vcmask 1041408
    %v606 = vsel %vm604, %v596, 0
    %608 = vmatprep.subr.bf16.mxu0 0
    %609 = vmatpush1.bf16.msra.mxu0 %v594
    %610 = vmatprep.subr.bf16.mxu0 0
    %611 = vmatpush1.bf16.msra.mxu0 %v606
    %612 = vmatprep.subr.bf16.mxu0 0
    %613 = vmatpush1.bf16.msra.mxu0 0
    %614 = vmatprep.subr.bf16.mxu0 0
    %615 = vmatpush1.bf16.msra.mxu0 0
    %616 = vmatprep.subr.bf16.mxu0 0
    %617 = vmatpush1.bf16.msra.mxu0 0
    %618 = vmatprep.subr.bf16.mxu0 0
    %619 = vmatpush1.bf16.msra.mxu0 0
    %620 = vmatprep.subr.bf16.mxu0 0
    %621 = vmatpush1.bf16.msra.mxu0 0
    %622 = vmatprep.subr.bf16.mxu0 0
    %623 = vmatpush1.bf16.msra.mxu0 0
    %624 = vmatprep.subr.bf16.mxu0 0
    %625 = vmatpush1.bf16.msra.mxu0 0
    %626 = vmatprep.subr.bf16.mxu0 0
    %627 = vmatpush1.bf16.msra.mxu0 0
    %628 = vmatprep.subr.bf16.mxu0 0
    %629 = vmatpush1.bf16.msra.mxu0 0
    %630 = vmatprep.subr.bf16.mxu0 0
    %631 = vmatpush1.bf16.msra.mxu0 0
    %632 = vmatprep.subr.bf16.mxu0 0
    %633 = vmatpush1.bf16.msra.mxu0 0
    %634 = vmatprep.subr.bf16.mxu0 0
    %635 = vmatpush1.bf16.msra.mxu0 0
    %636 = vmatprep.subr.bf16.mxu0 0
    %637 = vmatpush1.bf16.msra.mxu0 0
    %638 = vmatprep.subr.bf16.mxu0 0
    %639 = vmatpush1.bf16.msra.mxu0 0
    %640 = vmatprep.mubr.bf16.mxu0 0
    %641 = vmatmul.mubr.bf16.gmra.mrb[0].mxu0 %v599
    %v642 = vpop.f32.mrb[0].mxu0
    %v643 = vadd.f32 0.0, %v642
    %v644 = vpop.f32.mrb[0].mxu0
    %v645 = vpop.f32.mrb[0].mxu0
    %v646 = vadd.f32 0.0, %v645
    %v647 = vpop.f32.mrb[0].mxu0
    %648 = vmatprep.mubr.bf16.mxu0 0
    %649 = vmatmul.mubr.bf16.gmra.mrb[0].mxu0 %v602
    %v650 = vpop.f32.mrb[0].mxu0
    %v651 = vadd.f32 0.0, %v650
    %v652 = vpop.f32.mrb[0].mxu0
    %v653 = vpop.f32.mrb[0].mxu0
    %v654 = vpop.f32.mrb[0].mxu0
    %655 = vdwg.mxu0
    %vm658 = vcmask 1045504
    %v659 = vrot.slane %v589, 2
    %v660 = vrot.slane %v590, 2
    %v661 = vsel %vm658, %v659, %v660
    %662 = vrot.lane.b32.xlu0 %v116, 56
    %v663 = vpop.permute.xlu0 %662
    %664 = vrot.lane.b32.xlu0 %v117, 56
    %v665 = vpop.permute.xlu0 %664
    %v668 = vsel %vm477, %v661, 0
    %v671 = vsel %vm477, %v660, 0
    %v674 = vsel %vm604, %v665, 0
    %676 = vmatprep.subr.bf16.mxu0 0
    %677 = vmatpush1.bf16.msra.mxu0 %v663
    %678 = vmatprep.subr.bf16.mxu0 0
    %679 = vmatpush1.bf16.msra.mxu0 %v674
    %680 = vmatprep.subr.bf16.mxu0 0
    %681 = vmatpush1.bf16.msra.mxu0 0
    %682 = vmatprep.subr.bf16.mxu0 0
    %683 = vmatpush1.bf16.msra.mxu0 0
    %684 = vmatprep.subr.bf16.mxu0 0
    %685 = vmatpush1.bf16.msra.mxu0 0
    %686 = vmatprep.subr.bf16.mxu0 0
    %687 = vmatpush1.bf16.msra.mxu0 0
    %688 = vmatprep.subr.bf16.mxu0 0
    %689 = vmatpush1.bf16.msra.mxu0 0
    %690 = vmatprep.subr.bf16.mxu0 0
    %691 = vmatpush1.bf16.msra.mxu0 0
    %692 = vmatprep.subr.bf16.mxu0 0
    %693 = vmatpush1.bf16.msra.mxu0 0
    %694 = vmatprep.subr.bf16.mxu0 0
    %695 = vmatpush1.bf16.msra.mxu0 0
    %696 = vmatprep.subr.bf16.mxu0 0
    %697 = vmatpush1.bf16.msra.mxu0 0
    %698 = vmatprep.subr.bf16.mxu0 0
    %699 = vmatpush1.bf16.msra.mxu0 0
    %700 = vmatprep.subr.bf16.mxu0 0
    %701 = vmatpush1.bf16.msra.mxu0 0
    %702 = vmatprep.subr.bf16.mxu0 0
    %703 = vmatpush1.bf16.msra.mxu0 0
    %704 = vmatprep.subr.bf16.mxu0 0
    %705 = vmatpush1.bf16.msra.mxu0 0
    %706 = vmatprep.subr.bf16.mxu0 0
    %707 = vmatpush1.bf16.msra.mxu0 0
    %708 = vmatprep.mubr.bf16.mxu0 0
    %709 = vmatmul.mubr.bf16.gmra.mrb[0].mxu0 %v668
    %v710 = vpop.f32.mrb[0].mxu0
    %v711 = vadd.f32 0.0, %v710
    %v712 = vpop.f32.mrb[0].mxu0
    %v713 = vpop.f32.mrb[0].mxu0
    %v714 = vadd.f32 0.0, %v713
    %v715 = vpop.f32.mrb[0].mxu0
    %716 = vmatprep.mubr.bf16.mxu0 0
    %717 = vmatmul.mubr.bf16.gmra.mrb[0].mxu0 %v671
    %v718 = vpop.f32.mrb[0].mxu0
    %v719 = vadd.f32 0.0, %v718
    %v720 = vpop.f32.mrb[0].mxu0
    %v721 = vpop.f32.mrb[0].mxu0
    %v722 = vpop.f32.mrb[0].mxu0
    %723 = vdwg.mxu0
    %vm725 = vcmask 1043456
    %v726 = vrot.slane %v590, 4
    %v727 = vrot.slane %v591, 4
    %v728 = vsel %vm725, %v726, %v727
    %729 = vrot.lane.b32.xlu0 %v116, 48
    %v730 = vpop.permute.xlu0 %729
    %731 = vrot.lane.b32.xlu0 %v117, 48
    %v732 = vpop.permute.xlu0 %731
    %v735 = vsel %vm477, %v728, 0
    %v738 = vsel %vm477, %v727, 0
    %v741 = vsel %vm604, %v732, 0
    %743 = vmatprep.subr.bf16.mxu0 0
    %744 = vmatpush1.bf16.msra.mxu0 %v730
    %745 = vmatprep.subr.bf16.mxu0 0
    %746 = vmatpush1.bf16.msra.mxu0 %v741
    %747 = vmatprep.subr.bf16.mxu0 0
    %748 = vmatpush1.bf16.msra.mxu0 0
    %749 = vmatprep.subr.bf16.mxu0 0
    %750 = vmatpush1.bf16.msra.mxu0 0
    %751 = vmatprep.subr.bf16.mxu0 0
    %752 = vmatpush1.bf16.msra.mxu0 0
    %753 = vmatprep.subr.bf16.mxu0 0
    %754 = vmatpush1.bf16.msra.mxu0 0
    %755 = vmatprep.subr.bf16.mxu0 0
    %756 = vmatpush1.bf16.msra.mxu0 0
    %757 = vmatprep.subr.bf16.mxu0 0
    %758 = vmatpush1.bf16.msra.mxu0 0
    %759 = vmatprep.subr.bf16.mxu0 0
    %760 = vmatpush1.bf16.msra.mxu0 0
    %761 = vmatprep.subr.bf16.mxu0 0
    %762 = vmatpush1.bf16.msra.mxu0 0
    %763 = vmatprep.subr.bf16.mxu0 0
    %764 = vmatpush1.bf16.msra.mxu0 0
    %765 = vmatprep.subr.bf16.mxu0 0
    %766 = vmatpush1.bf16.msra.mxu0 0
    %767 = vmatprep.subr.bf16.mxu0 0
    %768 = vmatpush1.bf16.msra.mxu0 0
    %769 = vmatprep.subr.bf16.mxu0 0
    %770 = vmatpush1.bf16.msra.mxu0 0
    %771 = vmatprep.subr.bf16.mxu0 0
    %772 = vmatpush1.bf16.msra.mxu0 0
    %773 = vmatprep.subr.bf16.mxu0 0
    %774 = vmatpush1.bf16.msra.mxu0 0
    %775 = vmatprep.mubr.bf16.mxu0 0
    %776 = vmatmul.mubr.bf16.gmra.mrb[0].mxu0 %v735
    %v777 = vpop.f32.mrb[0].mxu0
    %v778 = vadd.f32 0.0, %v777
    %v779 = vpop.f32.mrb[0].mxu0
    %v780 = vpop.f32.mrb[0].mxu0
    %v781 = vadd.f32 0.0, %v780
    %v782 = vpop.f32.mrb[0].mxu0
    %783 = vmatprep.mubr.bf16.mxu0 0
    %784 = vmatmul.mubr.bf16.gmra.mrb[0].mxu0 %v738
    %v785 = vpop.f32.mrb[0].mxu0
    %v786 = vadd.f32 0.0, %v785
    %v787 = vpop.f32.mrb[0].mxu0
    %v788 = vpop.f32.mrb[0].mxu0
    %v789 = vpop.f32.mrb[0].mxu0
    %790 = vdwg.mxu0
    %vm792 = vcmask 1041408
    %v793 = vrot.slane %v591, 6
    %v794 = vrot.slane %v592, 6
    %v795 = vsel %vm792, %v793, %v794
    %796 = vrot.lane.b32.xlu0 %v116, 40
    %v797 = vpop.permute.xlu0 %796
    %798 = vrot.lane.b32.xlu0 %v117, 40
    %v799 = vpop.permute.xlu0 %798
    %v802 = vsel %vm477, %v795, 0
    %v805 = vsel %vm477, %v794, 0
    %v808 = vsel %vm604, %v799, 0
    %810 = vmatprep.subr.bf16.mxu0 0
    %811 = vmatpush1.bf16.msra.mxu0 %v797
    %812 = vmatprep.subr.bf16.mxu0 0
    %813 = vmatpush1.bf16.msra.mxu0 %v808
    %814 = vmatprep.subr.bf16.mxu0 0
    %815 = vmatpush1.bf16.msra.mxu0 0
    %816 = vmatprep.subr.bf16.mxu0 0
    %817 = vmatpush1.bf16.msra.mxu0 0
    %818 = vmatprep.subr.bf16.mxu0 0
    %819 = vmatpush1.bf16.msra.mxu0 0
    %820 = vmatprep.subr.bf16.mxu0 0
    %821 = vmatpush1.bf16.msra.mxu0 0
    %822 = vmatprep.subr.bf16.mxu0 0
    %823 = vmatpush1.bf16.msra.mxu0 0
    %824 = vmatprep.subr.bf16.mxu0 0
    %825 = vmatpush1.bf16.msra.mxu0 0
    %826 = vmatprep.subr.bf16.mxu0 0
    %827 = vmatpush1.bf16.msra.mxu0 0
    %828 = vmatprep.subr.bf16.mxu0 0
    %829 = vmatpush1.bf16.msra.mxu0 0
    %830 = vmatprep.subr.bf16.mxu0 0
    %831 = vmatpush1.bf16.msra.mxu0 0
    %832 = vmatprep.subr.bf16.mxu0 0
    %833 = vmatpush1.bf16.msra.mxu0 0
    %834 = vmatprep.subr.bf16.mxu0 0
    %835 = vmatpush1.bf16.msra.mxu0 0
    %836 = vmatprep.subr.bf16.mxu0 0
    %837 = vmatpush1.bf16.msra.mxu0 0
    %838 = vmatprep.subr.bf16.mxu0 0
    %839 = vmatpush1.bf16.msra.mxu0 0
    %840 = vmatprep.subr.bf16.mxu0 0
    %841 = vmatpush1.bf16.msra.mxu0 0
    %842 = vmatprep.mubr.bf16.mxu0 0
    %843 = vmatmul.mubr.bf16.gmra.mrb[0].mxu0 %v802
    %v844 = vpop.f32.mrb[0].mxu0
    %v845 = vadd.f32 0.0, %v844
    %v846 = vpop.f32.mrb[0].mxu0
    %v847 = vpop.f32.mrb[0].mxu0
    %v848 = vadd.f32 0.0, %v847
    %v849 = vpop.f32.mrb[0].mxu0
    %850 = vmatprep.mubr.bf16.mxu0 0
    %851 = vmatmul.mubr.bf16.gmra.mrb[0].mxu0 %v805
    %v852 = vpop.f32.mrb[0].mxu0
    %v853 = vadd.f32 0.0, %v852
    %v854 = vpop.f32.mrb[0].mxu0
    %v855 = vpop.f32.mrb[0].mxu0
    %v856 = vpop.f32.mrb[0].mxu0
    %857 = vdwg.mxu0
    %861 = vrot.lane.b32.xlu0 %v711, 8
    %v862 = vpop.permute.xlu0 %861
    %863 = vrot.lane.b32.xlu0 %v714, 8
    %v864 = vpop.permute.xlu0 %863
    %865 = vrot.lane.b32.xlu0 %v719, 8
    %v866 = vpop.permute.xlu0 %865
    %873 = vrot.lane.b32.xlu0 %v778, 16
    %v874 = vpop.permute.xlu0 %873
    %875 = vrot.lane.b32.xlu0 %v781, 16
    %v876 = vpop.permute.xlu0 %875
    %877 = vrot.lane.b32.xlu0 %v786, 16
    %v878 = vpop.permute.xlu0 %877
    %885 = vrot.lane.b32.xlu0 %v845, 24
    %v886 = vpop.permute.xlu0 %885
    %887 = vrot.lane.b32.xlu0 %v848, 24
    %v888 = vpop.permute.xlu0 %887
    %889 = vrot.lane.b32.xlu0 %v853, 24
    %v890 = vpop.permute.xlu0 %889
    %v894 = vsel %vm163, %v643, %v862
    %v895 = vsel %vm163, %v646, %v864
    %v896 = vsel %vm163, %v651, %v866
    %vm897 = vcmask 130048
    %v898 = vsel %vm897, %v894, %v874
    %v899 = vsel %vm897, %v895, %v876
    %v900 = vsel %vm897, %v896, %v878
    %vm901 = vcmask 195584
    %v902 = vsel %vm901, %v898, %v886
    %v903 = vsel %vm901, %v899, %v888
    %v904 = vsel %vm901, %v900, %v890
    %v905 = vld [vmem:[%s2] sm:$0xf]
    %v906 = vld [vmem:[%s2 + $0x4] sm:$0xf]
    %v907 = vld [vmem:[%s2 + $0x8] sm:$0xf]
    %v908 = vld [vmem:[%s2 + $0xc] sm:$0xf]
    %v909 = vpack.c.bf16 %v903, %v902
    %v910 = vpack.c.bf16 %v904, %v904
    %v912 = vlaneseq
    %v913 = vshrl.u32 %v912, 7
    %v914 = vsub.s32 0, %v913
    %v915 = vrot.slane %v26, %v914
    %v921 = vunpack.c.l.b16 %v905
    %v922 = vunpack.c.l.b16 %v906
    %v923 = vunpack.c.l.b16 %v907
    %v924 = vunpack.c.l.b16 %v908
    %v925 = vpack.c.b16 %v922, %v921
    %v926 = vpack.c.b16 %v924, %v923
    %v930 = vsel %vm61, %v909, 0
    %v933 = vsel %vm61, %v910, 0
    %935 = vmatprep.subr.bf16.mxu0 0
    %936 = vmatpush1.bf16.msra.mxu0 %v925
    %937 = vmatprep.subr.bf16.mxu0 0
    %938 = vmatpush1.bf16.msra.mxu0 %v926
    %939 = vmatprep.subr.bf16.mxu0 0
    %940 = vmatpush1.bf16.msra.mxu0 0
    %941 = vmatprep.subr.bf16.mxu0 0
    %942 = vmatpush1.bf16.msra.mxu0 0
    %943 = vmatprep.subr.bf16.mxu0 0
    %944 = vmatpush1.bf16.msra.mxu0 0
    %945 = vmatprep.subr.bf16.mxu0 0
    %946 = vmatpush1.bf16.msra.mxu0 0
    %947 = vmatprep.subr.bf16.mxu0 0
    %948 = vmatpush1.bf16.msra.mxu0 0
    %949 = vmatprep.subr.bf16.mxu0 0
    %950 = vmatpush1.bf16.msra.mxu0 0
    %951 = vmatprep.subr.bf16.mxu0 0
    %952 = vmatpush1.bf16.msra.mxu0 0
    %953 = vmatprep.subr.bf16.mxu0 0
    %954 = vmatpush1.bf16.msra.mxu0 0
    %955 = vmatprep.subr.bf16.mxu0 0
    %956 = vmatpush1.bf16.msra.mxu0 0
    %957 = vmatprep.subr.bf16.mxu0 0
    %958 = vmatpush1.bf16.msra.mxu0 0
    %959 = vmatprep.subr.bf16.mxu0 0
    %960 = vmatpush1.bf16.msra.mxu0 0
    %961 = vmatprep.subr.bf16.mxu0 0
    %962 = vmatpush1.bf16.msra.mxu0 0
    %963 = vmatprep.subr.bf16.mxu0 0
    %964 = vmatpush1.bf16.msra.mxu0 0
    %965 = vmatprep.subr.bf16.mxu0 0
    %966 = vmatpush1.bf16.msra.mxu0 0
    %967 = vmatprep.mubr.bf16.mxu0 0
    %968 = vmatmul.mubr.bf16.gmra.mrb[0].mxu0 %v930
    %v969 = vpop.f32.mrb[0].mxu0
    %v970 = vadd.f32 %v915, %v969
    %v971 = vpop.f32.mrb[0].mxu0
    %v972 = vpop.f32.mrb[0].mxu0
    %v973 = vadd.f32 %v915, %v972
    %v974 = vpop.f32.mrb[0].mxu0
    %975 = vmatprep.mubr.bf16.mxu0 0
    %976 = vmatmul.mubr.bf16.gmra.mrb[0].mxu0 %v933
    %v977 = vpop.f32.mrb[0].mxu0
    %v978 = vadd.f32 %v915, %v977
    %v979 = vpop.f32.mrb[0].mxu0
    %v980 = vpop.f32.mrb[0].mxu0
    %v981 = vpop.f32.mrb[0].mxu0
    %982 = vdwg.mxu0
    %v983 = vadd.f32 %v34, %v970
    %v984 = vadd.f32 %v35, %v973
    %v985 = vadd.f32 %v36, %v978
    %v986 = vsel %vm61, %v983, 0.0
    %987 = vadd.xlane.f32.xlu0 %v986
    %v988 = vpop.xlane.xlu0 %987
    %v989 = vsel %vm61, %v984, 0.0
    %990 = vadd.xlane.f32.xlu0 %v989
    %v991 = vpop.xlane.xlu0 %990
    %vm992 = vcmask 257024
    %v993 = vsel %vm992, %v985, 0.0
    %994 = vadd.xlane.f32.xlu0 %v993
    %v995 = vpop.xlane.xlu0 %994
    %v996 = vrcp.pop 32.0
    %v997 = vmul.f32 %v988, %v996
    %v998 = vmul.f32 %v991, %v996
    %v999 = vmul.f32 %v995, %v996
    %v1000 = vsub.f32 %v983, %v997
    %v1001 = vsub.f32 %v984, %v998
    %v1002 = vsub.f32 %v985, %v999
    %v1003 = vmul.f32 %v1000, %v1000
    %v1004 = vmul.f32 %v1001, %v1001
    %v1005 = vmul.f32 %v1002, %v1002
    %v1006 = vsel %vm61, %v1003, 0.0
    %1007 = vadd.xlane.f32.xlu0 %v1006
    %v1008 = vpop.xlane.xlu0 %1007
    %v1009 = vsel %vm61, %v1004, 0.0
    %1010 = vadd.xlane.f32.xlu0 %v1009
    %v1011 = vpop.xlane.xlu0 %1010
    %v1012 = vsel %vm992, %v1005, 0.0
    %1013 = vadd.xlane.f32.xlu0 %v1012
    %v1014 = vpop.xlane.xlu0 %1013
    %v1015 = vmul.f32 %v1008, %v996
    %v1016 = vmul.f32 %v1011, %v996
    %v1017 = vmul.f32 %v1014, %v996
    %v1018 = vadd.f32 %v1015, 1e-05
    %v1019 = vadd.f32 %v1016, 1e-05
    %v1020 = vadd.f32 %v1017, 1e-05
    %v1021 = vrsqrt.pop %v1018
    %v1022 = vrsqrt.pop %v1019
    %v1023 = vrsqrt.pop %v1020
    %v1024 = vmul.f32 %v1000, %v1021
    %v1025 = vmul.f32 %v1001, %v1022
    %v1026 = vmul.f32 %v1002, %v1023
    %v1028 = vlaneseq
    %v1029 = vshrl.u32 %v1028, 7
    %v1030 = vsub.s32 0, %v1029
    %v1031 = vrot.slane %v27, %v1030
    %v1033 = vmul.f32 %v1024, %v1031
    %v1034 = vmul.f32 %v1025, %v1031
    %v1035 = vmul.f32 %v1026, %v1031
    %v1037 = vlaneseq
    %v1038 = vshrl.u32 %v1037, 7
    %v1039 = vsub.s32 0, %v1038
    %v1040 = vrot.slane %v28, %v1039
    %v1042 = vadd.f32 %v1033, %v1040
    %v1043 = vadd.f32 %v1034, %v1040
    %v1044 = vadd.f32 %v1035, %v1040
    %v1045 = vld [vmem:[%s3] sm:$0xff]
    %v1046 = vld [vmem:[%s3 + $0x8] sm:$0xff]
    %v1047 = vld [vmem:[%s3 + $0x10] sm:$0xff]
    %v1048 = vld [vmem:[%s3 + $0x18] sm:$0xff]
    %v1049 = vld [vmem:[%s3 + $0x20] sm:$0xff]
    %v1050 = vld [vmem:[%s3 + $0x28] sm:$0xff]
    %v1051 = vld [vmem:[%s3 + $0x30] sm:$0xff]
    %v1052 = vld [vmem:[%s3 + $0x38] sm:$0xff]
    %v1053 = vld [vmem:[%s3 + $0x40] sm:$0xff]
    %v1054 = vld [vmem:[%s3 + $0x48] sm:$0xff]
    %v1055 = vld [vmem:[%s3 + $0x50] sm:$0xff]
    %v1056 = vld [vmem:[%s3 + $0x58] sm:$0xff]
    %v1057 = vld [vmem:[%s3 + $0x60] sm:$0xff]
    %v1058 = vld [vmem:[%s3 + $0x68] sm:$0xff]
    %v1059 = vld [vmem:[%s3 + $0x70] sm:$0xff]
    %v1060 = vld [vmem:[%s3 + $0x78] sm:$0xff]
    %v1061 = vld [vmem:[%s3 + $0x80] sm:$0xff]
    %v1062 = vld [vmem:[%s3 + $0x88] sm:$0xff]
    %v1063 = vld [vmem:[%s3 + $0x90] sm:$0xff]
    %v1064 = vld [vmem:[%s3 + $0x98] sm:$0xff]
    %v1065 = vld [vmem:[%s3 + $0xa0] sm:$0xff]
    %v1066 = vld [vmem:[%s3 + $0xa8] sm:$0xff]
    %v1067 = vld [vmem:[%s3 + $0xb0] sm:$0xff]
    %v1068 = vld [vmem:[%s3 + $0xb8] sm:$0xff]
    %v1069 = vld [vmem:[%s3 + $0xc0] sm:$0xff]
    %v1070 = vld [vmem:[%s3 + $0xc8] sm:$0xff]
    %v1071 = vld [vmem:[%s3 + $0xd0] sm:$0xff]
    %v1072 = vld [vmem:[%s3 + $0xd8] sm:$0xff]
    %v1073 = vld [vmem:[%s3 + $0xe0] sm:$0xff]
    %v1074 = vld [vmem:[%s3 + $0xe8] sm:$0xff]
    %v1075 = vld [vmem:[%s3 + $0xf0] sm:$0xff]
    %v1076 = vld [vmem:[%s3 + $0xf8] sm:$0xff]
    %v1077 = vpack.c.bf16 %v1043, %v1042
    %v1078 = vpack.c.bf16 %v1044, %v1044
    %v1081 = vlaneseq
    %v1082 = vshrl.u32 %v1081, 7
    %v1083 = vsub.s32 0, %v1082
    %v1084 = vrot.slane %v29, %v1083
    %v1085 = vlaneseq
    %v1086 = vshrl.u32 %v1085, 7
    %v1087 = vsub.s32 1, %v1086
    %v1088 = vrot.slane %v29, %v1087
    %v1089 = vlaneseq
    %v1090 = vshrl.u32 %v1089, 7
    %v1091 = vsub.s32 2, %v1090
    %v1092 = vrot.slane %v29, %v1091
    %v1093 = vlaneseq
    %v1094 = vshrl.u32 %v1093, 7
    %v1095 = vsub.s32 3, %v1094
    %v1096 = vrot.slane %v29, %v1095
    %v1097 = vlaneseq
    %v1098 = vshrl.u32 %v1097, 7
    %v1099 = vsub.s32 4, %v1098
    %v1100 = vrot.slane %v29, %v1099
    %v1101 = vlaneseq
    %v1102 = vshrl.u32 %v1101, 7
    %v1103 = vsub.s32 5, %v1102
    %v1104 = vrot.slane %v29, %v1103
    %v1105 = vlaneseq
    %v1106 = vshrl.u32 %v1105, 7
    %v1107 = vsub.s32 6, %v1106
    %v1108 = vrot.slane %v29, %v1107
    %v1109 = vlaneseq
    %v1110 = vshrl.u32 %v1109, 7
    %v1111 = vsub.s32 7, %v1110
    %v1112 = vrot.slane %v29, %v1111
    %v1113 = vlaneseq
    %v1114 = vshrl.u32 %v1113, 7
    %v1115 = vsub.s32 0, %v1114
    %v1116 = vrot.slane %v30, %v1115
    %v1117 = vlaneseq
    %v1118 = vshrl.u32 %v1117, 7
    %v1119 = vsub.s32 1, %v1118
    %v1120 = vrot.slane %v30, %v1119
    %v1121 = vlaneseq
    %v1122 = vshrl.u32 %v1121, 7
    %v1123 = vsub.s32 2, %v1122
    %v1124 = vrot.slane %v30, %v1123
    %v1125 = vlaneseq
    %v1126 = vshrl.u32 %v1125, 7
    %v1127 = vsub.s32 3, %v1126
    %v1128 = vrot.slane %v30, %v1127
    %v1129 = vlaneseq
    %v1130 = vshrl.u32 %v1129, 7
    %v1131 = vsub.s32 4, %v1130
    %v1132 = vrot.slane %v30, %v1131
    %v1133 = vlaneseq
    %v1134 = vshrl.u32 %v1133, 7
    %v1135 = vsub.s32 5, %v1134
    %v1136 = vrot.slane %v30, %v1135
    %v1137 = vlaneseq
    %v1138 = vshrl.u32 %v1137, 7
    %v1139 = vsub.s32 6, %v1138
    %v1140 = vrot.slane %v30, %v1139
    %v1141 = vlaneseq
    %v1142 = vshrl.u32 %v1141, 7
    %v1143 = vsub.s32 7, %v1142
    %v1144 = vrot.slane %v30, %v1143
    %v1193 = vunpack.c.l.b16 %v1045
    %v1194 = vunpack.c.h.b16 %v1045
    %v1195 = vunpack.c.l.b16 %v1046
    %v1196 = vunpack.c.h.b16 %v1046
    %v1197 = vunpack.c.l.b16 %v1047
    %v1198 = vunpack.c.h.b16 %v1047
    %v1199 = vunpack.c.l.b16 %v1048
    %v1200 = vunpack.c.h.b16 %v1048
    %v1201 = vunpack.c.l.b16 %v1049
    %v1202 = vunpack.c.h.b16 %v1049
    %v1203 = vunpack.c.l.b16 %v1050
    %v1204 = vunpack.c.h.b16 %v1050
    %v1205 = vunpack.c.l.b16 %v1051
    %v1206 = vunpack.c.h.b16 %v1051
    %v1207 = vunpack.c.l.b16 %v1052
    %v1208 = vunpack.c.h.b16 %v1052
    %v1209 = vunpack.c.l.b16 %v1053
    %v1210 = vunpack.c.h.b16 %v1053
    %v1211 = vunpack.c.l.b16 %v1054
    %v1212 = vunpack.c.h.b16 %v1054
    %v1213 = vunpack.c.l.b16 %v1055
    %v1214 = vunpack.c.h.b16 %v1055
    %v1215 = vunpack.c.l.b16 %v1056
    %v1216 = vunpack.c.h.b16 %v1056
    %v1217 = vunpack.c.l.b16 %v1057
    %v1218 = vunpack.c.h.b16 %v1057
    %v1219 = vunpack.c.l.b16 %v1058
    %v1220 = vunpack.c.h.b16 %v1058
    %v1221 = vunpack.c.l.b16 %v1059
    %v1222 = vunpack.c.h.b16 %v1059
    %v1223 = vunpack.c.l.b16 %v1060
    %v1224 = vunpack.c.h.b16 %v1060
    %v1225 = vunpack.c.l.b16 %v1061
    %v1226 = vunpack.c.h.b16 %v1061
    %v1227 = vunpack.c.l.b16 %v1062
    %v1228 = vunpack.c.h.b16 %v1062
    %v1229 = vunpack.c.l.b16 %v1063
    %v1230 = vunpack.c.h.b16 %v1063
    %v1231 = vunpack.c.l.b16 %v1064
    %v1232 = vunpack.c.h.b16 %v1064
    %v1233 = vunpack.c.l.b16 %v1065
    %v1234 = vunpack.c.h.b16 %v1065
    %v1235 = vunpack.c.l.b16 %v1066
    %v1236 = vunpack.c.h.b16 %v1066
    %v1237 = vunpack.c.l.b16 %v1067
    %v1238 = vunpack.c.h.b16 %v1067
    %v1239 = vunpack.c.l.b16 %v1068
    %v1240 = vunpack.c.h.b16 %v1068
    %v1241 = vunpack.c.l.b16 %v1069
    %v1242 = vunpack.c.h.b16 %v1069
    %v1243 = vunpack.c.l.b16 %v1070
    %v1244 = vunpack.c.h.b16 %v1070
    %v1245 = vunpack.c.l.b16 %v1071
    %v1246 = vunpack.c.h.b16 %v1071
    %v1247 = vunpack.c.l.b16 %v1072
    %v1248 = vunpack.c.h.b16 %v1072
    %v1249 = vunpack.c.l.b16 %v1073
    %v1250 = vunpack.c.h.b16 %v1073
    %v1251 = vunpack.c.l.b16 %v1074
    %v1252 = vunpack.c.h.b16 %v1074
    %v1253 = vunpack.c.l.b16 %v1075
    %v1254 = vunpack.c.h.b16 %v1075
    %v1255 = vunpack.c.l.b16 %v1076
    %v1256 = vunpack.c.h.b16 %v1076
    %v1257 = vpack.c.b16 %v1209, %v1193
    %v1258 = vpack.c.b16 %v1210, %v1194
    %v1259 = vpack.c.b16 %v1211, %v1195
    %v1260 = vpack.c.b16 %v1212, %v1196
    %v1261 = vpack.c.b16 %v1213, %v1197
    %v1262 = vpack.c.b16 %v1214, %v1198
    %v1263 = vpack.c.b16 %v1215, %v1199
    %v1264 = vpack.c.b16 %v1216, %v1200
    %v1265 = vpack.c.b16 %v1217, %v1201
    %v1266 = vpack.c.b16 %v1218, %v1202
    %v1267 = vpack.c.b16 %v1219, %v1203
    %v1268 = vpack.c.b16 %v1220, %v1204
    %v1269 = vpack.c.b16 %v1221, %v1205
    %v1270 = vpack.c.b16 %v1222, %v1206
    %v1271 = vpack.c.b16 %v1223, %v1207
    %v1272 = vpack.c.b16 %v1224, %v1208
    %v1273 = vpack.c.b16 %v1241, %v1225
    %v1274 = vpack.c.b16 %v1242, %v1226
    %v1275 = vpack.c.b16 %v1243, %v1227
    %v1276 = vpack.c.b16 %v1244, %v1228
    %v1277 = vpack.c.b16 %v1245, %v1229
    %v1278 = vpack.c.b16 %v1246, %v1230
    %v1279 = vpack.c.b16 %v1247, %v1231
    %v1280 = vpack.c.b16 %v1248, %v1232
    %v1281 = vpack.c.b16 %v1249, %v1233
    %v1282 = vpack.c.b16 %v1250, %v1234
    %v1283 = vpack.c.b16 %v1251, %v1235
    %v1284 = vpack.c.b16 %v1252, %v1236
    %v1285 = vpack.c.b16 %v1253, %v1237
    %v1286 = vpack.c.b16 %v1254, %v1238
    %v1287 = vpack.c.b16 %v1255, %v1239
    %v1288 = vpack.c.b16 %v1256, %v1240
    %v1322 = vsel %vm61, %v1077, 0
    %v1325 = vsel %vm61, %v1078, 0
    %1327 = vmatprep.subr.bf16.mxu0 %v1258
    %1328 = vmatpush1.bf16.msra.mxu0 %v1257
    %1329 = vmatprep.subr.bf16.mxu0 %v1274
    %1330 = vmatpush1.bf16.msra.mxu0 %v1273
    %1331 = vmatprep.subr.bf16.mxu0 0
    %1332 = vmatpush1.bf16.msra.mxu0 0
    %1333 = vmatprep.subr.bf16.mxu0 0
    %1334 = vmatpush1.bf16.msra.mxu0 0
    %1335 = vmatprep.subr.bf16.mxu0 0
    %1336 = vmatpush1.bf16.msra.mxu0 0
    %1337 = vmatprep.subr.bf16.mxu0 0
    %1338 = vmatpush1.bf16.msra.mxu0 0
    %1339 = vmatprep.subr.bf16.mxu0 0
    %1340 = vmatpush1.bf16.msra.mxu0 0
    %1341 = vmatprep.subr.bf16.mxu0 0
    %1342 = vmatpush1.bf16.msra.mxu0 0
    %1343 = vmatprep.subr.bf16.mxu0 0
    %1344 = vmatpush1.bf16.msra.mxu0 0
    %1345 = vmatprep.subr.bf16.mxu0 0
    %1346 = vmatpush1.bf16.msra.mxu0 0
    %1347 = vmatprep.subr.bf16.mxu0 0
    %1348 = vmatpush1.bf16.msra.mxu0 0
    %1349 = vmatprep.subr.bf16.mxu0 0
    %1350 = vmatpush1.bf16.msra.mxu0 0
    %1351 = vmatprep.subr.bf16.mxu0 0
    %1352 = vmatpush1.bf16.msra.mxu0 0
    %1353 = vmatprep.subr.bf16.mxu0 0
    %1354 = vmatpush1.bf16.msra.mxu0 0
    %1355 = vmatprep.subr.bf16.mxu0 0
    %1356 = vmatpush1.bf16.msra.mxu0 0
    %1357 = vmatprep.subr.bf16.mxu0 0
    %1358 = vmatpush1.bf16.msra.mxu0 0
    %1359 = vmatprep.mubr.bf16.mxu0 0
    %1360 = vmatmul.mubr.bf16.gmra.mrb[0].mxu0 %v1322
    %v1361 = vpop.f32.mrb[0].mxu0
    %v1362 = vadd.f32 %v1084, %v1361
    %v1363 = vpop.f32.mrb[0].mxu0
    %v1364 = vadd.f32 %v1088, %v1363
    %v1365 = vpop.f32.mrb[0].mxu0
    %v1366 = vadd.f32 %v1084, %v1365
    %v1367 = vpop.f32.mrb[0].mxu0
    %v1368 = vadd.f32 %v1088, %v1367
    %1369 = vmatprep.mubr.bf16.mxu0 0
    %1370 = vmatmul.mubr.bf16.gmra.mrb[0].mxu0 %v1325
    %v1371 = vpop.f32.mrb[0].mxu0
    %v1372 = vadd.f32 %v1084, %v1371
    %v1373 = vpop.f32.mrb[0].mxu0
    %v1374 = vadd.f32 %v1088, %v1373
    %v1375 = vpop.f32.mrb[0].mxu0
    %v1376 = vpop.f32.mrb[0].mxu0
    %1377 = vdwg.mxu0
    %1378 = vmatprep.subr.bf16.mxu0 %v1260
    %1379 = vmatpush1.bf16.msra.mxu0 %v1259
    %1380 = vmatprep.subr.bf16.mxu0 %v1276
    %1381 = vmatpush1.bf16.msra.mxu0 %v1275
    %1382 = vmatprep.subr.bf16.mxu0 0
    %1383 = vmatpush1.bf16.msra.mxu0 0
    %1384 = vmatprep.subr.bf16.mxu0 0
    %1385 = vmatpush1.bf16.msra.mxu0 0
    %1386 = vmatprep.subr.bf16.mxu0 0
    %1387 = vmatpush1.bf16.msra.mxu0 0
    %1388 = vmatprep.subr.bf16.mxu0 0
    %1389 = vmatpush1.bf16.msra.mxu0 0
    %1390 = vmatprep.subr.bf16.mxu0 0
    %1391 = vmatpush1.bf16.msra.mxu0 0
    %1392 = vmatprep.subr.bf16.mxu0 0
    %1393 = vmatpush1.bf16.msra.mxu0 0
    %1394 = vmatprep.subr.bf16.mxu0 0
    %1395 = vmatpush1.bf16.msra.mxu0 0
    %1396 = vmatprep.subr.bf16.mxu0 0
    %1397 = vmatpush1.bf16.msra.mxu0 0
    %1398 = vmatprep.subr.bf16.mxu0 0
    %1399 = vmatpush1.bf16.msra.mxu0 0
    %1400 = vmatprep.subr.bf16.mxu0 0
    %1401 = vmatpush1.bf16.msra.mxu0 0
    %1402 = vmatprep.subr.bf16.mxu0 0
    %1403 = vmatpush1.bf16.msra.mxu0 0
    %1404 = vmatprep.subr.bf16.mxu0 0
    %1405 = vmatpush1.bf16.msra.mxu0 0
    %1406 = vmatprep.subr.bf16.mxu0 0
    %1407 = vmatpush1.bf16.msra.mxu0 0
    %1408 = vmatprep.subr.bf16.mxu0 0
    %1409 = vmatpush1.bf16.msra.mxu0 0
    %1410 = vmatprep.mubr.bf16.mxu0 0
    %1411 = vmatmul.mubr.bf16.gmra.mrb[0].mxu0 %v1322
    %v1412 = vpop.f32.mrb[0].mxu0
    %v1413 = vadd.f32 %v1092, %v1412
    %v1414 = vpop.f32.mrb[0].mxu0
    %v1415 = vadd.f32 %v1096, %v1414
    %v1416 = vpop.f32.mrb[0].mxu0
    %v1417 = vadd.f32 %v1092, %v1416
    %v1418 = vpop.f32.mrb[0].mxu0
    %v1419 = vadd.f32 %v1096, %v1418
    %1420 = vmatprep.mubr.bf16.mxu0 0
    %1421 = vmatmul.mubr.bf16.gmra.mrb[0].mxu0 %v1325
    %v1422 = vpop.f32.mrb[0].mxu0
    %v1423 = vadd.f32 %v1092, %v1422
    %v1424 = vpop.f32.mrb[0].mxu0
    %v1425 = vadd.f32 %v1096, %v1424
    %v1426 = vpop.f32.mrb[0].mxu0
    %v1427 = vpop.f32.mrb[0].mxu0
    %1428 = vdwg.mxu0
    %1429 = vmatprep.subr.bf16.mxu0 %v1262
    %1430 = vmatpush1.bf16.msra.mxu0 %v1261
    %1431 = vmatprep.subr.bf16.mxu0 %v1278
    %1432 = vmatpush1.bf16.msra.mxu0 %v1277
    %1433 = vmatprep.subr.bf16.mxu0 0
    %1434 = vmatpush1.bf16.msra.mxu0 0
    %1435 = vmatprep.subr.bf16.mxu0 0
    %1436 = vmatpush1.bf16.msra.mxu0 0
    %1437 = vmatprep.subr.bf16.mxu0 0
    %1438 = vmatpush1.bf16.msra.mxu0 0
    %1439 = vmatprep.subr.bf16.mxu0 0
    %1440 = vmatpush1.bf16.msra.mxu0 0
    %1441 = vmatprep.subr.bf16.mxu0 0
    %1442 = vmatpush1.bf16.msra.mxu0 0
    %1443 = vmatprep.subr.bf16.mxu0 0
    %1444 = vmatpush1.bf16.msra.mxu0 0
    %1445 = vmatprep.subr.bf16.mxu0 0
    %1446 = vmatpush1.bf16.msra.mxu0 0
    %1447 = vmatprep.subr.bf16.mxu0 0
    %1448 = vmatpush1.bf16.msra.mxu0 0
    %1449 = vmatprep.subr.bf16.mxu0 0
    %1450 = vmatpush1.bf16.msra.mxu0 0
    %1451 = vmatprep.subr.bf16.mxu0 0
    %1452 = vmatpush1.bf16.msra.mxu0 0
    %1453 = vmatprep.subr.bf16.mxu0 0
    %1454 = vmatpush1.bf16.msra.mxu0 0
    %1455 = vmatprep.subr.bf16.mxu0 0
    %1456 = vmatpush1.bf16.msra.mxu0 0
    %1457 = vmatprep.subr.bf16.mxu0 0
    %1458 = vmatpush1.bf16.msra.mxu0 0
    %1459 = vmatprep.subr.bf16.mxu0 0
    %1460 = vmatpush1.bf16.msra.mxu0 0
    %1461 = vmatprep.mubr.bf16.mxu0 0
    %1462 = vmatmul.mubr.bf16.gmra.mrb[0].mxu0 %v1322
    %v1463 = vpop.f32.mrb[0].mxu0
    %v1464 = vadd.f32 %v1100, %v1463
    %v1465 = vpop.f32.mrb[0].mxu0
    %v1466 = vadd.f32 %v1104, %v1465
    %v1467 = vpop.f32.mrb[0].mxu0
    %v1468 = vadd.f32 %v1100, %v1467
    %v1469 = vpop.f32.mrb[0].mxu0
    %v1470 = vadd.f32 %v1104, %v1469
    %1471 = vmatprep.mubr.bf16.mxu0 0
    %1472 = vmatmul.mubr.bf16.gmra.mrb[0].mxu0 %v1325
    %v1473 = vpop.f32.mrb[0].mxu0
    %v1474 = vadd.f32 %v1100, %v1473
    %v1475 = vpop.f32.mrb[0].mxu0
    %v1476 = vadd.f32 %v1104, %v1475
    %v1477 = vpop.f32.mrb[0].mxu0
    %v1478 = vpop.f32.mrb[0].mxu0
    %1479 = vdwg.mxu0
    %1480 = vmatprep.subr.bf16.mxu0 %v1264
    %1481 = vmatpush1.bf16.msra.mxu0 %v1263
    %1482 = vmatprep.subr.bf16.mxu0 %v1280
    %1483 = vmatpush1.bf16.msra.mxu0 %v1279
    %1484 = vmatprep.subr.bf16.mxu0 0
    %1485 = vmatpush1.bf16.msra.mxu0 0
    %1486 = vmatprep.subr.bf16.mxu0 0
    %1487 = vmatpush1.bf16.msra.mxu0 0
    %1488 = vmatprep.subr.bf16.mxu0 0
    %1489 = vmatpush1.bf16.msra.mxu0 0
    %1490 = vmatprep.subr.bf16.mxu0 0
    %1491 = vmatpush1.bf16.msra.mxu0 0
    %1492 = vmatprep.subr.bf16.mxu0 0
    %1493 = vmatpush1.bf16.msra.mxu0 0
    %1494 = vmatprep.subr.bf16.mxu0 0
    %1495 = vmatpush1.bf16.msra.mxu0 0
    %1496 = vmatprep.subr.bf16.mxu0 0
    %1497 = vmatpush1.bf16.msra.mxu0 0
    %1498 = vmatprep.subr.bf16.mxu0 0
    %1499 = vmatpush1.bf16.msra.mxu0 0
    %1500 = vmatprep.subr.bf16.mxu0 0
    %1501 = vmatpush1.bf16.msra.mxu0 0
    %1502 = vmatprep.subr.bf16.mxu0 0
    %1503 = vmatpush1.bf16.msra.mxu0 0
    %1504 = vmatprep.subr.bf16.mxu0 0
    %1505 = vmatpush1.bf16.msra.mxu0 0
    %1506 = vmatprep.subr.bf16.mxu0 0
    %1507 = vmatpush1.bf16.msra.mxu0 0
    %1508 = vmatprep.subr.bf16.mxu0 0
    %1509 = vmatpush1.bf16.msra.mxu0 0
    %1510 = vmatprep.subr.bf16.mxu0 0
    %1511 = vmatpush1.bf16.msra.mxu0 0
    %1512 = vmatprep.mubr.bf16.mxu0 0
    %1513 = vmatmul.mubr.bf16.gmra.mrb[0].mxu0 %v1322
    %v1514 = vpop.f32.mrb[0].mxu0
    %v1515 = vadd.f32 %v1108, %v1514
    %v1516 = vpop.f32.mrb[0].mxu0
    %v1517 = vadd.f32 %v1112, %v1516
    %v1518 = vpop.f32.mrb[0].mxu0
    %v1519 = vadd.f32 %v1108, %v1518
    %v1520 = vpop.f32.mrb[0].mxu0
    %v1521 = vadd.f32 %v1112, %v1520
    %1522 = vmatprep.mubr.bf16.mxu0 0
    %1523 = vmatmul.mubr.bf16.gmra.mrb[0].mxu0 %v1325
    %v1524 = vpop.f32.mrb[0].mxu0
    %v1525 = vadd.f32 %v1108, %v1524
    %v1526 = vpop.f32.mrb[0].mxu0
    %v1527 = vadd.f32 %v1112, %v1526
    %v1528 = vpop.f32.mrb[0].mxu0
    %v1529 = vpop.f32.mrb[0].mxu0
    %1530 = vdwg.mxu0
    %1531 = vmatprep.subr.bf16.mxu0 %v1266
    %1532 = vmatpush1.bf16.msra.mxu0 %v1265
    %1533 = vmatprep.subr.bf16.mxu0 %v1282
    %1534 = vmatpush1.bf16.msra.mxu0 %v1281
    %1535 = vmatprep.subr.bf16.mxu0 0
    %1536 = vmatpush1.bf16.msra.mxu0 0
    %1537 = vmatprep.subr.bf16.mxu0 0
    %1538 = vmatpush1.bf16.msra.mxu0 0
    %1539 = vmatprep.subr.bf16.mxu0 0
    %1540 = vmatpush1.bf16.msra.mxu0 0
    %1541 = vmatprep.subr.bf16.mxu0 0
    %1542 = vmatpush1.bf16.msra.mxu0 0
    %1543 = vmatprep.subr.bf16.mxu0 0
    %1544 = vmatpush1.bf16.msra.mxu0 0
    %1545 = vmatprep.subr.bf16.mxu0 0
    %1546 = vmatpush1.bf16.msra.mxu0 0
    %1547 = vmatprep.subr.bf16.mxu0 0
    %1548 = vmatpush1.bf16.msra.mxu0 0
    %1549 = vmatprep.subr.bf16.mxu0 0
    %1550 = vmatpush1.bf16.msra.mxu0 0
    %1551 = vmatprep.subr.bf16.mxu0 0
    %1552 = vmatpush1.bf16.msra.mxu0 0
    %1553 = vmatprep.subr.bf16.mxu0 0
    %1554 = vmatpush1.bf16.msra.mxu0 0
    %1555 = vmatprep.subr.bf16.mxu0 0
    %1556 = vmatpush1.bf16.msra.mxu0 0
    %1557 = vmatprep.subr.bf16.mxu0 0
    %1558 = vmatpush1.bf16.msra.mxu0 0
    %1559 = vmatprep.subr.bf16.mxu0 0
    %1560 = vmatpush1.bf16.msra.mxu0 0
    %1561 = vmatprep.subr.bf16.mxu0 0
    %1562 = vmatpush1.bf16.msra.mxu0 0
    %1563 = vmatprep.mubr.bf16.mxu0 0
    %1564 = vmatmul.mubr.bf16.gmra.mrb[0].mxu0 %v1322
    %v1565 = vpop.f32.mrb[0].mxu0
    %v1566 = vadd.f32 %v1116, %v1565
    %v1567 = vpop.f32.mrb[0].mxu0
    %v1568 = vadd.f32 %v1120, %v1567
    %v1569 = vpop.f32.mrb[0].mxu0
    %v1570 = vadd.f32 %v1116, %v1569
    %v1571 = vpop.f32.mrb[0].mxu0
    %v1572 = vadd.f32 %v1120, %v1571
    %1573 = vmatprep.mubr.bf16.mxu0 0
    %1574 = vmatmul.mubr.bf16.gmra.mrb[0].mxu0 %v1325
    %v1575 = vpop.f32.mrb[0].mxu0
    %v1576 = vadd.f32 %v1116, %v1575
    %v1577 = vpop.f32.mrb[0].mxu0
    %v1578 = vadd.f32 %v1120, %v1577
    %v1579 = vpop.f32.mrb[0].mxu0
    %v1580 = vpop.f32.mrb[0].mxu0
    %1581 = vdwg.mxu0
    %1582 = vmatprep.subr.bf16.mxu0 %v1268
    %1583 = vmatpush1.bf16.msra.mxu0 %v1267
    %1584 = vmatprep.subr.bf16.mxu0 %v1284
    %1585 = vmatpush1.bf16.msra.mxu0 %v1283
    %1586 = vmatprep.subr.bf16.mxu0 0
    %1587 = vmatpush1.bf16.msra.mxu0 0
    %1588 = vmatprep.subr.bf16.mxu0 0
    %1589 = vmatpush1.bf16.msra.mxu0 0
    %1590 = vmatprep.subr.bf16.mxu0 0
    %1591 = vmatpush1.bf16.msra.mxu0 0
    %1592 = vmatprep.subr.bf16.mxu0 0
    %1593 = vmatpush1.bf16.msra.mxu0 0
    %1594 = vmatprep.subr.bf16.mxu0 0
    %1595 = vmatpush1.bf16.msra.mxu0 0
    %1596 = vmatprep.subr.bf16.mxu0 0
    %1597 = vmatpush1.bf16.msra.mxu0 0
    %1598 = vmatprep.subr.bf16.mxu0 0
    %1599 = vmatpush1.bf16.msra.mxu0 0
    %1600 = vmatprep.subr.bf16.mxu0 0
    %1601 = vmatpush1.bf16.msra.mxu0 0
    %1602 = vmatprep.subr.bf16.mxu0 0
    %1603 = vmatpush1.bf16.msra.mxu0 0
    %1604 = vmatprep.subr.bf16.mxu0 0
    %1605 = vmatpush1.bf16.msra.mxu0 0
    %1606 = vmatprep.subr.bf16.mxu0 0
    %1607 = vmatpush1.bf16.msra.mxu0 0
    %1608 = vmatprep.subr.bf16.mxu0 0
    %1609 = vmatpush1.bf16.msra.mxu0 0
    %1610 = vmatprep.subr.bf16.mxu0 0
    %1611 = vmatpush1.bf16.msra.mxu0 0
    %1612 = vmatprep.subr.bf16.mxu0 0
    %1613 = vmatpush1.bf16.msra.mxu0 0
    %1614 = vmatprep.mubr.bf16.mxu0 0
    %1615 = vmatmul.mubr.bf16.gmra.mrb[0].mxu0 %v1322
    %v1616 = vpop.f32.mrb[0].mxu0
    %v1617 = vadd.f32 %v1124, %v1616
    %v1618 = vpop.f32.mrb[0].mxu0
    %v1619 = vadd.f32 %v1128, %v1618
    %v1620 = vpop.f32.mrb[0].mxu0
    %v1621 = vadd.f32 %v1124, %v1620
    %v1622 = vpop.f32.mrb[0].mxu0
    %v1623 = vadd.f32 %v1128, %v1622
    %1624 = vmatprep.mubr.bf16.mxu0 0
    %1625 = vmatmul.mubr.bf16.gmra.mrb[0].mxu0 %v1325
    %v1626 = vpop.f32.mrb[0].mxu0
    %v1627 = vadd.f32 %v1124, %v1626
    %v1628 = vpop.f32.mrb[0].mxu0
    %v1629 = vadd.f32 %v1128, %v1628
    %v1630 = vpop.f32.mrb[0].mxu0
    %v1631 = vpop.f32.mrb[0].mxu0
    %1632 = vdwg.mxu0
    %1633 = vmatprep.subr.bf16.mxu0 %v1270
    %1634 = vmatpush1.bf16.msra.mxu0 %v1269
    %1635 = vmatprep.subr.bf16.mxu0 %v1286
    %1636 = vmatpush1.bf16.msra.mxu0 %v1285
    %1637 = vmatprep.subr.bf16.mxu0 0
    %1638 = vmatpush1.bf16.msra.mxu0 0
    %1639 = vmatprep.subr.bf16.mxu0 0
    %1640 = vmatpush1.bf16.msra.mxu0 0
    %1641 = vmatprep.subr.bf16.mxu0 0
    %1642 = vmatpush1.bf16.msra.mxu0 0
    %1643 = vmatprep.subr.bf16.mxu0 0
    %1644 = vmatpush1.bf16.msra.mxu0 0
    %1645 = vmatprep.subr.bf16.mxu0 0
    %1646 = vmatpush1.bf16.msra.mxu0 0
    %1647 = vmatprep.subr.bf16.mxu0 0
    %1648 = vmatpush1.bf16.msra.mxu0 0
    %1649 = vmatprep.subr.bf16.mxu0 0
    %1650 = vmatpush1.bf16.msra.mxu0 0
    %1651 = vmatprep.subr.bf16.mxu0 0
    %1652 = vmatpush1.bf16.msra.mxu0 0
    %1653 = vmatprep.subr.bf16.mxu0 0
    %1654 = vmatpush1.bf16.msra.mxu0 0
    %1655 = vmatprep.subr.bf16.mxu0 0
    %1656 = vmatpush1.bf16.msra.mxu0 0
    %1657 = vmatprep.subr.bf16.mxu0 0
    %1658 = vmatpush1.bf16.msra.mxu0 0
    %1659 = vmatprep.subr.bf16.mxu0 0
    %1660 = vmatpush1.bf16.msra.mxu0 0
    %1661 = vmatprep.subr.bf16.mxu0 0
    %1662 = vmatpush1.bf16.msra.mxu0 0
    %1663 = vmatprep.subr.bf16.mxu0 0
    %1664 = vmatpush1.bf16.msra.mxu0 0
    %1665 = vmatprep.mubr.bf16.mxu0 0
    %1666 = vmatmul.mubr.bf16.gmra.mrb[0].mxu0 %v1322
    %v1667 = vpop.f32.mrb[0].mxu0
    %v1668 = vadd.f32 %v1132, %v1667
    %v1669 = vpop.f32.mrb[0].mxu0
    %v1670 = vadd.f32 %v1136, %v1669
    %v1671 = vpop.f32.mrb[0].mxu0
    %v1672 = vadd.f32 %v1132, %v1671
    %v1673 = vpop.f32.mrb[0].mxu0
    %v1674 = vadd.f32 %v1136, %v1673
    %1675 = vmatprep.mubr.bf16.mxu0 0
    %1676 = vmatmul.mubr.bf16.gmra.mrb[0].mxu0 %v1325
    %v1677 = vpop.f32.mrb[0].mxu0
    %v1678 = vadd.f32 %v1132, %v1677
    %v1679 = vpop.f32.mrb[0].mxu0
    %v1680 = vadd.f32 %v1136, %v1679
    %v1681 = vpop.f32.mrb[0].mxu0
    %v1682 = vpop.f32.mrb[0].mxu0
    %1683 = vdwg.mxu0
    %1684 = vmatprep.subr.bf16.mxu0 %v1272
    %1685 = vmatpush1.bf16.msra.mxu0 %v1271
    %1686 = vmatprep.subr.bf16.mxu0 %v1288
    %1687 = vmatpush1.bf16.msra.mxu0 %v1287
    %1688 = vmatprep.subr.bf16.mxu0 0
    %1689 = vmatpush1.bf16.msra.mxu0 0
    %1690 = vmatprep.subr.bf16.mxu0 0
    %1691 = vmatpush1.bf16.msra.mxu0 0
    %1692 = vmatprep.subr.bf16.mxu0 0
    %1693 = vmatpush1.bf16.msra.mxu0 0
    %1694 = vmatprep.subr.bf16.mxu0 0
    %1695 = vmatpush1.bf16.msra.mxu0 0
    %1696 = vmatprep.subr.bf16.mxu0 0
    %1697 = vmatpush1.bf16.msra.mxu0 0
    %1698 = vmatprep.subr.bf16.mxu0 0
    %1699 = vmatpush1.bf16.msra.mxu0 0
    %1700 = vmatprep.subr.bf16.mxu0 0
    %1701 = vmatpush1.bf16.msra.mxu0 0
    %1702 = vmatprep.subr.bf16.mxu0 0
    %1703 = vmatpush1.bf16.msra.mxu0 0
    %1704 = vmatprep.subr.bf16.mxu0 0
    %1705 = vmatpush1.bf16.msra.mxu0 0
    %1706 = vmatprep.subr.bf16.mxu0 0
    %1707 = vmatpush1.bf16.msra.mxu0 0
    %1708 = vmatprep.subr.bf16.mxu0 0
    %1709 = vmatpush1.bf16.msra.mxu0 0
    %1710 = vmatprep.subr.bf16.mxu0 0
    %1711 = vmatpush1.bf16.msra.mxu0 0
    %1712 = vmatprep.subr.bf16.mxu0 0
    %1713 = vmatpush1.bf16.msra.mxu0 0
    %1714 = vmatprep.subr.bf16.mxu0 0
    %1715 = vmatpush1.bf16.msra.mxu0 0
    %1716 = vmatprep.mubr.bf16.mxu0 0
    %1717 = vmatmul.mubr.bf16.gmra.mrb[0].mxu0 %v1322
    %v1718 = vpop.f32.mrb[0].mxu0
    %v1719 = vadd.f32 %v1140, %v1718
    %v1720 = vpop.f32.mrb[0].mxu0
    %v1721 = vadd.f32 %v1144, %v1720
    %v1722 = vpop.f32.mrb[0].mxu0
    %v1723 = vadd.f32 %v1140, %v1722
    %v1724 = vpop.f32.mrb[0].mxu0
    %v1725 = vadd.f32 %v1144, %v1724
    %1726 = vmatprep.mubr.bf16.mxu0 0
    %1727 = vmatmul.mubr.bf16.gmra.mrb[0].mxu0 %v1325
    %v1728 = vpop.f32.mrb[0].mxu0
    %v1729 = vadd.f32 %v1140, %v1728
    %v1730 = vpop.f32.mrb[0].mxu0
    %v1731 = vadd.f32 %v1144, %v1730
    %v1732 = vpop.f32.mrb[0].mxu0
    %v1733 = vpop.f32.mrb[0].mxu0
    %1734 = vdwg.mxu0
    %v1735 = vmax.f32 %v1362, 0.0
    %v1736 = vmax.f32 %v1364, 0.0
    %v1737 = vmax.f32 %v1413, 0.0
    %v1738 = vmax.f32 %v1415, 0.0
    %v1739 = vmax.f32 %v1464, 0.0
    %v1740 = vmax.f32 %v1466, 0.0
    %v1741 = vmax.f32 %v1515, 0.0
    %v1742 = vmax.f32 %v1517, 0.0
    %v1743 = vmax.f32 %v1566, 0.0
    %v1744 = vmax.f32 %v1568, 0.0
    %v1745 = vmax.f32 %v1617, 0.0
    %v1746 = vmax.f32 %v1619, 0.0
    %v1747 = vmax.f32 %v1668, 0.0
    %v1748 = vmax.f32 %v1670, 0.0
    %v1749 = vmax.f32 %v1719, 0.0
    %v1750 = vmax.f32 %v1721, 0.0
    %v1751 = vmax.f32 %v1366, 0.0
    %v1752 = vmax.f32 %v1368, 0.0
    %v1753 = vmax.f32 %v1417, 0.0
    %v1754 = vmax.f32 %v1419, 0.0
    %v1755 = vmax.f32 %v1468, 0.0
    %v1756 = vmax.f32 %v1470, 0.0
    %v1757 = vmax.f32 %v1519, 0.0
    %v1758 = vmax.f32 %v1521, 0.0
    %v1759 = vmax.f32 %v1570, 0.0
    %v1760 = vmax.f32 %v1572, 0.0
    %v1761 = vmax.f32 %v1621, 0.0
    %v1762 = vmax.f32 %v1623, 0.0
    %v1763 = vmax.f32 %v1672, 0.0
    %v1764 = vmax.f32 %v1674, 0.0
    %v1765 = vmax.f32 %v1723, 0.0
    %v1766 = vmax.f32 %v1725, 0.0
    %v1767 = vmax.f32 %v1372, 0.0
    %v1768 = vmax.f32 %v1374, 0.0
    %v1769 = vmax.f32 %v1423, 0.0
    %v1770 = vmax.f32 %v1425, 0.0
    %v1771 = vmax.f32 %v1474, 0.0
    %v1772 = vmax.f32 %v1476, 0.0
    %v1773 = vmax.f32 %v1525, 0.0
    %v1774 = vmax.f32 %v1527, 0.0
    %v1775 = vmax.f32 %v1576, 0.0
    %v1776 = vmax.f32 %v1578, 0.0
    %v1777 = vmax.f32 %v1627, 0.0
    %v1778 = vmax.f32 %v1629, 0.0
    %v1779 = vmax.f32 %v1678, 0.0
    %v1780 = vmax.f32 %v1680, 0.0
    %v1781 = vmax.f32 %v1729, 0.0
    %v1782 = vmax.f32 %v1731, 0.0
    %v1783 = vld [vmem:[%s4] sm:$0xf]
    %v1784 = vld [vmem:[%s4 + $0x4] sm:$0xf]
    %v1785 = vld [vmem:[%s4 + $0x8] sm:$0xf]
    %v1786 = vld [vmem:[%s4 + $0xc] sm:$0xf]
    %v1787 = vld [vmem:[%s4 + $0x10] sm:$0xf]
    %v1788 = vld [vmem:[%s4 + $0x14] sm:$0xf]
    %v1789 = vld [vmem:[%s4 + $0x18] sm:$0xf]
    %v1790 = vld [vmem:[%s4 + $0x1c] sm:$0xf]
    %v1791 = vld [vmem:[%s4 + $0x20] sm:$0xf]
    %v1792 = vld [vmem:[%s4 + $0x24] sm:$0xf]
    %v1793 = vld [vmem:[%s4 + $0x28] sm:$0xf]
    %v1794 = vld [vmem:[%s4 + $0x2c] sm:$0xf]
    %v1795 = vld [vmem:[%s4 + $0x30] sm:$0xf]
    %v1796 = vld [vmem:[%s4 + $0x34] sm:$0xf]
    %v1797 = vld [vmem:[%s4 + $0x38] sm:$0xf]
    %v1798 = vld [vmem:[%s4 + $0x3c] sm:$0xf]
    %v1799 = vld [vmem:[%s4 + $0x40] sm:$0xf]
    %v1800 = vld [vmem:[%s4 + $0x44] sm:$0xf]
    %v1801 = vld [vmem:[%s4 + $0x48] sm:$0xf]
    %v1802 = vld [vmem:[%s4 + $0x4c] sm:$0xf]
    %v1803 = vld [vmem:[%s4 + $0x50] sm:$0xf]
    %v1804 = vld [vmem:[%s4 + $0x54] sm:$0xf]
    %v1805 = vld [vmem:[%s4 + $0x58] sm:$0xf]
    %v1806 = vld [vmem:[%s4 + $0x5c] sm:$0xf]
    %v1807 = vld [vmem:[%s4 + $0x60] sm:$0xf]
    %v1808 = vld [vmem:[%s4 + $0x64] sm:$0xf]
    %v1809 = vld [vmem:[%s4 + $0x68] sm:$0xf]
    %v1810 = vld [vmem:[%s4 + $0x6c] sm:$0xf]
    %v1811 = vld [vmem:[%s4 + $0x70] sm:$0xf]
    %v1812 = vld [vmem:[%s4 + $0x74] sm:$0xf]
    %v1813 = vld [vmem:[%s4 + $0x78] sm:$0xf]
    %v1814 = vld [vmem:[%s4 + $0x7c] sm:$0xf]
    %v1815 = vld [vmem:[%s4 + $0x80] sm:$0xf]
    %v1816 = vld [vmem:[%s4 + $0x84] sm:$0xf]
    %v1817 = vld [vmem:[%s4 + $0x88] sm:$0xf]
    %v1818 = vld [vmem:[%s4 + $0x8c] sm:$0xf]
    %v1819 = vld [vmem:[%s4 + $0x90] sm:$0xf]
    %v1820 = vld [vmem:[%s4 + $0x94] sm:$0xf]
    %v1821 = vld [vmem:[%s4 + $0x98] sm:$0xf]
    %v1822 = vld [vmem:[%s4 + $0x9c] sm:$0xf]
    %v1823 = vld [vmem:[%s4 + $0xa0] sm:$0xf]
    %v1824 = vld [vmem:[%s4 + $0xa4] sm:$0xf]
    %v1825 = vld [vmem:[%s4 + $0xa8] sm:$0xf]
    %v1826 = vld [vmem:[%s4 + $0xac] sm:$0xf]
    %v1827 = vld [vmem:[%s4 + $0xb0] sm:$0xf]
    %v1828 = vld [vmem:[%s4 + $0xb4] sm:$0xf]
    %v1829 = vld [vmem:[%s4 + $0xb8] sm:$0xf]
    %v1830 = vld [vmem:[%s4 + $0xbc] sm:$0xf]
    %v1831 = vld [vmem:[%s4 + $0xc0] sm:$0xf]
    %v1832 = vld [vmem:[%s4 + $0xc4] sm:$0xf]
    %v1833 = vld [vmem:[%s4 + $0xc8] sm:$0xf]
    %v1834 = vld [vmem:[%s4 + $0xcc] sm:$0xf]
    %v1835 = vld [vmem:[%s4 + $0xd0] sm:$0xf]
    %v1836 = vld [vmem:[%s4 + $0xd4] sm:$0xf]
    %v1837 = vld [vmem:[%s4 + $0xd8] sm:$0xf]
    %v1838 = vld [vmem:[%s4 + $0xdc] sm:$0xf]
    %v1839 = vld [vmem:[%s4 + $0xe0] sm:$0xf]
    %v1840 = vld [vmem:[%s4 + $0xe4] sm:$0xf]
    %v1841 = vld [vmem:[%s4 + $0xe8] sm:$0xf]
    %v1842 = vld [vmem:[%s4 + $0xec] sm:$0xf]
    %v1843 = vld [vmem:[%s4 + $0xf0] sm:$0xf]
    %v1844 = vld [vmem:[%s4 + $0xf4] sm:$0xf]
    %v1845 = vld [vmem:[%s4 + $0xf8] sm:$0xf]
    %v1846 = vld [vmem:[%s4 + $0xfc] sm:$0xf]
    %v1847 = vld [vmem:[%s4 + $0x100] sm:$0xf]
    %v1848 = vld [vmem:[%s4 + $0x104] sm:$0xf]
    %v1849 = vld [vmem:[%s4 + $0x108] sm:$0xf]
    %v1850 = vld [vmem:[%s4 + $0x10c] sm:$0xf]
    %v1851 = vld [vmem:[%s4 + $0x110] sm:$0xf]
    %v1852 = vld [vmem:[%s4 + $0x114] sm:$0xf]
    %v1853 = vld [vmem:[%s4 + $0x118] sm:$0xf]
    %v1854 = vld [vmem:[%s4 + $0x11c] sm:$0xf]
    %v1855 = vld [vmem:[%s4 + $0x120] sm:$0xf]
    %v1856 = vld [vmem:[%s4 + $0x124] sm:$0xf]
    %v1857 = vld [vmem:[%s4 + $0x128] sm:$0xf]
    %v1858 = vld [vmem:[%s4 + $0x12c] sm:$0xf]
    %v1859 = vld [vmem:[%s4 + $0x130] sm:$0xf]
    %v1860 = vld [vmem:[%s4 + $0x134] sm:$0xf]
    %v1861 = vld [vmem:[%s4 + $0x138] sm:$0xf]
    %v1862 = vld [vmem:[%s4 + $0x13c] sm:$0xf]
    %v1863 = vld [vmem:[%s4 + $0x140] sm:$0xf]
    %v1864 = vld [vmem:[%s4 + $0x144] sm:$0xf]
    %v1865 = vld [vmem:[%s4 + $0x148] sm:$0xf]
    %v1866 = vld [vmem:[%s4 + $0x14c] sm:$0xf]
    %v1867 = vld [vmem:[%s4 + $0x150] sm:$0xf]
    %v1868 = vld [vmem:[%s4 + $0x154] sm:$0xf]
    %v1869 = vld [vmem:[%s4 + $0x158] sm:$0xf]
    %v1870 = vld [vmem:[%s4 + $0x15c] sm:$0xf]
    %v1871 = vld [vmem:[%s4 + $0x160] sm:$0xf]
    %v1872 = vld [vmem:[%s4 + $0x164] sm:$0xf]
    %v1873 = vld [vmem:[%s4 + $0x168] sm:$0xf]
    %v1874 = vld [vmem:[%s4 + $0x16c] sm:$0xf]
    %v1875 = vld [vmem:[%s4 + $0x170] sm:$0xf]
    %v1876 = vld [vmem:[%s4 + $0x174] sm:$0xf]
    %v1877 = vld [vmem:[%s4 + $0x178] sm:$0xf]
    %v1878 = vld [vmem:[%s4 + $0x17c] sm:$0xf]
    %v1879 = vld [vmem:[%s4 + $0x180] sm:$0xf]
    %v1880 = vld [vmem:[%s4 + $0x184] sm:$0xf]
    %v1881 = vld [vmem:[%s4 + $0x188] sm:$0xf]
    %v1882 = vld [vmem:[%s4 + $0x18c] sm:$0xf]
    %v1883 = vld [vmem:[%s4 + $0x190] sm:$0xf]
    %v1884 = vld [vmem:[%s4 + $0x194] sm:$0xf]
    %v1885 = vld [vmem:[%s4 + $0x198] sm:$0xf]
    %v1886 = vld [vmem:[%s4 + $0x19c] sm:$0xf]
    %v1887 = vld [vmem:[%s4 + $0x1a0] sm:$0xf]
    %v1888 = vld [vmem:[%s4 + $0x1a4] sm:$0xf]
    %v1889 = vld [vmem:[%s4 + $0x1a8] sm:$0xf]
    %v1890 = vld [vmem:[%s4 + $0x1ac] sm:$0xf]
    %v1891 = vld [vmem:[%s4 + $0x1b0] sm:$0xf]
    %v1892 = vld [vmem:[%s4 + $0x1b4] sm:$0xf]
    %v1893 = vld [vmem:[%s4 + $0x1b8] sm:$0xf]
    %v1894 = vld [vmem:[%s4 + $0x1bc] sm:$0xf]
    %v1895 = vld [vmem:[%s4 + $0x1c0] sm:$0xf]
    %v1896 = vld [vmem:[%s4 + $0x1c4] sm:$0xf]
    %v1897 = vld [vmem:[%s4 + $0x1c8] sm:$0xf]
    %v1898 = vld [vmem:[%s4 + $0x1cc] sm:$0xf]
    %v1899 = vld [vmem:[%s4 + $0x1d0] sm:$0xf]
    %v1900 = vld [vmem:[%s4 + $0x1d4] sm:$0xf]
    %v1901 = vld [vmem:[%s4 + $0x1d8] sm:$0xf]
    %v1902 = vld [vmem:[%s4 + $0x1dc] sm:$0xf]
    %v1903 = vld [vmem:[%s4 + $0x1e0] sm:$0xf]
    %v1904 = vld [vmem:[%s4 + $0x1e4] sm:$0xf]
    %v1905 = vld [vmem:[%s4 + $0x1e8] sm:$0xf]
    %v1906 = vld [vmem:[%s4 + $0x1ec] sm:$0xf]
    %v1907 = vld [vmem:[%s4 + $0x1f0] sm:$0xf]
    %v1908 = vld [vmem:[%s4 + $0x1f4] sm:$0xf]
    %v1909 = vld [vmem:[%s4 + $0x1f8] sm:$0xf]
    %v1910 = vld [vmem:[%s4 + $0x1fc] sm:$0xf]
    %v1911 = vld [vmem:[%s4 + $0x200] sm:$0xf]
    %v1912 = vld [vmem:[%s4 + $0x204] sm:$0xf]
    %v1913 = vld [vmem:[%s4 + $0x208] sm:$0xf]
    %v1914 = vld [vmem:[%s4 + $0x20c] sm:$0xf]
    %v1915 = vld [vmem:[%s4 + $0x210] sm:$0xf]
    %v1916 = vld [vmem:[%s4 + $0x214] sm:$0xf]
    %v1917 = vld [vmem:[%s4 + $0x218] sm:$0xf]
    %v1918 = vld [vmem:[%s4 + $0x21c] sm:$0xf]
    %v1919 = vld [vmem:[%s4 + $0x220] sm:$0xf]
    %v1920 = vld [vmem:[%s4 + $0x224] sm:$0xf]
    %v1921 = vld [vmem:[%s4 + $0x228] sm:$0xf]
    %v1922 = vld [vmem:[%s4 + $0x22c] sm:$0xf]
    %v1923 = vld [vmem:[%s4 + $0x230] sm:$0xf]
    %v1924 = vld [vmem:[%s4 + $0x234] sm:$0xf]
    %v1925 = vld [vmem:[%s4 + $0x238] sm:$0xf]
    %v1926 = vld [vmem:[%s4 + $0x23c] sm:$0xf]
    %v1927 = vld [vmem:[%s4 + $0x240] sm:$0xf]
    %v1928 = vld [vmem:[%s4 + $0x244] sm:$0xf]
    %v1929 = vld [vmem:[%s4 + $0x248] sm:$0xf]
    %v1930 = vld [vmem:[%s4 + $0x24c] sm:$0xf]
    %v1931 = vld [vmem:[%s4 + $0x250] sm:$0xf]
    %v1932 = vld [vmem:[%s4 + $0x254] sm:$0xf]
    %v1933 = vld [vmem:[%s4 + $0x258] sm:$0xf]
    %v1934 = vld [vmem:[%s4 + $0x25c] sm:$0xf]
    %v1935 = vld [vmem:[%s4 + $0x260] sm:$0xf]
    %v1936 = vld [vmem:[%s4 + $0x264] sm:$0xf]
    %v1937 = vld [vmem:[%s4 + $0x268] sm:$0xf]
    %v1938 = vld [vmem:[%s4 + $0x26c] sm:$0xf]
    %v1939 = vld [vmem:[%s4 + $0x270] sm:$0xf]
    %v1940 = vld [vmem:[%s4 + $0x274] sm:$0xf]
    %v1941 = vld [vmem:[%s4 + $0x278] sm:$0xf]
    %v1942 = vld [vmem:[%s4 + $0x27c] sm:$0xf]
    %v1943 = vld [vmem:[%s4 + $0x280] sm:$0xf]
    %v1944 = vld [vmem:[%s4 + $0x284] sm:$0xf]
    %v1945 = vld [vmem:[%s4 + $0x288] sm:$0xf]
    %v1946 = vld [vmem:[%s4 + $0x28c] sm:$0xf]
    %v1947 = vld [vmem:[%s4 + $0x290] sm:$0xf]
    %v1948 = vld [vmem:[%s4 + $0x294] sm:$0xf]
    %v1949 = vld [vmem:[%s4 + $0x298] sm:$0xf]
    %v1950 = vld [vmem:[%s4 + $0x29c] sm:$0xf]
    %v1951 = vld [vmem:[%s4 + $0x2a0] sm:$0xf]
    %v1952 = vld [vmem:[%s4 + $0x2a4] sm:$0xf]
    %v1953 = vld [vmem:[%s4 + $0x2a8] sm:$0xf]
    %v1954 = vld [vmem:[%s4 + $0x2ac] sm:$0xf]
    %v1955 = vld [vmem:[%s4 + $0x2b0] sm:$0xf]
    %v1956 = vld [vmem:[%s4 + $0x2b4] sm:$0xf]
    %v1957 = vld [vmem:[%s4 + $0x2b8] sm:$0xf]
    %v1958 = vld [vmem:[%s4 + $0x2bc] sm:$0xf]
    %v1959 = vld [vmem:[%s4 + $0x2c0] sm:$0xf]
    %v1960 = vld [vmem:[%s4 + $0x2c4] sm:$0xf]
    %v1961 = vld [vmem:[%s4 + $0x2c8] sm:$0xf]
    %v1962 = vld [vmem:[%s4 + $0x2cc] sm:$0xf]
    %v1963 = vld [vmem:[%s4 + $0x2d0] sm:$0xf]
    %v1964 = vld [vmem:[%s4 + $0x2d4] sm:$0xf]
    %v1965 = vld [vmem:[%s4 + $0x2d8] sm:$0xf]
    %v1966 = vld [vmem:[%s4 + $0x2dc] sm:$0xf]
    %v1967 = vld [vmem:[%s4 + $0x2e0] sm:$0xf]
    %v1968 = vld [vmem:[%s4 + $0x2e4] sm:$0xf]
    %v1969 = vld [vmem:[%s4 + $0x2e8] sm:$0xf]
    %v1970 = vld [vmem:[%s4 + $0x2ec] sm:$0xf]
    %v1971 = vld [vmem:[%s4 + $0x2f0] sm:$0xf]
    %v1972 = vld [vmem:[%s4 + $0x2f4] sm:$0xf]
    %v1973 = vld [vmem:[%s4 + $0x2f8] sm:$0xf]
    %v1974 = vld [vmem:[%s4 + $0x2fc] sm:$0xf]
    %v1975 = vld [vmem:[%s4 + $0x300] sm:$0xf]
    %v1976 = vld [vmem:[%s4 + $0x304] sm:$0xf]
    %v1977 = vld [vmem:[%s4 + $0x308] sm:$0xf]
    %v1978 = vld [vmem:[%s4 + $0x30c] sm:$0xf]
    %v1979 = vld [vmem:[%s4 + $0x310] sm:$0xf]
    %v1980 = vld [vmem:[%s4 + $0x314] sm:$0xf]
    %v1981 = vld [vmem:[%s4 + $0x318] sm:$0xf]
    %v1982 = vld [vmem:[%s4 + $0x31c] sm:$0xf]
    %v1983 = vld [vmem:[%s4 + $0x320] sm:$0xf]
    %v1984 = vld [vmem:[%s4 + $0x324] sm:$0xf]
    %v1985 = vld [vmem:[%s4 + $0x328] sm:$0xf]
    %v1986 = vld [vmem:[%s4 + $0x32c] sm:$0xf]
    %v1987 = vld [vmem:[%s4 + $0x330] sm:$0xf]
    %v1988 = vld [vmem:[%s4 + $0x334] sm:$0xf]
    %v1989 = vld [vmem:[%s4 + $0x338] sm:$0xf]
    %v1990 = vld [vmem:[%s4 + $0x33c] sm:$0xf]
    %v1991 = vld [vmem:[%s4 + $0x340] sm:$0xf]
    %v1992 = vld [vmem:[%s4 + $0x344] sm:$0xf]
    %v1993 = vld [vmem:[%s4 + $0x348] sm:$0xf]
    %v1994 = vld [vmem:[%s4 + $0x34c] sm:$0xf]
    %v1995 = vld [vmem:[%s4 + $0x350] sm:$0xf]
    %v1996 = vld [vmem:[%s4 + $0x354] sm:$0xf]
    %v1997 = vld [vmem:[%s4 + $0x358] sm:$0xf]
    %v1998 = vld [vmem:[%s4 + $0x35c] sm:$0xf]
    %v1999 = vld [vmem:[%s4 + $0x360] sm:$0xf]
    %v2000 = vld [vmem:[%s4 + $0x364] sm:$0xf]
    %v2001 = vld [vmem:[%s4 + $0x368] sm:$0xf]
    %v2002 = vld [vmem:[%s4 + $0x36c] sm:$0xf]
    %v2003 = vld [vmem:[%s4 + $0x370] sm:$0xf]
    %v2004 = vld [vmem:[%s4 + $0x374] sm:$0xf]
    %v2005 = vld [vmem:[%s4 + $0x378] sm:$0xf]
    %v2006 = vld [vmem:[%s4 + $0x37c] sm:$0xf]
    %v2007 = vld [vmem:[%s4 + $0x380] sm:$0xf]
    %v2008 = vld [vmem:[%s4 + $0x384] sm:$0xf]
    %v2009 = vld [vmem:[%s4 + $0x388] sm:$0xf]
    %v2010 = vld [vmem:[%s4 + $0x38c] sm:$0xf]
    %v2011 = vld [vmem:[%s4 + $0x390] sm:$0xf]
    %v2012 = vld [vmem:[%s4 + $0x394] sm:$0xf]
    %v2013 = vld [vmem:[%s4 + $0x398] sm:$0xf]
    %v2014 = vld [vmem:[%s4 + $0x39c] sm:$0xf]
    %v2015 = vld [vmem:[%s4 + $0x3a0] sm:$0xf]
    %v2016 = vld [vmem:[%s4 + $0x3a4] sm:$0xf]
    %v2017 = vld [vmem:[%s4 + $0x3a8] sm:$0xf]
    %v2018 = vld [vmem:[%s4 + $0x3ac] sm:$0xf]
    %v2019 = vld [vmem:[%s4 + $0x3b0] sm:$0xf]
    %v2020 = vld [vmem:[%s4 + $0x3b4] sm:$0xf]
    %v2021 = vld [vmem:[%s4 + $0x3b8] sm:$0xf]
    %v2022 = vld [vmem:[%s4 + $0x3bc] sm:$0xf]
    %v2023 = vld [vmem:[%s4 + $0x3c0] sm:$0xf]
    %v2024 = vld [vmem:[%s4 + $0x3c4] sm:$0xf]
    %v2025 = vld [vmem:[%s4 + $0x3c8] sm:$0xf]
    %v2026 = vld [vmem:[%s4 + $0x3cc] sm:$0xf]
    %v2027 = vld [vmem:[%s4 + $0x3d0] sm:$0xf]
    %v2028 = vld [vmem:[%s4 + $0x3d4] sm:$0xf]
    %v2029 = vld [vmem:[%s4 + $0x3d8] sm:$0xf]
    %v2030 = vld [vmem:[%s4 + $0x3dc] sm:$0xf]
    %v2031 = vld [vmem:[%s4 + $0x3e0] sm:$0xf]
    %v2032 = vld [vmem:[%s4 + $0x3e4] sm:$0xf]
    %v2033 = vld [vmem:[%s4 + $0x3e8] sm:$0xf]
    %v2034 = vld [vmem:[%s4 + $0x3ec] sm:$0xf]
    %v2035 = vld [vmem:[%s4 + $0x3f0] sm:$0xf]
    %v2036 = vld [vmem:[%s4 + $0x3f4] sm:$0xf]
    %v2037 = vld [vmem:[%s4 + $0x3f8] sm:$0xf]
    %v2038 = vld [vmem:[%s4 + $0x3fc] sm:$0xf]
    %v2039 = vpack.c.bf16 %v1751, %v1735
    %v2040 = vpack.c.bf16 %v1752, %v1736
    %v2041 = vpack.c.bf16 %v1753, %v1737
    %v2042 = vpack.c.bf16 %v1754, %v1738
    %v2043 = vpack.c.bf16 %v1755, %v1739
    %v2044 = vpack.c.bf16 %v1756, %v1740
    %v2045 = vpack.c.bf16 %v1757, %v1741
    %v2046 = vpack.c.bf16 %v1758, %v1742
    %v2047 = vpack.c.bf16 %v1759, %v1743
    %v2048 = vpack.c.bf16 %v1760, %v1744
    %v2049 = vpack.c.bf16 %v1761, %v1745
    %v2050 = vpack.c.bf16 %v1762, %v1746
    %v2051 = vpack.c.bf16 %v1763, %v1747
    %v2052 = vpack.c.bf16 %v1764, %v1748
    %v2053 = vpack.c.bf16 %v1765, %v1749
    %v2054 = vpack.c.bf16 %v1766, %v1750
    %v2055 = vpack.c.bf16 %v1767, %v1767
    %v2056 = vpack.c.bf16 %v1768, %v1768
    %v2057 = vpack.c.bf16 %v1769, %v1769
    %v2058 = vpack.c.bf16 %v1770, %v1770
    %v2059 = vpack.c.bf16 %v1771, %v1771
    %v2060 = vpack.c.bf16 %v1772, %v1772
    %v2061 = vpack.c.bf16 %v1773, %v1773
    %v2062 = vpack.c.bf16 %v1774, %v1774
    %v2063 = vpack.c.bf16 %v1775, %v1775
    %v2064 = vpack.c.bf16 %v1776, %v1776
    %v2065 = vpack.c.bf16 %v1777, %v1777
    %v2066 = vpack.c.bf16 %v1778, %v1778
    %v2067 = vpack.c.bf16 %v1779, %v1779
    %v2068 = vpack.c.bf16 %v1780, %v1780
    %v2069 = vpack.c.bf16 %v1781, %v1781
    %v2070 = vpack.c.bf16 %v1782, %v1782
    %v2072 = vlaneseq
    %v2073 = vshrl.u32 %v2072, 7
    %v2074 = vsub.s32 0, %v2073
    %v2075 = vrot.slane %v31, %v2074
    %v2333 = vunpack.c.l.b16 %v1783
    %v2334 = vunpack.c.l.b16 %v1784
    %v2335 = vunpack.c.l.b16 %v1785
    %v2336 = vunpack.c.l.b16 %v1786
    %v2337 = vunpack.c.l.b16 %v1787
    %v2338 = vunpack.c.l.b16 %v1788
    %v2339 = vunpack.c.l.b16 %v1789
    %v2340 = vunpack.c.l.b16 %v1790
    %v2341 = vunpack.c.l.b16 %v1791
    %v2342 = vunpack.c.l.b16 %v1792
    %v2343 = vunpack.c.l.b16 %v1793
    %v2344 = vunpack.c.l.b16 %v1794
    %v2345 = vunpack.c.l.b16 %v1795
    %v2346 = vunpack.c.l.b16 %v1796
    %v2347 = vunpack.c.l.b16 %v1797
    %v2348 = vunpack.c.l.b16 %v1798
    %v2349 = vunpack.c.l.b16 %v1799
    %v2350 = vunpack.c.l.b16 %v1800
    %v2351 = vunpack.c.l.b16 %v1801
    %v2352 = vunpack.c.l.b16 %v1802
    %v2353 = vunpack.c.l.b16 %v1803
    %v2354 = vunpack.c.l.b16 %v1804
    %v2355 = vunpack.c.l.b16 %v1805
    %v2356 = vunpack.c.l.b16 %v1806
    %v2357 = vunpack.c.l.b16 %v1807
    %v2358 = vunpack.c.l.b16 %v1808
    %v2359 = vunpack.c.l.b16 %v1809
    %v2360 = vunpack.c.l.b16 %v1810
    %v2361 = vunpack.c.l.b16 %v1811
    %v2362 = vunpack.c.l.b16 %v1812
    %v2363 = vunpack.c.l.b16 %v1813
    %v2364 = vunpack.c.l.b16 %v1814
    %v2365 = vunpack.c.l.b16 %v1815
    %v2366 = vunpack.c.l.b16 %v1816
    %v2367 = vunpack.c.l.b16 %v1817
    %v2368 = vunpack.c.l.b16 %v1818
    %v2369 = vunpack.c.l.b16 %v1819
    %v2370 = vunpack.c.l.b16 %v1820
    %v2371 = vunpack.c.l.b16 %v1821
    %v2372 = vunpack.c.l.b16 %v1822
    %v2373 = vunpack.c.l.b16 %v1823
    %v2374 = vunpack.c.l.b16 %v1824
    %v2375 = vunpack.c.l.b16 %v1825
    %v2376 = vunpack.c.l.b16 %v1826
    %v2377 = vunpack.c.l.b16 %v1827
    %v2378 = vunpack.c.l.b16 %v1828
    %v2379 = vunpack.c.l.b16 %v1829
    %v2380 = vunpack.c.l.b16 %v1830
    %v2381 = vunpack.c.l.b16 %v1831
    %v2382 = vunpack.c.l.b16 %v1832
    %v2383 = vunpack.c.l.b16 %v1833
    %v2384 = vunpack.c.l.b16 %v1834
    %v2385 = vunpack.c.l.b16 %v1835
    %v2386 = vunpack.c.l.b16 %v1836
    %v2387 = vunpack.c.l.b16 %v1837
    %v2388 = vunpack.c.l.b16 %v1838
    %v2389 = vunpack.c.l.b16 %v1839
    %v2390 = vunpack.c.l.b16 %v1840
    %v2391 = vunpack.c.l.b16 %v1841
    %v2392 = vunpack.c.l.b16 %v1842
    %v2393 = vunpack.c.l.b16 %v1843
    %v2394 = vunpack.c.l.b16 %v1844
    %v2395 = vunpack.c.l.b16 %v1845
    %v2396 = vunpack.c.l.b16 %v1846
    %v2397 = vunpack.c.l.b16 %v1847
    %v2398 = vunpack.c.l.b16 %v1848
    %v2399 = vunpack.c.l.b16 %v1849
    %v2400 = vunpack.c.l.b16 %v1850
    %v2401 = vunpack.c.l.b16 %v1851
    %v2402 = vunpack.c.l.b16 %v1852
    %v2403 = vunpack.c.l.b16 %v1853
    %v2404 = vunpack.c.l.b16 %v1854
    %v2405 = vunpack.c.l.b16 %v1855
    %v2406 = vunpack.c.l.b16 %v1856
    %v2407 = vunpack.c.l.b16 %v1857
    %v2408 = vunpack.c.l.b16 %v1858
    %v2409 = vunpack.c.l.b16 %v1859
    %v2410 = vunpack.c.l.b16 %v1860
    %v2411 = vunpack.c.l.b16 %v1861
    %v2412 = vunpack.c.l.b16 %v1862
    %v2413 = vunpack.c.l.b16 %v1863
    %v2414 = vunpack.c.l.b16 %v1864
    %v2415 = vunpack.c.l.b16 %v1865
    %v2416 = vunpack.c.l.b16 %v1866
    %v2417 = vunpack.c.l.b16 %v1867
    %v2418 = vunpack.c.l.b16 %v1868
    %v2419 = vunpack.c.l.b16 %v1869
    %v2420 = vunpack.c.l.b16 %v1870
    %v2421 = vunpack.c.l.b16 %v1871
    %v2422 = vunpack.c.l.b16 %v1872
    %v2423 = vunpack.c.l.b16 %v1873
    %v2424 = vunpack.c.l.b16 %v1874
    %v2425 = vunpack.c.l.b16 %v1875
    %v2426 = vunpack.c.l.b16 %v1876
    %v2427 = vunpack.c.l.b16 %v1877
    %v2428 = vunpack.c.l.b16 %v1878
    %v2429 = vunpack.c.l.b16 %v1879
    %v2430 = vunpack.c.l.b16 %v1880
    %v2431 = vunpack.c.l.b16 %v1881
    %v2432 = vunpack.c.l.b16 %v1882
    %v2433 = vunpack.c.l.b16 %v1883
    %v2434 = vunpack.c.l.b16 %v1884
    %v2435 = vunpack.c.l.b16 %v1885
    %v2436 = vunpack.c.l.b16 %v1886
    %v2437 = vunpack.c.l.b16 %v1887
    %v2438 = vunpack.c.l.b16 %v1888
    %v2439 = vunpack.c.l.b16 %v1889
    %v2440 = vunpack.c.l.b16 %v1890
    %v2441 = vunpack.c.l.b16 %v1891
    %v2442 = vunpack.c.l.b16 %v1892
    %v2443 = vunpack.c.l.b16 %v1893
    %v2444 = vunpack.c.l.b16 %v1894
    %v2445 = vunpack.c.l.b16 %v1895
    %v2446 = vunpack.c.l.b16 %v1896
    %v2447 = vunpack.c.l.b16 %v1897
    %v2448 = vunpack.c.l.b16 %v1898
    %v2449 = vunpack.c.l.b16 %v1899
    %v2450 = vunpack.c.l.b16 %v1900
    %v2451 = vunpack.c.l.b16 %v1901
    %v2452 = vunpack.c.l.b16 %v1902
    %v2453 = vunpack.c.l.b16 %v1903
    %v2454 = vunpack.c.l.b16 %v1904
    %v2455 = vunpack.c.l.b16 %v1905
    %v2456 = vunpack.c.l.b16 %v1906
    %v2457 = vunpack.c.l.b16 %v1907
    %v2458 = vunpack.c.l.b16 %v1908
    %v2459 = vunpack.c.l.b16 %v1909
    %v2460 = vunpack.c.l.b16 %v1910
    %v2461 = vunpack.c.l.b16 %v1911
    %v2462 = vunpack.c.l.b16 %v1912
    %v2463 = vunpack.c.l.b16 %v1913
    %v2464 = vunpack.c.l.b16 %v1914
    %v2465 = vunpack.c.l.b16 %v1915
    %v2466 = vunpack.c.l.b16 %v1916
    %v2467 = vunpack.c.l.b16 %v1917
    %v2468 = vunpack.c.l.b16 %v1918
    %v2469 = vunpack.c.l.b16 %v1919
    %v2470 = vunpack.c.l.b16 %v1920
    %v2471 = vunpack.c.l.b16 %v1921
    %v2472 = vunpack.c.l.b16 %v1922
    %v2473 = vunpack.c.l.b16 %v1923
    %v2474 = vunpack.c.l.b16 %v1924
    %v2475 = vunpack.c.l.b16 %v1925
    %v2476 = vunpack.c.l.b16 %v1926
    %v2477 = vunpack.c.l.b16 %v1927
    %v2478 = vunpack.c.l.b16 %v1928
    %v2479 = vunpack.c.l.b16 %v1929
    %v2480 = vunpack.c.l.b16 %v1930
    %v2481 = vunpack.c.l.b16 %v1931
    %v2482 = vunpack.c.l.b16 %v1932
    %v2483 = vunpack.c.l.b16 %v1933
    %v2484 = vunpack.c.l.b16 %v1934
    %v2485 = vunpack.c.l.b16 %v1935
    %v2486 = vunpack.c.l.b16 %v1936
    %v2487 = vunpack.c.l.b16 %v1937
    %v2488 = vunpack.c.l.b16 %v1938
    %v2489 = vunpack.c.l.b16 %v1939
    %v2490 = vunpack.c.l.b16 %v1940
    %v2491 = vunpack.c.l.b16 %v1941
    %v2492 = vunpack.c.l.b16 %v1942
    %v2493 = vunpack.c.l.b16 %v1943
    %v2494 = vunpack.c.l.b16 %v1944
    %v2495 = vunpack.c.l.b16 %v1945
    %v2496 = vunpack.c.l.b16 %v1946
    %v2497 = vunpack.c.l.b16 %v1947
    %v2498 = vunpack.c.l.b16 %v1948
    %v2499 = vunpack.c.l.b16 %v1949
    %v2500 = vunpack.c.l.b16 %v1950
    %v2501 = vunpack.c.l.b16 %v1951
    %v2502 = vunpack.c.l.b16 %v1952
    %v2503 = vunpack.c.l.b16 %v1953
    %v2504 = vunpack.c.l.b16 %v1954
    %v2505 = vunpack.c.l.b16 %v1955
    %v2506 = vunpack.c.l.b16 %v1956
    %v2507 = vunpack.c.l.b16 %v1957
    %v2508 = vunpack.c.l.b16 %v1958
    %v2509 = vunpack.c.l.b16 %v1959
    %v2510 = vunpack.c.l.b16 %v1960
    %v2511 = vunpack.c.l.b16 %v1961
    %v2512 = vunpack.c.l.b16 %v1962
    %v2513 = vunpack.c.l.b16 %v1963
    %v2514 = vunpack.c.l.b16 %v1964
    %v2515 = vunpack.c.l.b16 %v1965
    %v2516 = vunpack.c.l.b16 %v1966
    %v2517 = vunpack.c.l.b16 %v1967
    %v2518 = vunpack.c.l.b16 %v1968
    %v2519 = vunpack.c.l.b16 %v1969
    %v2520 = vunpack.c.l.b16 %v1970
    %v2521 = vunpack.c.l.b16 %v1971
    %v2522 = vunpack.c.l.b16 %v1972
    %v2523 = vunpack.c.l.b16 %v1973
    %v2524 = vunpack.c.l.b16 %v1974
    %v2525 = vunpack.c.l.b16 %v1975
    %v2526 = vunpack.c.l.b16 %v1976
    %v2527 = vunpack.c.l.b16 %v1977
    %v2528 = vunpack.c.l.b16 %v1978
    %v2529 = vunpack.c.l.b16 %v1979
    %v2530 = vunpack.c.l.b16 %v1980
    %v2531 = vunpack.c.l.b16 %v1981
    %v2532 = vunpack.c.l.b16 %v1982
    %v2533 = vunpack.c.l.b16 %v1983
    %v2534 = vunpack.c.l.b16 %v1984
    %v2535 = vunpack.c.l.b16 %v1985
    %v2536 = vunpack.c.l.b16 %v1986
    %v2537 = vunpack.c.l.b16 %v1987
    %v2538 = vunpack.c.l.b16 %v1988
    %v2539 = vunpack.c.l.b16 %v1989
    %v2540 = vunpack.c.l.b16 %v1990
    %v2541 = vunpack.c.l.b16 %v1991
    %v2542 = vunpack.c.l.b16 %v1992
    %v2543 = vunpack.c.l.b16 %v1993
    %v2544 = vunpack.c.l.b16 %v1994
    %v2545 = vunpack.c.l.b16 %v1995
    %v2546 = vunpack.c.l.b16 %v1996
    %v2547 = vunpack.c.l.b16 %v1997
    %v2548 = vunpack.c.l.b16 %v1998
    %v2549 = vunpack.c.l.b16 %v1999
    %v2550 = vunpack.c.l.b16 %v2000
    %v2551 = vunpack.c.l.b16 %v2001
    %v2552 = vunpack.c.l.b16 %v2002
    %v2553 = vunpack.c.l.b16 %v2003
    %v2554 = vunpack.c.l.b16 %v2004
    %v2555 = vunpack.c.l.b16 %v2005
    %v2556 = vunpack.c.l.b16 %v2006
    %v2557 = vunpack.c.l.b16 %v2007
    %v2558 = vunpack.c.l.b16 %v2008
    %v2559 = vunpack.c.l.b16 %v2009
    %v2560 = vunpack.c.l.b16 %v2010
    %v2561 = vunpack.c.l.b16 %v2011
    %v2562 = vunpack.c.l.b16 %v2012
    %v2563 = vunpack.c.l.b16 %v2013
    %v2564 = vunpack.c.l.b16 %v2014
    %v2565 = vunpack.c.l.b16 %v2015
    %v2566 = vunpack.c.l.b16 %v2016
    %v2567 = vunpack.c.l.b16 %v2017
    %v2568 = vunpack.c.l.b16 %v2018
    %v2569 = vunpack.c.l.b16 %v2019
    %v2570 = vunpack.c.l.b16 %v2020
    %v2571 = vunpack.c.l.b16 %v2021
    %v2572 = vunpack.c.l.b16 %v2022
    %v2573 = vunpack.c.l.b16 %v2023
    %v2574 = vunpack.c.l.b16 %v2024
    %v2575 = vunpack.c.l.b16 %v2025
    %v2576 = vunpack.c.l.b16 %v2026
    %v2577 = vunpack.c.l.b16 %v2027
    %v2578 = vunpack.c.l.b16 %v2028
    %v2579 = vunpack.c.l.b16 %v2029
    %v2580 = vunpack.c.l.b16 %v2030
    %v2581 = vunpack.c.l.b16 %v2031
    %v2582 = vunpack.c.l.b16 %v2032
    %v2583 = vunpack.c.l.b16 %v2033
    %v2584 = vunpack.c.l.b16 %v2034
    %v2585 = vunpack.c.l.b16 %v2035
    %v2586 = vunpack.c.l.b16 %v2036
    %v2587 = vunpack.c.l.b16 %v2037
    %v2588 = vunpack.c.l.b16 %v2038
    %v2589 = vpack.c.b16 %v2334, %v2333
    %v2590 = vpack.c.b16 %v2336, %v2335
    %v2591 = vpack.c.b16 %v2338, %v2337
    %v2592 = vpack.c.b16 %v2340, %v2339
    %v2593 = vpack.c.b16 %v2342, %v2341
    %v2594 = vpack.c.b16 %v2344, %v2343
    %v2595 = vpack.c.b16 %v2346, %v2345
    %v2596 = vpack.c.b16 %v2348, %v2347
    %v2597 = vpack.c.b16 %v2350, %v2349
    %v2598 = vpack.c.b16 %v2352, %v2351
    %v2599 = vpack.c.b16 %v2354, %v2353
    %v2600 = vpack.c.b16 %v2356, %v2355
    %v2601 = vpack.c.b16 %v2358, %v2357
    %v2602 = vpack.c.b16 %v2360, %v2359
    %v2603 = vpack.c.b16 %v2362, %v2361
    %v2604 = vpack.c.b16 %v2364, %v2363
    %v2605 = vpack.c.b16 %v2366, %v2365
    %v2606 = vpack.c.b16 %v2368, %v2367
    %v2607 = vpack.c.b16 %v2370, %v2369
    %v2608 = vpack.c.b16 %v2372, %v2371
    %v2609 = vpack.c.b16 %v2374, %v2373
    %v2610 = vpack.c.b16 %v2376, %v2375
    %v2611 = vpack.c.b16 %v2378, %v2377
    %v2612 = vpack.c.b16 %v2380, %v2379
    %v2613 = vpack.c.b16 %v2382, %v2381
    %v2614 = vpack.c.b16 %v2384, %v2383
    %v2615 = vpack.c.b16 %v2386, %v2385
    %v2616 = vpack.c.b16 %v2388, %v2387
    %v2617 = vpack.c.b16 %v2390, %v2389
    %v2618 = vpack.c.b16 %v2392, %v2391
    %v2619 = vpack.c.b16 %v2394, %v2393
    %v2620 = vpack.c.b16 %v2396, %v2395
    %v2621 = vpack.c.b16 %v2398, %v2397
    %v2622 = vpack.c.b16 %v2400, %v2399
    %v2623 = vpack.c.b16 %v2402, %v2401
    %v2624 = vpack.c.b16 %v2404, %v2403
    %v2625 = vpack.c.b16 %v2406, %v2405
    %v2626 = vpack.c.b16 %v2408, %v2407
    %v2627 = vpack.c.b16 %v2410, %v2409
    %v2628 = vpack.c.b16 %v2412, %v2411
    %v2629 = vpack.c.b16 %v2414, %v2413
    %v2630 = vpack.c.b16 %v2416, %v2415
    %v2631 = vpack.c.b16 %v2418, %v2417
    %v2632 = vpack.c.b16 %v2420, %v2419
    %v2633 = vpack.c.b16 %v2422, %v2421
    %v2634 = vpack.c.b16 %v2424, %v2423
    %v2635 = vpack.c.b16 %v2426, %v2425
    %v2636 = vpack.c.b16 %v2428, %v2427
    %v2637 = vpack.c.b16 %v2430, %v2429
    %v2638 = vpack.c.b16 %v2432, %v2431
    %v2639 = vpack.c.b16 %v2434, %v2433
    %v2640 = vpack.c.b16 %v2436, %v2435
    %v2641 = vpack.c.b16 %v2438, %v2437
    %v2642 = vpack.c.b16 %v2440, %v2439
    %v2643 = vpack.c.b16 %v2442, %v2441
    %v2644 = vpack.c.b16 %v2444, %v2443
    %v2645 = vpack.c.b16 %v2446, %v2445
    %v2646 = vpack.c.b16 %v2448, %v2447
    %v2647 = vpack.c.b16 %v2450, %v2449
    %v2648 = vpack.c.b16 %v2452, %v2451
    %v2649 = vpack.c.b16 %v2454, %v2453
    %v2650 = vpack.c.b16 %v2456, %v2455
    %v2651 = vpack.c.b16 %v2458, %v2457
    %v2652 = vpack.c.b16 %v2460, %v2459
    %v2653 = vpack.c.b16 %v2462, %v2461
    %v2654 = vpack.c.b16 %v2464, %v2463
    %v2655 = vpack.c.b16 %v2466, %v2465
    %v2656 = vpack.c.b16 %v2468, %v2467
    %v2657 = vpack.c.b16 %v2470, %v2469
    %v2658 = vpack.c.b16 %v2472, %v2471
    %v2659 = vpack.c.b16 %v2474, %v2473
    %v2660 = vpack.c.b16 %v2476, %v2475
    %v2661 = vpack.c.b16 %v2478, %v2477
    %v2662 = vpack.c.b16 %v2480, %v2479
    %v2663 = vpack.c.b16 %v2482, %v2481
    %v2664 = vpack.c.b16 %v2484, %v2483
    %v2665 = vpack.c.b16 %v2486, %v2485
    %v2666 = vpack.c.b16 %v2488, %v2487
    %v2667 = vpack.c.b16 %v2490, %v2489
    %v2668 = vpack.c.b16 %v2492, %v2491
    %v2669 = vpack.c.b16 %v2494, %v2493
    %v2670 = vpack.c.b16 %v2496, %v2495
    %v2671 = vpack.c.b16 %v2498, %v2497
    %v2672 = vpack.c.b16 %v2500, %v2499
    %v2673 = vpack.c.b16 %v2502, %v2501
    %v2674 = vpack.c.b16 %v2504, %v2503
    %v2675 = vpack.c.b16 %v2506, %v2505
    %v2676 = vpack.c.b16 %v2508, %v2507
    %v2677 = vpack.c.b16 %v2510, %v2509
    %v2678 = vpack.c.b16 %v2512, %v2511
    %v2679 = vpack.c.b16 %v2514, %v2513
    %v2680 = vpack.c.b16 %v2516, %v2515
    %v2681 = vpack.c.b16 %v2518, %v2517
    %v2682 = vpack.c.b16 %v2520, %v2519
    %v2683 = vpack.c.b16 %v2522, %v2521
    %v2684 = vpack.c.b16 %v2524, %v2523
    %v2685 = vpack.c.b16 %v2526, %v2525
    %v2686 = vpack.c.b16 %v2528, %v2527
    %v2687 = vpack.c.b16 %v2530, %v2529
    %v2688 = vpack.c.b16 %v2532, %v2531
    %v2689 = vpack.c.b16 %v2534, %v2533
    %v2690 = vpack.c.b16 %v2536, %v2535
    %v2691 = vpack.c.b16 %v2538, %v2537
    %v2692 = vpack.c.b16 %v2540, %v2539
    %v2693 = vpack.c.b16 %v2542, %v2541
    %v2694 = vpack.c.b16 %v2544, %v2543
    %v2695 = vpack.c.b16 %v2546, %v2545
    %v2696 = vpack.c.b16 %v2548, %v2547
    %v2697 = vpack.c.b16 %v2550, %v2549
    %v2698 = vpack.c.b16 %v2552, %v2551
    %v2699 = vpack.c.b16 %v2554, %v2553
    %v2700 = vpack.c.b16 %v2556, %v2555
    %v2701 = vpack.c.b16 %v2558, %v2557
    %v2702 = vpack.c.b16 %v2560, %v2559
    %v2703 = vpack.c.b16 %v2562, %v2561
    %v2704 = vpack.c.b16 %v2564, %v2563
    %v2705 = vpack.c.b16 %v2566, %v2565
    %v2706 = vpack.c.b16 %v2568, %v2567
    %v2707 = vpack.c.b16 %v2570, %v2569
    %v2708 = vpack.c.b16 %v2572, %v2571
    %v2709 = vpack.c.b16 %v2574, %v2573
    %v2710 = vpack.c.b16 %v2576, %v2575
    %v2711 = vpack.c.b16 %v2578, %v2577
    %v2712 = vpack.c.b16 %v2580, %v2579
    %v2713 = vpack.c.b16 %v2582, %v2581
    %v2714 = vpack.c.b16 %v2584, %v2583
    %v2715 = vpack.c.b16 %v2586, %v2585
    %v2716 = vpack.c.b16 %v2588, %v2587
    %2845 = vmatprep.subr.bf16.mxu0 0
    %2846 = vmatpush1.bf16.msra.mxu0 %v2589
    %2847 = vmatprep.subr.bf16.mxu0 0
    %2848 = vmatpush1.bf16.msra.mxu0 %v2590
    %2849 = vmatprep.subr.bf16.mxu0 0
    %2850 = vmatpush1.bf16.msra.mxu0 %v2591
    %2851 = vmatprep.subr.bf16.mxu0 0
    %2852 = vmatpush1.bf16.msra.mxu0 %v2592
    %2853 = vmatprep.subr.bf16.mxu0 0
    %2854 = vmatpush1.bf16.msra.mxu0 %v2593
    %2855 = vmatprep.subr.bf16.mxu0 0
    %2856 = vmatpush1.bf16.msra.mxu0 %v2594
    %2857 = vmatprep.subr.bf16.mxu0 0
    %2858 = vmatpush1.bf16.msra.mxu0 %v2595
    %2859 = vmatprep.subr.bf16.mxu0 0
    %2860 = vmatpush1.bf16.msra.mxu0 %v2596
    %2861 = vmatprep.subr.bf16.mxu0 0
    %2862 = vmatpush1.bf16.msra.mxu0 %v2597
    %2863 = vmatprep.subr.bf16.mxu0 0
    %2864 = vmatpush1.bf16.msra.mxu0 %v2598
    %2865 = vmatprep.subr.bf16.mxu0 0
    %2866 = vmatpush1.bf16.msra.mxu0 %v2599
    %2867 = vmatprep.subr.bf16.mxu0 0
    %2868 = vmatpush1.bf16.msra.mxu0 %v2600
    %2869 = vmatprep.subr.bf16.mxu0 0
    %2870 = vmatpush1.bf16.msra.mxu0 %v2601
    %2871 = vmatprep.subr.bf16.mxu0 0
    %2872 = vmatpush1.bf16.msra.mxu0 %v2602
    %2873 = vmatprep.subr.bf16.mxu0 0
    %2874 = vmatpush1.bf16.msra.mxu0 %v2603
    %2875 = vmatprep.subr.bf16.mxu0 0
    %2876 = vmatpush1.bf16.msra.mxu0 %v2604
    %2877 = vmatprep.mubr.bf16.mxu0 %v2040
    %2878 = vmatmul.mubr.bf16.gmra.mrb[0].mxu0 %v2039
    %v2879 = vpop.f32.mrb[0].mxu0
    %v2880 = vadd.f32 %v2075, %v2879
    %v2881 = vpop.f32.mrb[0].mxu0
    %v2882 = vpop.f32.mrb[0].mxu0
    %v2883 = vadd.f32 %v2075, %v2882
    %v2884 = vpop.f32.mrb[0].mxu0
    %2885 = vmatprep.mubr.bf16.mxu0 %v2056
    %2886 = vmatmul.mubr.bf16.gmra.mrb[0].mxu0 %v2055
    %v2887 = vpop.f32.mrb[0].mxu0
    %v2888 = vadd.f32 %v2075, %v2887
    %v2889 = vpop.f32.mrb[0].mxu0
    %v2890 = vpop.f32.mrb[0].mxu0
    %v2891 = vpop.f32.mrb[0].mxu0
    %2892 = vdwg.mxu0
    %2893 = vmatprep.subr.bf16.mxu0 0
    %2894 = vmatpush1.bf16.msra.mxu0 %v2605
    %2895 = vmatprep.subr.bf16.mxu0 0
    %2896 = vmatpush1.bf16.msra.mxu0 %v2606
    %2897 = vmatprep.subr.bf16.mxu0 0
    %2898 = vmatpush1.bf16.msra.mxu0 %v2607
    %2899 = vmatprep.subr.bf16.mxu0 0
    %2900 = vmatpush1.bf16.msra.mxu0 %v2608
    %2901 = vmatprep.subr.bf16.mxu0 0
    %2902 = vmatpush1.bf16.msra.mxu0 %v2609
    %2903 = vmatprep.subr.bf16.mxu0 0
    %2904 = vmatpush1.bf16.msra.mxu0 %v2610
    %2905 = vmatprep.subr.bf16.mxu0 0
    %2906 = vmatpush1.bf16.msra.mxu0 %v2611
    %2907 = vmatprep.subr.bf16.mxu0 0
    %2908 = vmatpush1.bf16.msra.mxu0 %v2612
    %2909 = vmatprep.subr.bf16.mxu0 0
    %2910 = vmatpush1.bf16.msra.mxu0 %v2613
    %2911 = vmatprep.subr.bf16.mxu0 0
    %2912 = vmatpush1.bf16.msra.mxu0 %v2614
    %2913 = vmatprep.subr.bf16.mxu0 0
    %2914 = vmatpush1.bf16.msra.mxu0 %v2615
    %2915 = vmatprep.subr.bf16.mxu0 0
    %2916 = vmatpush1.bf16.msra.mxu0 %v2616
    %2917 = vmatprep.subr.bf16.mxu0 0
    %2918 = vmatpush1.bf16.msra.mxu0 %v2617
    %2919 = vmatprep.subr.bf16.mxu0 0
    %2920 = vmatpush1.bf16.msra.mxu0 %v2618
    %2921 = vmatprep.subr.bf16.mxu0 0
    %2922 = vmatpush1.bf16.msra.mxu0 %v2619
    %2923 = vmatprep.subr.bf16.mxu0 0
    %2924 = vmatpush1.bf16.msra.mxu0 %v2620
    %2925 = vmatprep.mubr.bf16.mxu0 %v2042
    %2926 = vmatmul.mubr.bf16.gmra.mrb[0].mxu0 %v2041
    %v2927 = vpop.f32.mrb[0].mxu0
    %v2928 = vadd.f32 %v2880, %v2927
    %v2929 = vpop.f32.mrb[0].mxu0
    %v2930 = vpop.f32.mrb[0].mxu0
    %v2931 = vadd.f32 %v2883, %v2930
    %v2932 = vpop.f32.mrb[0].mxu0
    %2933 = vmatprep.mubr.bf16.mxu0 %v2058
    %2934 = vmatmul.mubr.bf16.gmra.mrb[0].mxu0 %v2057
    %v2935 = vpop.f32.mrb[0].mxu0
    %v2936 = vadd.f32 %v2888, %v2935
    %v2937 = vpop.f32.mrb[0].mxu0
    %v2938 = vpop.f32.mrb[0].mxu0
    %v2939 = vpop.f32.mrb[0].mxu0
    %2940 = vdwg.mxu0
    %2941 = vmatprep.subr.bf16.mxu0 0
    %2942 = vmatpush1.bf16.msra.mxu0 %v2621
    %2943 = vmatprep.subr.bf16.mxu0 0
    %2944 = vmatpush1.bf16.msra.mxu0 %v2622
    %2945 = vmatprep.subr.bf16.mxu0 0
    %2946 = vmatpush1.bf16.msra.mxu0 %v2623
    %2947 = vmatprep.subr.bf16.mxu0 0
    %2948 = vmatpush1.bf16.msra.mxu0 %v2624
    %2949 = vmatprep.subr.bf16.mxu0 0
    %2950 = vmatpush1.bf16.msra.mxu0 %v2625
    %2951 = vmatprep.subr.bf16.mxu0 0
    %2952 = vmatpush1.bf16.msra.mxu0 %v2626
    %2953 = vmatprep.subr.bf16.mxu0 0
    %2954 = vmatpush1.bf16.msra.mxu0 %v2627
    %2955 = vmatprep.subr.bf16.mxu0 0
    %2956 = vmatpush1.bf16.msra.mxu0 %v2628
    %2957 = vmatprep.subr.bf16.mxu0 0
    %2958 = vmatpush1.bf16.msra.mxu0 %v2629
    %2959 = vmatprep.subr.bf16.mxu0 0
    %2960 = vmatpush1.bf16.msra.mxu0 %v2630
    %2961 = vmatprep.subr.bf16.mxu0 0
    %2962 = vmatpush1.bf16.msra.mxu0 %v2631
    %2963 = vmatprep.subr.bf16.mxu0 0
    %2964 = vmatpush1.bf16.msra.mxu0 %v2632
    %2965 = vmatprep.subr.bf16.mxu0 0
    %2966 = vmatpush1.bf16.msra.mxu0 %v2633
    %2967 = vmatprep.subr.bf16.mxu0 0
    %2968 = vmatpush1.bf16.msra.mxu0 %v2634
    %2969 = vmatprep.subr.bf16.mxu0 0
    %2970 = vmatpush1.bf16.msra.mxu0 %v2635
    %2971 = vmatprep.subr.bf16.mxu0 0
    %2972 = vmatpush1.bf16.msra.mxu0 %v2636
    %2973 = vmatprep.mubr.bf16.mxu0 %v2044
    %2974 = vmatmul.mubr.bf16.gmra.mrb[0].mxu0 %v2043
    %v2975 = vpop.f32.mrb[0].mxu0
    %v2976 = vadd.f32 %v2928, %v2975
    %v2977 = vpop.f32.mrb[0].mxu0
    %v2978 = vpop.f32.mrb[0].mxu0
    %v2979 = vadd.f32 %v2931, %v2978
    %v2980 = vpop.f32.mrb[0].mxu0
    %2981 = vmatprep.mubr.bf16.mxu0 %v2060
    %2982 = vmatmul.mubr.bf16.gmra.mrb[0].mxu0 %v2059
    %v2983 = vpop.f32.mrb[0].mxu0
    %v2984 = vadd.f32 %v2936, %v2983
    %v2985 = vpop.f32.mrb[0].mxu0
    %v2986 = vpop.f32.mrb[0].mxu0
    %v2987 = vpop.f32.mrb[0].mxu0
    %2988 = vdwg.mxu0
    %2989 = vmatprep.subr.bf16.mxu0 0
    %2990 = vmatpush1.bf16.msra.mxu0 %v2637
    %2991 = vmatprep.subr.bf16.mxu0 0
    %2992 = vmatpush1.bf16.msra.mxu0 %v2638
    %2993 = vmatprep.subr.bf16.mxu0 0
    %2994 = vmatpush1.bf16.msra.mxu0 %v2639
    %2995 = vmatprep.subr.bf16.mxu0 0
    %2996 = vmatpush1.bf16.msra.mxu0 %v2640
    %2997 = vmatprep.subr.bf16.mxu0 0
    %2998 = vmatpush1.bf16.msra.mxu0 %v2641
    %2999 = vmatprep.subr.bf16.mxu0 0
    %3000 = vmatpush1.bf16.msra.mxu0 %v2642
    %3001 = vmatprep.subr.bf16.mxu0 0
    %3002 = vmatpush1.bf16.msra.mxu0 %v2643
    %3003 = vmatprep.subr.bf16.mxu0 0
    %3004 = vmatpush1.bf16.msra.mxu0 %v2644
    %3005 = vmatprep.subr.bf16.mxu0 0
    %3006 = vmatpush1.bf16.msra.mxu0 %v2645
    %3007 = vmatprep.subr.bf16.mxu0 0
    %3008 = vmatpush1.bf16.msra.mxu0 %v2646
    %3009 = vmatprep.subr.bf16.mxu0 0
    %3010 = vmatpush1.bf16.msra.mxu0 %v2647
    %3011 = vmatprep.subr.bf16.mxu0 0
    %3012 = vmatpush1.bf16.msra.mxu0 %v2648
    %3013 = vmatprep.subr.bf16.mxu0 0
    %3014 = vmatpush1.bf16.msra.mxu0 %v2649
    %3015 = vmatprep.subr.bf16.mxu0 0
    %3016 = vmatpush1.bf16.msra.mxu0 %v2650
    %3017 = vmatprep.subr.bf16.mxu0 0
    %3018 = vmatpush1.bf16.msra.mxu0 %v2651
    %3019 = vmatprep.subr.bf16.mxu0 0
    %3020 = vmatpush1.bf16.msra.mxu0 %v2652
    %3021 = vmatprep.mubr.bf16.mxu0 %v2046
    %3022 = vmatmul.mubr.bf16.gmra.mrb[0].mxu0 %v2045
    %v3023 = vpop.f32.mrb[0].mxu0
    %v3024 = vadd.f32 %v2976, %v3023
    %v3025 = vpop.f32.mrb[0].mxu0
    %v3026 = vpop.f32.mrb[0].mxu0
    %v3027 = vadd.f32 %v2979, %v3026
    %v3028 = vpop.f32.mrb[0].mxu0
    %3029 = vmatprep.mubr.bf16.mxu0 %v2062
    %3030 = vmatmul.mubr.bf16.gmra.mrb[0].mxu0 %v2061
    %v3031 = vpop.f32.mrb[0].mxu0
    %v3032 = vadd.f32 %v2984, %v3031
    %v3033 = vpop.f32.mrb[0].mxu0
    %v3034 = vpop.f32.mrb[0].mxu0
    %v3035 = vpop.f32.mrb[0].mxu0
    %3036 = vdwg.mxu0
    %3037 = vmatprep.subr.bf16.mxu0 0
    %3038 = vmatpush1.bf16.msra.mxu0 %v2653
    %3039 = vmatprep.subr.bf16.mxu0 0
    %3040 = vmatpush1.bf16.msra.mxu0 %v2654
    %3041 = vmatprep.subr.bf16.mxu0 0
    %3042 = vmatpush1.bf16.msra.mxu0 %v2655
    %3043 = vmatprep.subr.bf16.mxu0 0
    %3044 = vmatpush1.bf16.msra.mxu0 %v2656
    %3045 = vmatprep.subr.bf16.mxu0 0
    %3046 = vmatpush1.bf16.msra.mxu0 %v2657
    %3047 = vmatprep.subr.bf16.mxu0 0
    %3048 = vmatpush1.bf16.msra.mxu0 %v2658
    %3049 = vmatprep.subr.bf16.mxu0 0
    %3050 = vmatpush1.bf16.msra.mxu0 %v2659
    %3051 = vmatprep.subr.bf16.mxu0 0
    %3052 = vmatpush1.bf16.msra.mxu0 %v2660
    %3053 = vmatprep.subr.bf16.mxu0 0
    %3054 = vmatpush1.bf16.msra.mxu0 %v2661
    %3055 = vmatprep.subr.bf16.mxu0 0
    %3056 = vmatpush1.bf16.msra.mxu0 %v2662
    %3057 = vmatprep.subr.bf16.mxu0 0
    %3058 = vmatpush1.bf16.msra.mxu0 %v2663
    %3059 = vmatprep.subr.bf16.mxu0 0
    %3060 = vmatpush1.bf16.msra.mxu0 %v2664
    %3061 = vmatprep.subr.bf16.mxu0 0
    %3062 = vmatpush1.bf16.msra.mxu0 %v2665
    %3063 = vmatprep.subr.bf16.mxu0 0
    %3064 = vmatpush1.bf16.msra.mxu0 %v2666
    %3065 = vmatprep.subr.bf16.mxu0 0
    %3066 = vmatpush1.bf16.msra.mxu0 %v2667
    %3067 = vmatprep.subr.bf16.mxu0 0
    %3068 = vmatpush1.bf16.msra.mxu0 %v2668
    %3069 = vmatprep.mubr.bf16.mxu0 %v2048
    %3070 = vmatmul.mubr.bf16.gmra.mrb[0].mxu0 %v2047
    %v3071 = vpop.f32.mrb[0].mxu0
    %v3072 = vadd.f32 %v3024, %v3071
    %v3073 = vpop.f32.mrb[0].mxu0
    %v3074 = vpop.f32.mrb[0].mxu0
    %v3075 = vadd.f32 %v3027, %v3074
    %v3076 = vpop.f32.mrb[0].mxu0
    %3077 = vmatprep.mubr.bf16.mxu0 %v2064
    %3078 = vmatmul.mubr.bf16.gmra.mrb[0].mxu0 %v2063
    %v3079 = vpop.f32.mrb[0].mxu0
    %v3080 = vadd.f32 %v3032, %v3079
    %v3081 = vpop.f32.mrb[0].mxu0
    %v3082 = vpop.f32.mrb[0].mxu0
    %v3083 = vpop.f32.mrb[0].mxu0
    %3084 = vdwg.mxu0
    %3085 = vmatprep.subr.bf16.mxu0 0
    %3086 = vmatpush1.bf16.msra.mxu0 %v2669
    %3087 = vmatprep.subr.bf16.mxu0 0
    %3088 = vmatpush1.bf16.msra.mxu0 %v2670
    %3089 = vmatprep.subr.bf16.mxu0 0
    %3090 = vmatpush1.bf16.msra.mxu0 %v2671
    %3091 = vmatprep.subr.bf16.mxu0 0
    %3092 = vmatpush1.bf16.msra.mxu0 %v2672
    %3093 = vmatprep.subr.bf16.mxu0 0
    %3094 = vmatpush1.bf16.msra.mxu0 %v2673
    %3095 = vmatprep.subr.bf16.mxu0 0
    %3096 = vmatpush1.bf16.msra.mxu0 %v2674
    %3097 = vmatprep.subr.bf16.mxu0 0
    %3098 = vmatpush1.bf16.msra.mxu0 %v2675
    %3099 = vmatprep.subr.bf16.mxu0 0
    %3100 = vmatpush1.bf16.msra.mxu0 %v2676
    %3101 = vmatprep.subr.bf16.mxu0 0
    %3102 = vmatpush1.bf16.msra.mxu0 %v2677
    %3103 = vmatprep.subr.bf16.mxu0 0
    %3104 = vmatpush1.bf16.msra.mxu0 %v2678
    %3105 = vmatprep.subr.bf16.mxu0 0
    %3106 = vmatpush1.bf16.msra.mxu0 %v2679
    %3107 = vmatprep.subr.bf16.mxu0 0
    %3108 = vmatpush1.bf16.msra.mxu0 %v2680
    %3109 = vmatprep.subr.bf16.mxu0 0
    %3110 = vmatpush1.bf16.msra.mxu0 %v2681
    %3111 = vmatprep.subr.bf16.mxu0 0
    %3112 = vmatpush1.bf16.msra.mxu0 %v2682
    %3113 = vmatprep.subr.bf16.mxu0 0
    %3114 = vmatpush1.bf16.msra.mxu0 %v2683
    %3115 = vmatprep.subr.bf16.mxu0 0
    %3116 = vmatpush1.bf16.msra.mxu0 %v2684
    %3117 = vmatprep.mubr.bf16.mxu0 %v2050
    %3118 = vmatmul.mubr.bf16.gmra.mrb[0].mxu0 %v2049
    %v3119 = vpop.f32.mrb[0].mxu0
    %v3120 = vadd.f32 %v3072, %v3119
    %v3121 = vpop.f32.mrb[0].mxu0
    %v3122 = vpop.f32.mrb[0].mxu0
    %v3123 = vadd.f32 %v3075, %v3122
    %v3124 = vpop.f32.mrb[0].mxu0
    %3125 = vmatprep.mubr.bf16.mxu0 %v2066
    %3126 = vmatmul.mubr.bf16.gmra.mrb[0].mxu0 %v2065
    %v3127 = vpop.f32.mrb[0].mxu0
    %v3128 = vadd.f32 %v3080, %v3127
    %v3129 = vpop.f32.mrb[0].mxu0
    %v3130 = vpop.f32.mrb[0].mxu0
    %v3131 = vpop.f32.mrb[0].mxu0
    %3132 = vdwg.mxu0
    %3133 = vmatprep.subr.bf16.mxu0 0
    %3134 = vmatpush1.bf16.msra.mxu0 %v2685
    %3135 = vmatprep.subr.bf16.mxu0 0
    %3136 = vmatpush1.bf16.msra.mxu0 %v2686
    %3137 = vmatprep.subr.bf16.mxu0 0
    %3138 = vmatpush1.bf16.msra.mxu0 %v2687
    %3139 = vmatprep.subr.bf16.mxu0 0
    %3140 = vmatpush1.bf16.msra.mxu0 %v2688
    %3141 = vmatprep.subr.bf16.mxu0 0
    %3142 = vmatpush1.bf16.msra.mxu0 %v2689
    %3143 = vmatprep.subr.bf16.mxu0 0
    %3144 = vmatpush1.bf16.msra.mxu0 %v2690
    %3145 = vmatprep.subr.bf16.mxu0 0
    %3146 = vmatpush1.bf16.msra.mxu0 %v2691
    %3147 = vmatprep.subr.bf16.mxu0 0
    %3148 = vmatpush1.bf16.msra.mxu0 %v2692
    %3149 = vmatprep.subr.bf16.mxu0 0
    %3150 = vmatpush1.bf16.msra.mxu0 %v2693
    %3151 = vmatprep.subr.bf16.mxu0 0
    %3152 = vmatpush1.bf16.msra.mxu0 %v2694
    %3153 = vmatprep.subr.bf16.mxu0 0
    %3154 = vmatpush1.bf16.msra.mxu0 %v2695
    %3155 = vmatprep.subr.bf16.mxu0 0
    %3156 = vmatpush1.bf16.msra.mxu0 %v2696
    %3157 = vmatprep.subr.bf16.mxu0 0
    %3158 = vmatpush1.bf16.msra.mxu0 %v2697
    %3159 = vmatprep.subr.bf16.mxu0 0
    %3160 = vmatpush1.bf16.msra.mxu0 %v2698
    %3161 = vmatprep.subr.bf16.mxu0 0
    %3162 = vmatpush1.bf16.msra.mxu0 %v2699
    %3163 = vmatprep.subr.bf16.mxu0 0
    %3164 = vmatpush1.bf16.msra.mxu0 %v2700
    %3165 = vmatprep.mubr.bf16.mxu0 %v2052
    %3166 = vmatmul.mubr.bf16.gmra.mrb[0].mxu0 %v2051
    %v3167 = vpop.f32.mrb[0].mxu0
    %v3168 = vadd.f32 %v3120, %v3167
    %v3169 = vpop.f32.mrb[0].mxu0
    %v3170 = vpop.f32.mrb[0].mxu0
    %v3171 = vadd.f32 %v3123, %v3170
    %v3172 = vpop.f32.mrb[0].mxu0
    %3173 = vmatprep.mubr.bf16.mxu0 %v2068
    %3174 = vmatmul.mubr.bf16.gmra.mrb[0].mxu0 %v2067
    %v3175 = vpop.f32.mrb[0].mxu0
    %v3176 = vadd.f32 %v3128, %v3175
    %v3177 = vpop.f32.mrb[0].mxu0
    %v3178 = vpop.f32.mrb[0].mxu0
    %v3179 = vpop.f32.mrb[0].mxu0
    %3180 = vdwg.mxu0
    %3181 = vmatprep.subr.bf16.mxu0 0
    %3182 = vmatpush1.bf16.msra.mxu0 %v2701
    %3183 = vmatprep.subr.bf16.mxu0 0
    %3184 = vmatpush1.bf16.msra.mxu0 %v2702
    %3185 = vmatprep.subr.bf16.mxu0 0
    %3186 = vmatpush1.bf16.msra.mxu0 %v2703
    %3187 = vmatprep.subr.bf16.mxu0 0
    %3188 = vmatpush1.bf16.msra.mxu0 %v2704
    %3189 = vmatprep.subr.bf16.mxu0 0
    %3190 = vmatpush1.bf16.msra.mxu0 %v2705
    %3191 = vmatprep.subr.bf16.mxu0 0
    %3192 = vmatpush1.bf16.msra.mxu0 %v2706
    %3193 = vmatprep.subr.bf16.mxu0 0
    %3194 = vmatpush1.bf16.msra.mxu0 %v2707
    %3195 = vmatprep.subr.bf16.mxu0 0
    %3196 = vmatpush1.bf16.msra.mxu0 %v2708
    %3197 = vmatprep.subr.bf16.mxu0 0
    %3198 = vmatpush1.bf16.msra.mxu0 %v2709
    %3199 = vmatprep.subr.bf16.mxu0 0
    %3200 = vmatpush1.bf16.msra.mxu0 %v2710
    %3201 = vmatprep.subr.bf16.mxu0 0
    %3202 = vmatpush1.bf16.msra.mxu0 %v2711
    %3203 = vmatprep.subr.bf16.mxu0 0
    %3204 = vmatpush1.bf16.msra.mxu0 %v2712
    %3205 = vmatprep.subr.bf16.mxu0 0
    %3206 = vmatpush1.bf16.msra.mxu0 %v2713
    %3207 = vmatprep.subr.bf16.mxu0 0
    %3208 = vmatpush1.bf16.msra.mxu0 %v2714
    %3209 = vmatprep.subr.bf16.mxu0 0
    %3210 = vmatpush1.bf16.msra.mxu0 %v2715
    %3211 = vmatprep.subr.bf16.mxu0 0
    %3212 = vmatpush1.bf16.msra.mxu0 %v2716
    %3213 = vmatprep.mubr.bf16.mxu0 %v2054
    %3214 = vmatmul.mubr.bf16.gmra.mrb[0].mxu0 %v2053
    %v3215 = vpop.f32.mrb[0].mxu0
    %v3216 = vadd.f32 %v3168, %v3215
    %v3217 = vpop.f32.mrb[0].mxu0
    %v3218 = vpop.f32.mrb[0].mxu0
    %v3219 = vadd.f32 %v3171, %v3218
    %v3220 = vpop.f32.mrb[0].mxu0
    %3221 = vmatprep.mubr.bf16.mxu0 %v2070
    %3222 = vmatmul.mubr.bf16.gmra.mrb[0].mxu0 %v2069
    %v3223 = vpop.f32.mrb[0].mxu0
    %v3224 = vadd.f32 %v3176, %v3223
    %v3225 = vpop.f32.mrb[0].mxu0
    %v3226 = vpop.f32.mrb[0].mxu0
    %v3227 = vpop.f32.mrb[0].mxu0
    %3228 = vdwg.mxu0
    %v3229 = vadd.f32 %v1042, %v3216
    %v3230 = vadd.f32 %v1043, %v3219
    %v3231 = vadd.f32 %v1044, %v3224
    %v3232 = vsel %vm61, %v3229, 0.0
    %3233 = vadd.xlane.f32.xlu0 %v3232
    %v3234 = vpop.xlane.xlu0 %3233
    %v3235 = vsel %vm61, %v3230, 0.0
    %3236 = vadd.xlane.f32.xlu0 %v3235
    %v3237 = vpop.xlane.xlu0 %3236
    %v3238 = vsel %vm992, %v3231, 0.0
    %3239 = vadd.xlane.f32.xlu0 %v3238
    %v3240 = vpop.xlane.xlu0 %3239
    %v3241 = vmul.f32 %v3234, %v996
    %v3242 = vmul.f32 %v3237, %v996
    %v3243 = vmul.f32 %v3240, %v996
    %v3244 = vsub.f32 %v3229, %v3241
    %v3245 = vsub.f32 %v3230, %v3242
    %v3246 = vsub.f32 %v3231, %v3243
    %v3247 = vmul.f32 %v3244, %v3244
    %v3248 = vmul.f32 %v3245, %v3245
    %v3249 = vmul.f32 %v3246, %v3246
    %v3250 = vsel %vm61, %v3247, 0.0
    %3251 = vadd.xlane.f32.xlu0 %v3250
    %v3252 = vpop.xlane.xlu0 %3251
    %v3253 = vsel %vm61, %v3248, 0.0
    %3254 = vadd.xlane.f32.xlu0 %v3253
    %v3255 = vpop.xlane.xlu0 %3254
    %v3256 = vsel %vm992, %v3249, 0.0
    %3257 = vadd.xlane.f32.xlu0 %v3256
    %v3258 = vpop.xlane.xlu0 %3257
    %v3259 = vmul.f32 %v3252, %v996
    %v3260 = vmul.f32 %v3255, %v996
    %v3261 = vmul.f32 %v3258, %v996
    %v3262 = vadd.f32 %v3259, 1e-05
    %v3263 = vadd.f32 %v3260, 1e-05
    %v3264 = vadd.f32 %v3261, 1e-05
    %v3265 = vrsqrt.pop %v3262
    %v3266 = vrsqrt.pop %v3263
    %v3267 = vrsqrt.pop %v3264
    %v3268 = vmul.f32 %v3244, %v3265
    %v3269 = vmul.f32 %v3245, %v3266
    %v3270 = vmul.f32 %v3246, %v3267
    %v3272 = vlaneseq
    %v3273 = vshrl.u32 %v3272, 7
    %v3274 = vsub.s32 0, %v3273
    %v3275 = vrot.slane %v32, %v3274
    %v3277 = vmul.f32 %v3268, %v3275
    %v3278 = vmul.f32 %v3269, %v3275
    %v3279 = vmul.f32 %v3270, %v3275
    %v3281 = vlaneseq
    %v3282 = vshrl.u32 %v3281, 7
    %v3283 = vsub.s32 0, %v3282
    %v3284 = vrot.slane %v33, %v3283
    %v3286 = vadd.f32 %v3277, %v3284
    %v3287 = vadd.f32 %v3278, %v3284
    %v3288 = vadd.f32 %v3279, %v3284
    %3289 = vst.msk [vmem:[#allocation2] sm:$0xff] %vm61, %v3286
    %3290 = vst.msk [vmem:[#allocation2 + $0x8] sm:$0xff] %vm61, %v3287
    %3291 = vst.msk [vmem:[#allocation2 + $0x10] sm:$0xf] %vm992, %v3288
    // Predicated region
    $region26: #{tpu_custom_call.1} parent=1 // pred_check
      _
    $region27: #{tpu_custom_call.1} parent=1 // pred_check_branch
      %3293 = sbr.rel (0) target = $region29
    $region28: #{tpu_custom_call.1} parent=1 // pred_region
      %s3295 = ssub.s32 384, 384
      %3296 = vsyncadd [#allocation3], %s3295
      %s3297 = sshll.u32 [#allocation2], 4
      %s3298 = int_to_ptr.vmem [resolvable:$true] %s3297
      %3303 = dma.vmem_to_hbm [thread:$0]  %s3298, 384, %s6, [#allocation3], 128, 128, 8
    $region29: #{tpu_custom_call.1} parent=1 // pred_fallthru
      _
    // Predicated region
    $region30: #{tpu_custom_call.1} parent=1 // pred_check
      _
    $region31: #{tpu_custom_call.1} parent=1 // pred_check_branch
      %3305 = sbr.rel (0) target = $region33
    $region32: #{tpu_custom_call.1} parent=1 // pred_region
      %3306 = dma.done [#allocation3], 384
    $region33: #{tpu_custom_call.1} parent=1 // pred_fallthru
      _
    %3307 = vsyncpa [#allocation3], 1

</llo_original>
